<compile_context>
chip_gen: v7x
topology: tpu7x:2x2x1
jax: 0.10.0
libtpu: 0.0.40
codegen_flags: <defaults>
</compile_context>

<pallas_src>
import jax
import jax.numpy as jnp
from jax import lax
from jax.experimental import pallas as pl
from jax.experimental.pallas import tpu as pltpu

KSIZE = 7
PAD = 3


def cbam_kernel(x_ref, w1p_ref, w2p_ref, bigk_ref, o_ref):
    # x_ref:    (1, C, HW) VMEM  -- one batch element, lane-dense spatial axis
    # w1p_ref:  (Hp, C)    VMEM  -- fc.0 weight, hidden zero-padded to Hp >= 128
    # w2p_ref:  (C, Hp)    VMEM  -- fc.2 weight, hidden zero-padded to Hp >= 128
    # bigk_ref: (2*HW, HW) VMEM  -- dense 7x7 conv operator (zero pad baked in)
    # o_ref:    (1, C, HW) VMEM
    x = x_ref[0].astype(jnp.float32)                         # (C, HW)

    # ---------------- Channel attention (column-form MLP, no relayouts) -----
    avg_c = jnp.mean(x, axis=1, keepdims=True)               # (C, 1) lane reduce
    max_c = jnp.max(x, axis=1, keepdims=True)                # (C, 1)
    pooled = jnp.concatenate([avg_c, max_c], axis=1)         # (C, 2)
    h = jnp.maximum(
        jnp.dot(w1p_ref[...], pooled,
                preferred_element_type=jnp.float32,
                precision=lax.Precision.HIGHEST), 0.0)       # (Hp, 2)
    z = jnp.dot(w2p_ref[...], h,
                preferred_element_type=jnp.float32,
                precision=lax.Precision.HIGHEST)             # (C, 2)
    ca = jax.nn.sigmoid(z[:, 0:1] + z[:, 1:2])               # (C, 1)
    x1 = x * ca                                              # (C, HW) lane-dense

    # ---------------- Spatial attention: 7x7 conv as ONE MXU matmul ---------
    avg_s = jnp.mean(x1, axis=0, keepdims=True)              # (1, HW) sublane reduce
    max_s = jnp.max(x1, axis=0, keepdims=True)               # (1, HW)
    maps = jnp.concatenate([avg_s, max_s], axis=1)           # (1, 2*HW)
    conv = jnp.dot(maps, bigk_ref[...],
                   preferred_element_type=jnp.float32,
                   precision=lax.Precision.HIGHEST)          # (1, HW)
    sa = jax.nn.sigmoid(conv)                                # (1, HW)
    o_ref[0] = (x1 * sa).astype(o_ref.dtype)                 # sublane-broadcast mul


def _spatial_conv_operator(wsp, H, W):
    """Dense operator K (2*H*W, H*W) for the 2-in/1-out 7x7 'same' conv.

    K[c*H*W + iy*W + ix, oy*W + ox] = wsp[c, iy-oy+PAD, ix-ox+PAD]
    (zero where the tap falls outside the 7x7 window, which also implements
    the zero padding).  conv(maps)[oy, ox] == (maps_flat @ K)[oy*W + ox].
    """
    HW = H * W
    dy = jnp.arange(H)[:, None] - jnp.arange(H)[None, :] + PAD   # (H, H)
    dx = jnp.arange(W)[:, None] - jnp.arange(W)[None, :] + PAD   # (W, W)
    vy = (dy >= 0) & (dy < KSIZE)
    vx = (dx >= 0) & (dx < KSIZE)
    dyc = jnp.clip(dy, 0, KSIZE - 1)
    dxc = jnp.clip(dx, 0, KSIZE - 1)
    k = wsp[:, dyc[:, None, :, None], dxc[None, :, None, :]]     # (2, H, W, H, W)
    valid = (vy[:, None, :, None] & vx[None, :, None, :])[None]
    k = jnp.where(valid, k, 0.0)
    return k.reshape(2 * HW, HW).astype(jnp.float32)


@jax.jit
def cbam(x, w1, w2, wsp):
    B, C, H, W = x.shape
    hidden = w1.shape[0]
    HW = H * W
    Hp = max(128, pl.cdiv(hidden, 128) * 128)     # lane-dense MXU contraction

    x2 = x.reshape(B, C, HW)                      # layout change done in HBM (free)
    w1p = jnp.zeros((Hp, C), jnp.float32).at[:hidden, :].set(w1)
    w2p = jnp.zeros((C, Hp), jnp.float32).at[:, :hidden].set(w2)
    bigk = _spatial_conv_operator(wsp, H, W)      # (2*HW, HW), ~512 KB at 16x16

    out = pl.pallas_call(
        cbam_kernel,
        out_shape=jax.ShapeDtypeStruct((B, C, HW), x.dtype),
        grid_spec=pltpu.PrefetchScalarGridSpec(
            num_scalar_prefetch=0,
            grid=(B,),                            # pipelined, megacore-shardable
            in_specs=[
                pl.BlockSpec((1, C, HW), lambda b: (b, 0, 0)),
                pl.BlockSpec((Hp, C), lambda b: (0, 0)),       # resident weights
                pl.BlockSpec((C, Hp), lambda b: (0, 0)),
                pl.BlockSpec((2 * HW, HW), lambda b: (0, 0)),
            ],
            out_specs=pl.BlockSpec((1, C, HW), lambda b: (b, 0, 0)),
        ),
        compiler_params=pltpu.CompilerParams(
            dimension_semantics=("parallel",),    # v7x: shard batch over 2 TCs
        ),
    )(x2, w1p, w2p, bigk)
    return out.reshape(B, C, H, W)


def cbam_ref(x, w1, w2, wsp):
    """Pure-JAX reference matching the PyTorch forward exactly."""
    hp = lax.Precision.HIGHEST
    avg_c = jnp.mean(x, axis=(2, 3))                   # (B, C)
    max_c = jnp.max(x, axis=(2, 3))                    # (B, C)

    def fc(v):
        h = jnp.maximum(jnp.dot(v, w1.T, precision=hp), 0.0)
        return jnp.dot(h, w2.T, precision=hp)

    ca = jax.nn.sigmoid(fc(avg_c) + fc(max_c))         # (B, C)
    x1 = x * ca[:, :, None, None]

    avg_s = jnp.mean(x1, axis=1, keepdims=True)        # (B, 1, H, W)
    max_s = jnp.max(x1, axis=1, keepdims=True)
    cat = jnp.concatenate([avg_s, max_s], axis=1)      # (B, 2, H, W)
    conv = lax.conv_general_dilated(
        cat, wsp[None], window_strides=(1, 1), padding=[(PAD, PAD), (PAD, PAD)],
        dimension_numbers=("NCHW", "OIHW", "NCHW"), precision=hp)
    sa = jax.nn.sigmoid(conv)                          # (B, 1, H, W)
    return x1 * sa


if __name__ == "__main__":
    # CBAM(in_planes=32, ratio=16, kernel_size=7); hidden = 32 // 16 = 2.
    B, C, H, W = 2, 32, 16, 16
    ratio = 16
    hidden = C // ratio

    key = jax.random.PRNGKey(0)
    k1, k2, k3, kx = jax.random.split(key, 4)
    w1 = jax.random.normal(k1, (hidden, C), jnp.float32) * 0.2   # fc.0: Conv2d(C, C//r, 1, bias=False)
    w2 = jax.random.normal(k2, (C, hidden), jnp.float32) * 0.2   # fc.2: Conv2d(C//r, C, 1, bias=False)
    wsp = jax.random.normal(k3, (2, KSIZE, KSIZE), jnp.float32) * 0.1  # SpatialAttention conv1 (1,2,7,7) squeezed
    x = jax.random.normal(kx, (B, C, H, W), jnp.float32)

    out = jax.block_until_ready(cbam(x, w1, w2, wsp))
    ref = cbam_ref(x, w1, w2, wsp)

    assert out.shape == (B, C, H, W)
    assert jnp.allclose(out, ref, atol=5e-4, rtol=5e-4), "mismatch vs reference"
    print("KERNEL_OK")
</pallas_src>

<mosaic_0001>
module attributes {stable_mosaic.version = 11 : i64} {
  func.func @cbam_kernel(%arg0: i32, %arg1: memref<1x32x256xf32, #tpu.memory_space<vmem>>, %arg2: memref<128x32xf32, #tpu.memory_space<vmem>>, %arg3: memref<32x128xf32, #tpu.memory_space<vmem>>, %arg4: memref<512x256xf32, #tpu.memory_space<vmem>>, %arg5: memref<1x32x256xf32, #tpu.memory_space<vmem>>) attributes {dimension_semantics = [#tpu.dimension_semantics<parallel>], iteration_bounds = array<i64: 2>, scalar_prefetch = 0 : i64, scratch_operands = 0 : i64, tpu.core_type = #tpu.core_type<tc>, window_params = [{transform_indices = @transform_0, window_bounds = array<i64: 1, 32, 256>}, {pipeline_mode = #tpu.pipeline_mode<synchronous>, transform_indices = @transform_1, window_bounds = array<i64: 128, 32>}, {pipeline_mode = #tpu.pipeline_mode<synchronous>, transform_indices = @transform_2, window_bounds = array<i64: 32, 128>}, {pipeline_mode = #tpu.pipeline_mode<synchronous>, transform_indices = @transform_3, window_bounds = array<i64: 512, 256>}, {transform_indices = @transform_4, window_bounds = array<i64: 1, 32, 256>}]} {
    %c0 = arith.constant 0 : index
    %c0_0 = arith.constant 0 : index
    %c0_1 = arith.constant 0 : index
    %0 = vector.load %arg1[%c0, %c0_0, %c0_1] : memref<1x32x256xf32, #tpu.memory_space<vmem>>, vector<1x32x256xf32>
    %1 = vector.shape_cast %0 : vector<1x32x256xf32> to vector<32x256xf32>
    %cst = arith.constant dense<0.000000e+00> : vector<32xf32>
    %2 = vector.multi_reduction <add>, %1, %cst [1] : vector<32x256xf32> to vector<32xf32>
    %3 = vector.shape_cast %2 : vector<32xf32> to vector<32x1xf32>
    %cst_2 = arith.constant 2.560000e+02 : f32
    %4 = vector.broadcast %cst_2 : f32 to vector<32x1xf32>
    %5 = arith.divf %3, %4 : vector<32x1xf32>
    %cst_3 = arith.constant dense<0xFF800000> : vector<32xf32>
    %6 = vector.multi_reduction <maximumf>, %1, %cst_3 [1] : vector<32x256xf32> to vector<32xf32>
    %7 = vector.shape_cast %6 : vector<32xf32> to vector<32x1xf32>
    %8 = tpu.concatenate %5, %7 in 1 : vector<32x1xf32>, vector<32x1xf32> -> vector<32x2xf32>
    %c0_4 = arith.constant 0 : index
    %c0_5 = arith.constant 0 : index
    %9 = vector.load %arg2[%c0_4, %c0_5] : memref<128x32xf32, #tpu.memory_space<vmem>>, vector<128x32xf32>
    %cst_6 = arith.constant dense<0.000000e+00> : vector<128x2xf32>
    %10 = tpu.matmul %9, %8, %cst_6 {dimension_numbers = #tpu.dot_dimension_numbers<[1], [0], [0], [1], [0, 0, 1, 1], [], []>, precision = #tpu.contract_precision<fp32>} : vector<128x32xf32>, vector<32x2xf32>, vector<128x2xf32> -> vector<128x2xf32>
    %cst_7 = arith.constant 0.000000e+00 : f32
    %11 = vector.broadcast %cst_7 : f32 to vector<128x2xf32>
    %12 = arith.maximumf %10, %11 : vector<128x2xf32>
    %c0_8 = arith.constant 0 : index
    %c0_9 = arith.constant 0 : index
    %13 = vector.load %arg3[%c0_8, %c0_9] : memref<32x128xf32, #tpu.memory_space<vmem>>, vector<32x128xf32>
    %cst_10 = arith.constant dense<0.000000e+00> : vector<32x2xf32>
    %14 = tpu.matmul %13, %12, %cst_10 {dimension_numbers = #tpu.dot_dimension_numbers<[1], [0], [0], [1], [0, 0, 1, 1], [], []>, precision = #tpu.contract_precision<fp32>} : vector<32x128xf32>, vector<128x2xf32>, vector<32x2xf32> -> vector<32x2xf32>
    %15 = vector.extract_strided_slice %14 {offsets = [0, 0], sizes = [32, 1], strides = [1, 1]} : vector<32x2xf32> to vector<32x1xf32>
    %16 = vector.extract_strided_slice %14 {offsets = [0, 1], sizes = [32, 1], strides = [1, 1]} : vector<32x2xf32> to vector<32x1xf32>
    %17 = arith.addf %15, %16 : vector<32x1xf32>
    %18 = arith.negf %17 : vector<32x1xf32>
    %19 = math.exp %18 : vector<32x1xf32>
    %cst_11 = arith.constant 1.000000e+00 : f32
    %20 = vector.broadcast %cst_11 : f32 to vector<32x1xf32>
    %21 = arith.addf %20, %19 : vector<32x1xf32>
    %22 = arith.divf %20, %21 : vector<32x1xf32>
    %23 = vector.broadcast %22 : vector<32x1xf32> to vector<32x256xf32>
    %24 = arith.mulf %1, %23 : vector<32x256xf32>
    %cst_12 = arith.constant dense<0.000000e+00> : vector<256xf32>
    %25 = vector.multi_reduction <add>, %24, %cst_12 [0] : vector<32x256xf32> to vector<256xf32>
    %26 = vector.shape_cast %25 : vector<256xf32> to vector<1x256xf32>
    %cst_13 = arith.constant 3.200000e+01 : f32
    %27 = vector.broadcast %cst_13 : f32 to vector<1x256xf32>
    %28 = arith.divf %26, %27 : vector<1x256xf32>
    %cst_14 = arith.constant dense<0xFF800000> : vector<256xf32>
    %29 = vector.multi_reduction <maximumf>, %24, %cst_14 [0] : vector<32x256xf32> to vector<256xf32>
    %30 = vector.shape_cast %29 : vector<256xf32> to vector<1x256xf32>
    %31 = tpu.concatenate %28, %30 in 1 : vector<1x256xf32>, vector<1x256xf32> -> vector<1x512xf32>
    %c0_15 = arith.constant 0 : index
    %c0_16 = arith.constant 0 : index
    %32 = vector.load %arg4[%c0_15, %c0_16] : memref<512x256xf32, #tpu.memory_space<vmem>>, vector<512x256xf32>
    %cst_17 = arith.constant dense<0.000000e+00> : vector<1x256xf32>
    %33 = tpu.matmul %31, %32, %cst_17 {dimension_numbers = #tpu.dot_dimension_numbers<[1], [0], [0], [1], [0, 0, 1, 1], [], []>, precision = #tpu.contract_precision<fp32>} : vector<1x512xf32>, vector<512x256xf32>, vector<1x256xf32> -> vector<1x256xf32>
    %34 = arith.negf %33 : vector<1x256xf32>
    %35 = math.exp %34 : vector<1x256xf32>
    %cst_18 = arith.constant 1.000000e+00 : f32
    %36 = vector.broadcast %cst_18 : f32 to vector<1x256xf32>
    %37 = arith.addf %36, %35 : vector<1x256xf32>
    %38 = arith.divf %36, %37 : vector<1x256xf32>
    %39 = vector.broadcast %38 : vector<1x256xf32> to vector<32x256xf32>
    %40 = arith.mulf %24, %39 : vector<32x256xf32>
    %c0_19 = arith.constant 0 : index
    %c0_20 = arith.constant 0 : index
    %c0_21 = arith.constant 0 : index
    %41 = vector.load %arg5[%c0_19, %c0_20, %c0_21] : memref<1x32x256xf32, #tpu.memory_space<vmem>>, vector<1x32x256xf32>
    %42 = vector.shape_cast %41 : vector<1x32x256xf32> to vector<32x256xf32>
    %43 = vector.shape_cast %40 : vector<32x256xf32> to vector<1x32x256xf32>
    tpu.vector_store %arg5[%c0_19, %c0_20, %c0_21], %43 {strides = array<i32>} : memref<1x32x256xf32, #tpu.memory_space<vmem>>, vector<1x32x256xf32>,
    return
  }
  func.func @transform_0(%arg0: i32) -> (i32, i32, i32) {
    %c0_i32 = arith.constant 0 : i32
    %c0_i32_0 = arith.constant 0 : i32
    %c0_i32_1 = arith.constant 0 : i32
    return %arg0, %c0_i32, %c0_i32_0 : i32, i32, i32
  }
  func.func @transform_1(%arg0: i32) -> (i32, i32) {
    %c0_i32 = arith.constant 0 : i32
    %c0_i32_0 = arith.constant 0 : i32
    %c0_i32_1 = arith.constant 0 : i32
    return %c0_i32, %c0_i32_0 : i32, i32
  }
  func.func @transform_2(%arg0: i32) -> (i32, i32) {
    %c0_i32 = arith.constant 0 : i32
    %c0_i32_0 = arith.constant 0 : i32
    %c0_i32_1 = arith.constant 0 : i32
    return %c0_i32, %c0_i32_0 : i32, i32
  }
  func.func @transform_3(%arg0: i32) -> (i32, i32) {
    %c0_i32 = arith.constant 0 : i32
    %c0_i32_0 = arith.constant 0 : i32
    %c0_i32_1 = arith.constant 0 : i32
    return %c0_i32, %c0_i32_0 : i32, i32
  }
  func.func @transform_4(%arg0: i32) -> (i32, i32, i32) {
    %c0_i32 = arith.constant 0 : i32
    %c0_i32_0 = arith.constant 0 : i32
    %c0_i32_1 = arith.constant 0 : i32
    return %arg0, %c0_i32, %c0_i32_0 : i32, i32, i32
  }
}

</mosaic_0001>

<llo_original>
// kernel: cbam.1
$region0: #{cbam.1}
  #allocation0 [shape = 'u32[]', space=smem, size = 0x4, offset = 0x4, fixed_abs, tag = 'smem constant byte address 0x4 - core index']
  #allocation1 [shape = 'u32[144,128]{1,0:T(1,128)}', space=vmem, size = 0x12000, scoped, tag = 'internal scratch']
  %s0 = inlined_call_operand.vmem [shape: f32[2,32,256], index: 0, kind: input, shape index: {}]
  %s1 = inlined_call_operand.vmem [shape: f32[128,32], index: 1, kind: input, shape index: {}]
  %s2 = inlined_call_operand.vmem [shape: f32[32,128], index: 2, kind: input, shape index: {}]
  %s3 = inlined_call_operand.vmem [shape: f32[512,256], index: 3, kind: input, shape index: {}]
  %s4 = inlined_call_operand.vmem [shape: f32[2,32,256], index: 4, kind: output, shape index: {}]
  %s5 = sld [smem:[#allocation0]]
  $region49: #{cbam.1} parent=0
    _
  %s7 = ssub.s32 1, %s5
  %s8 = scalar_select 0, %s7, %s5
  loop: start=0, step=1, limit=4
  $region2: #{cbam.1} parent=0 // loop_pre_header
    _
  $region3: #{cbam.1} parent=0 // loop_header
    %s10 = sphi 0, %s14
    %p11 = scmp.ge.s32.totalorder %s10, 4
    %s20 = sphi 0, %s22
    %s23 = sphi 0, %s20
    %s24 = sphi 0, %s23
    %s40 = sphi 0, %s24
    %s44 = sphi 0, %s44
    %s46 = sphi 0, %s44
    %s47 = sphi 0, %s46
    %s61 = sphi 0, %s47
    %s65 = sphi 0, %s65
    %s67 = sphi 0, %s65
    %s68 = sphi 0, %s67
    %s82 = sphi 0, %s68
    %s86 = sphi 0, %s86
    %s88 = sphi 0, %s86
    %s89 = sphi 0, %s88
    %s103 = sphi 0, %s89
    %s109 = sphi 0, %s111
    %s112 = sphi 0, %s109
    %s113 = sphi 0, %s112
    %s129 = sphi 0, %s113
  $region4: #{cbam.1} parent=0 // loop_header_branch
    %13 = sbr.rel (%p11) target = $region8
  $region5: #{cbam.1} parent=0 // loop_body
    %s15 = ssub.s32 %s10, 1
    %s16 = ssub.s32 %s10, 2
    %s17 = sadd.s32 %s10, 1
    %s18 = ssub.s32 %s10, %s17
    %p19 = scmp.eq.s32.totalorder %s18, 0
    %s21 = sadd.s32 %s20, 1
    %s22 = scalar_select %p19, %s20, %s21
    %p25 = pneg %p19
    %p26 = scmp.eq.s32.totalorder %s10, 1
    %p27 = por %p25, %p26
    %p28 = scmp.ne.s32.totalorder %s20, %s23
    %p29 = scmp.eq.s32.totalorder %s10, 0
    %p30 = por %p28, %p29
    %p31 = scmp.ne.s32.totalorder %s20, %s23
    %p32 = scmp.eq.s32.totalorder %s15, 1
    %p33 = por %p31, %p32
    %p34 = scmp.ne.s32.totalorder %s23, %s24
    %p35 = scmp.eq.s32.totalorder %s15, 0
    %p36 = por %p34, %p35
    %p37 = scmp.ne.s32.totalorder %s23, %s24
    %p38 = scmp.eq.s32.totalorder %s16, 1
    %p39 = por %p37, %p38
    %p41 = scmp.ne.s32.totalorder %s24, %s40
    %p42 = scmp.eq.s32.totalorder %s16, 0
    %p43 = por %p41, %p42
    %s45 = sadd.s32 %s44, 1
    %p48 = scmp.eq.s32.totalorder %s10, 1
    %p49 = scmp.ne.s32.totalorder %s44, %s46
    %p50 = scmp.eq.s32.totalorder %s10, 0
    %p51 = por %p49, %p50
    %p52 = scmp.ne.s32.totalorder %s44, %s46
    %p53 = scmp.eq.s32.totalorder %s15, 1
    %p54 = por %p52, %p53
    %p55 = scmp.ne.s32.totalorder %s46, %s47
    %p56 = scmp.eq.s32.totalorder %s15, 0
    %p57 = por %p55, %p56
    %p58 = scmp.ne.s32.totalorder %s46, %s47
    %p59 = scmp.eq.s32.totalorder %s16, 1
    %p60 = por %p58, %p59
    %p62 = scmp.ne.s32.totalorder %s47, %s61
    %p63 = scmp.eq.s32.totalorder %s16, 0
    %p64 = por %p62, %p63
    %s66 = sadd.s32 %s65, 1
    %p69 = scmp.eq.s32.totalorder %s10, 1
    %p70 = scmp.ne.s32.totalorder %s65, %s67
    %p71 = scmp.eq.s32.totalorder %s10, 0
    %p72 = por %p70, %p71
    %p73 = scmp.ne.s32.totalorder %s65, %s67
    %p74 = scmp.eq.s32.totalorder %s15, 1
    %p75 = por %p73, %p74
    %p76 = scmp.ne.s32.totalorder %s67, %s68
    %p77 = scmp.eq.s32.totalorder %s15, 0
    %p78 = por %p76, %p77
    %p79 = scmp.ne.s32.totalorder %s67, %s68
    %p80 = scmp.eq.s32.totalorder %s16, 1
    %p81 = por %p79, %p80
    %p83 = scmp.ne.s32.totalorder %s68, %s82
    %p84 = scmp.eq.s32.totalorder %s16, 0
    %p85 = por %p83, %p84
    %s87 = sadd.s32 %s86, 1
    %p90 = scmp.eq.s32.totalorder %s10, 1
    %p91 = scmp.ne.s32.totalorder %s86, %s88
    %p92 = scmp.eq.s32.totalorder %s10, 0
    %p93 = por %p91, %p92
    %p94 = scmp.ne.s32.totalorder %s86, %s88
    %p95 = scmp.eq.s32.totalorder %s15, 1
    %p96 = por %p94, %p95
    %p97 = scmp.ne.s32.totalorder %s88, %s89
    %p98 = scmp.eq.s32.totalorder %s15, 0
    %p99 = por %p97, %p98
    %p100 = scmp.ne.s32.totalorder %s88, %s89
    %p101 = scmp.eq.s32.totalorder %s16, 1
    %p102 = por %p100, %p101
    %p104 = scmp.ne.s32.totalorder %s89, %s103
    %p105 = scmp.eq.s32.totalorder %s16, 0
    %p106 = por %p104, %p105
    %s107 = ssub.s32 %s10, %s17
    %p108 = scmp.eq.s32.totalorder %s107, 0
    %s110 = sadd.s32 %s109, 1
    %s111 = scalar_select %p108, %s109, %s110
    %p114 = pneg %p108
    %p115 = scmp.eq.s32.totalorder %s10, 1
    %p116 = por %p114, %p115
    %p117 = scmp.ne.s32.totalorder %s109, %s112
    %p118 = scmp.eq.s32.totalorder %s10, 0
    %p119 = por %p117, %p118
    %p120 = scmp.ne.s32.totalorder %s109, %s112
    %p121 = scmp.eq.s32.totalorder %s15, 1
    %p122 = por %p120, %p121
    %p123 = scmp.ne.s32.totalorder %s112, %s113
    %p124 = scmp.eq.s32.totalorder %s15, 0
    %p125 = por %p123, %p124
    %p126 = scmp.ne.s32.totalorder %s112, %s113
    %p127 = scmp.eq.s32.totalorder %s16, 1
    %p128 = por %p126, %p127
    %p130 = scmp.ne.s32.totalorder %s113, %s129
    %p131 = scmp.eq.s32.totalorder %s16, 0
    %p132 = por %p130, %p131
    %p133 = scmp.le.s32.totalorder 1, %s10
    %p134 = scmp.lt.s32.totalorder %s10, 3
    %p135 = pnand %p133, %p134
    %p136 = pneg %p135
    // Predicated region
    $region9: #{cbam.1} parent=5 // pred_check
      _
    $region10: #{cbam.1} parent=5 // pred_check_branch
      %138 = sbr.rel (%p135) target = $region12
    $region11: #{cbam.1} parent=5 // pred_region
      %s139 = ssub.s32 %s10, 1
      // Predicated region
      $region13: #{cbam.1} parent=11 // pred_check
        %p140 = pneg %p57
      $region14: #{cbam.1} parent=11 // pred_check_branch
        %142 = sbr.rel (%p140) target = $region16
      $region15: #{cbam.1} parent=11 // pred_region
        _
      $region16: #{cbam.1} parent=11 // pred_fallthru
        _
      // Predicated region
      $region17: #{cbam.1} parent=11 // pred_check
        %p143 = pneg %p78
      $region18: #{cbam.1} parent=11 // pred_check_branch
        %145 = sbr.rel (%p143) target = $region20
      $region19: #{cbam.1} parent=11 // pred_region
        _
      $region20: #{cbam.1} parent=11 // pred_fallthru
        _
      // Predicated region
      $region21: #{cbam.1} parent=11 // pred_check
        %p146 = pneg %p99
      $region22: #{cbam.1} parent=11 // pred_check_branch
        %148 = sbr.rel (%p146) target = $region24
      $region23: #{cbam.1} parent=11 // pred_region
        _
      $region24: #{cbam.1} parent=11 // pred_fallthru
        _
    $region12: #{cbam.1} parent=5 // pred_fallthru
      _
    %p149 = scmp.lt.s32.totalorder %s10, 2
    // Predicated region
    $region25: #{cbam.1} parent=5 // pred_check
      %p150 = pneg %p149
    $region26: #{cbam.1} parent=5 // pred_check_branch
      %152 = sbr.rel (%p150) target = $region28
    $region27: #{cbam.1} parent=5 // pred_region
      // Predicated region
      $region29: #{cbam.1} parent=27 // pred_check
        %p153 = pneg %p30
      $region30: #{cbam.1} parent=27 // pred_check_branch
        %155 = sbr.rel (%p153) target = $region32
      $region31: #{cbam.1} parent=27 // pred_region
        %p156 = scmp.lt.s32.totalorder %s10, 1
        %s157 = scalar_select %p156, %s10, 1
        %s158 = smul.addr %s157, 8
        %s159 = smul.addr %s158, 8
        %s160 = scalar_lea.vmem %s0, %s159
      $region32: #{cbam.1} parent=27 // pred_fallthru
        _
    $region28: #{cbam.1} parent=5 // pred_fallthru
      _
    %p161 = scmp.le.s32.totalorder 1, %s10
    %p162 = scmp.lt.s32.totalorder %s10, 3
    %p163 = pnand %p161, %p162
    %p164 = pneg %p163
    // Predicated region
    $region33: #{cbam.1} parent=5 // pred_check
      _
    $region34: #{cbam.1} parent=5 // pred_check_branch
      %166 = sbr.rel (%p163) target = $region36
    $region35: #{cbam.1} parent=5 // pred_region
      %s167 = ssub.s32 %s10, 1
      %p168 = scmp.lt.s32.totalorder %s15, 1
      %s169 = scalar_select %p168, %s15, 1
      %s170 = smul.addr %s169, 8
      %s171 = smul.addr %s170, 8
      %s172 = scalar_lea.vmem %s0, %s171
      %p173 = pneg %p36
      %p174 = pneg %p33
      %p175 = pneg %p57
      %p176 = pneg %p54
      %p177 = pneg %p78
      %p178 = pneg %p75
      %p179 = pneg %p99
      %p180 = pneg %p96
      %p181 = pneg %p125
      %p182 = pneg %p122
      %p183 = scmp.lt.s32.totalorder %s15, 1
      %s184 = scalar_select %p183, %s15, 1
      %s185 = smul.addr %s184, 8
      %s186 = smul.addr %s185, 8
      %s187 = scalar_lea.vmem %s4, %s186
      %p188 = scmp.lt.s32.totalorder %s15, 1
      %s189 = scalar_select %p188, %s15, 1
      %s190 = smul.addr %s189, 8
      %s191 = smul.addr %s190, 8
      %s192 = scalar_lea.vmem %s0, %s191
      %p193 = scmp.lt.s32.totalorder %s15, 1
      %s194 = scalar_select %p193, %s15, 1
      %s195 = smul.addr %s194, 8
      %s196 = smul.addr %s195, 8
      %s197 = scalar_lea.vmem %s4, %s196
      %v198 = vld [vmem:[%s192] sm:$0xff]
      %v199 = vld [vmem:[%s192 + $0x8] sm:$0xff]
      %v200 = vld [vmem:[%s192 + $0x10] sm:$0xff]
      %v201 = vld [vmem:[%s192 + $0x18] sm:$0xff]
      %v202 = vld [vmem:[%s192 + $0x20] sm:$0xff]
      %v203 = vld [vmem:[%s192 + $0x28] sm:$0xff]
      %v204 = vld [vmem:[%s192 + $0x30] sm:$0xff]
      %v205 = vld [vmem:[%s192 + $0x38] sm:$0xff]
      %v206 = vadd.f32 %v198, %v199
      %207 = vadd.xlane.f32.xlu0 %v206
      %v208 = vpop.xlane.xlu0 %207
      %v209 = vadd.f32 %v200, %v201
      %210 = vadd.xlane.f32.xlu0 %v209
      %v211 = vpop.xlane.xlu0 %210
      %v212 = vadd.f32 %v202, %v203
      %213 = vadd.xlane.f32.xlu0 %v212
      %v214 = vpop.xlane.xlu0 %213
      %v215 = vadd.f32 %v204, %v205
      %216 = vadd.xlane.f32.xlu0 %v215
      %v217 = vpop.xlane.xlu0 %216
      %v218 = vrcp.pop 256.0
      %v219 = vmul.f32 %v208, %v218
      %v220 = vmul.f32 %v211, %v218
      %v221 = vmul.f32 %v214, %v218
      %v222 = vmul.f32 %v217, %v218
      %v223 = vmax.f32 %v198, %v199
      %224 = vmax.xlane.f32.xlu0 %v223
      %v225 = vpop.xlane.xlu0 %224
      %v226 = vmax.f32 %v200, %v201
      %227 = vmax.xlane.f32.xlu0 %v226
      %v228 = vpop.xlane.xlu0 %227
      %v229 = vmax.f32 %v202, %v203
      %230 = vmax.xlane.f32.xlu0 %v229
      %v231 = vpop.xlane.xlu0 %230
      %v232 = vmax.f32 %v204, %v205
      %233 = vmax.xlane.f32.xlu0 %v232
      %v234 = vpop.xlane.xlu0 %233
      %vm235 = vcmask 7168
      %v236 = vsel %vm235, %v219, %v225
      %v237 = vsel %vm235, %v220, %v228
      %v238 = vsel %vm235, %v221, %v231
      %v239 = vsel %vm235, %v222, %v234
      %v240 = vld [vmem:[%s1] sm:$0xff]
      %v241 = vld [vmem:[%s1 + $0x8] sm:$0xff]
      %v242 = vld [vmem:[%s1 + $0x10] sm:$0xff]
      %v243 = vld [vmem:[%s1 + $0x18] sm:$0xff]
      %v244 = vld [vmem:[%s1 + $0x20] sm:$0xff]
      %v245 = vld [vmem:[%s1 + $0x28] sm:$0xff]
      %v246 = vld [vmem:[%s1 + $0x30] sm:$0xff]
      %v247 = vld [vmem:[%s1 + $0x38] sm:$0xff]
      %v248 = vld [vmem:[%s1 + $0x40] sm:$0xff]
      %v249 = vld [vmem:[%s1 + $0x48] sm:$0xff]
      %v250 = vld [vmem:[%s1 + $0x50] sm:$0xff]
      %v251 = vld [vmem:[%s1 + $0x58] sm:$0xff]
      %v252 = vld [vmem:[%s1 + $0x60] sm:$0xff]
      %v253 = vld [vmem:[%s1 + $0x68] sm:$0xff]
      %v254 = vld [vmem:[%s1 + $0x70] sm:$0xff]
      %v255 = vld [vmem:[%s1 + $0x78] sm:$0xff]
      %vm256 = vcmask 261120
      %v258 = vsel %vm256, %v240, 0
      %v261 = vsel %vm256, %v241, 0
      %v264 = vsel %vm256, %v242, 0
      %v267 = vsel %vm256, %v243, 0
      %v270 = vsel %vm256, %v244, 0
      %v273 = vsel %vm256, %v245, 0
      %v276 = vsel %vm256, %v246, 0
      %v279 = vsel %vm256, %v247, 0
      %v282 = vsel %vm256, %v248, 0
      %v285 = vsel %vm256, %v249, 0
      %v288 = vsel %vm256, %v250, 0
      %v291 = vsel %vm256, %v251, 0
      %v294 = vsel %vm256, %v252, 0
      %v297 = vsel %vm256, %v253, 0
      %v300 = vsel %vm256, %v254, 0
      %v303 = vsel %vm256, %v255, 0
      %305 = vmatprep.subr.mxu0 0.0
      %v306 = vand.u32 %v236, 4294901760
      %307 = vmatpush1.msra.mxu0 %v306
      %308 = vmatprep.subr.mxu0 0.0
      %v309 = vand.u32 %v237, 4294901760
      %310 = vmatpush1.msra.mxu0 %v309
      %311 = vmatprep.subr.mxu0 0.0
      %v312 = vand.u32 %v238, 4294901760
      %313 = vmatpush1.msra.mxu0 %v312
      %314 = vmatprep.subr.mxu0 0.0
      %v315 = vand.u32 %v239, 4294901760
      %316 = vmatpush1.msra.mxu0 %v315
      %317 = vmatprep.subr.mxu0 0.0
      %318 = vmatpush1.msra.mxu0 0.0
      %319 = vmatprep.subr.mxu0 0.0
      %320 = vmatpush1.msra.mxu0 0.0
      %321 = vmatprep.subr.mxu0 0.0
      %322 = vmatpush1.msra.mxu0 0.0
      %323 = vmatprep.subr.mxu0 0.0
      %324 = vmatpush1.msra.mxu0 0.0
      %325 = vmatprep.subr.mxu0 0.0
      %326 = vmatpush1.msra.mxu0 0.0
      %327 = vmatprep.subr.mxu0 0.0
      %328 = vmatpush1.msra.mxu0 0.0
      %329 = vmatprep.subr.mxu0 0.0
      %330 = vmatpush1.msra.mxu0 0.0
      %331 = vmatprep.subr.mxu0 0.0
      %332 = vmatpush1.msra.mxu0 0.0
      %333 = vmatprep.subr.mxu0 0.0
      %334 = vmatpush1.msra.mxu0 0.0
      %335 = vmatprep.subr.mxu0 0.0
      %336 = vmatpush1.msra.mxu0 0.0
      %337 = vmatprep.subr.mxu0 0.0
      %338 = vmatpush1.msra.mxu0 0.0
      %339 = vmatprep.subr.mxu0 0.0
      %340 = vmatpush1.msra.mxu0 0.0
      %341 = vmatprep.subr.mxu0 0.0
      %342 = vmatpush1.msra.mxu0 0.0
      %343 = vmatprep.subr.mxu0 0.0
      %344 = vmatpush1.msra.mxu0 0.0
      %345 = vmatprep.subr.mxu0 0.0
      %346 = vmatpush1.msra.mxu0 0.0
      %347 = vmatprep.subr.mxu0 0.0
      %348 = vmatpush1.msra.mxu0 0.0
      %349 = vmatprep.subr.mxu0 0.0
      %350 = vmatpush1.msra.mxu0 0.0
      %351 = vmatprep.subr.mxu0 0.0
      %352 = vmatpush1.msra.mxu0 0.0
      %353 = vmatprep.subr.mxu0 0.0
      %354 = vmatpush1.msra.mxu0 0.0
      %355 = vmatprep.subr.mxu0 0.0
      %356 = vmatpush1.msra.mxu0 0.0
      %357 = vmatprep.subr.mxu0 0.0
      %358 = vmatpush1.msra.mxu0 0.0
      %359 = vmatprep.subr.mxu0 0.0
      %360 = vmatpush1.msra.mxu0 0.0
      %361 = vmatprep.subr.mxu0 0.0
      %362 = vmatpush1.msra.mxu0 0.0
      %363 = vmatprep.subr.mxu0 0.0
      %364 = vmatpush1.msra.mxu0 0.0
      %365 = vmatprep.subr.mxu0 0.0
      %366 = vmatpush1.msra.mxu0 0.0
      %367 = vmatprep.subr.mxu0 0.0
      %368 = vmatpush1.msra.mxu0 0.0
      %369 = vmatprep.subr.mxu0 0.0
      %370 = vmatpush1.msra.mxu0 0.0
      %371 = vmatprep.subr.mxu0 0.0
      %372 = vmatpush1.msra.mxu0 0.0
      %373 = vmatprep.mubr.f32.mxu0 0.0
      %v374 = vand.u32 %v258, 4294901760
      %v375 = vsub.f32 %v258, %v374
      %v376 = vand.u32 %v375, 4294901760
      %v377 = vsub.f32 %v375, %v376
      %v378 = vand.u32 %v377, 4294901760
      %379 = vmatmul.mubr.f32.gmra.mrb[0].mxu0 %v378
      %v380 = vpop.f32.mrb[0].mxu0
      %v381 = vadd.f32 0.0, %v380
      %v382 = vpop.f32.mrb[0].mxu0
      %383 = vmatprep.mubr.f32.mxu0 0.0
      %v384 = vand.u32 %v261, 4294901760
      %v385 = vsub.f32 %v261, %v384
      %v386 = vand.u32 %v385, 4294901760
      %v387 = vsub.f32 %v385, %v386
      %v388 = vand.u32 %v387, 4294901760
      %389 = vmatmul.mubr.f32.gmra.mrb[0].mxu0 %v388
      %v390 = vpop.f32.mrb[0].mxu0
      %v391 = vadd.f32 0.0, %v390
      %v392 = vpop.f32.mrb[0].mxu0
      %393 = vmatprep.mubr.f32.mxu0 0.0
      %v394 = vand.u32 %v264, 4294901760
      %v395 = vsub.f32 %v264, %v394
      %v396 = vand.u32 %v395, 4294901760
      %v397 = vsub.f32 %v395, %v396
      %v398 = vand.u32 %v397, 4294901760
      %399 = vmatmul.mubr.f32.gmra.mrb[0].mxu0 %v398
      %v400 = vpop.f32.mrb[0].mxu0
      %v401 = vadd.f32 0.0, %v400
      %v402 = vpop.f32.mrb[0].mxu0
      %403 = vmatprep.mubr.f32.mxu0 0.0
      %v404 = vand.u32 %v267, 4294901760
      %v405 = vsub.f32 %v267, %v404
      %v406 = vand.u32 %v405, 4294901760
      %v407 = vsub.f32 %v405, %v406
      %v408 = vand.u32 %v407, 4294901760
      %409 = vmatmul.mubr.f32.gmra.mrb[0].mxu0 %v408
      %v410 = vpop.f32.mrb[0].mxu0
      %v411 = vadd.f32 0.0, %v410
      %v412 = vpop.f32.mrb[0].mxu0
      %413 = vmatprep.mubr.f32.mxu0 0.0
      %v414 = vand.u32 %v270, 4294901760
      %v415 = vsub.f32 %v270, %v414
      %v416 = vand.u32 %v415, 4294901760
      %v417 = vsub.f32 %v415, %v416
      %v418 = vand.u32 %v417, 4294901760
      %419 = vmatmul.mubr.f32.gmra.mrb[0].mxu0 %v418
      %v420 = vpop.f32.mrb[0].mxu0
      %v421 = vadd.f32 0.0, %v420
      %v422 = vpop.f32.mrb[0].mxu0
      %423 = vmatprep.mubr.f32.mxu0 0.0
      %v424 = vand.u32 %v273, 4294901760
      %v425 = vsub.f32 %v273, %v424
      %v426 = vand.u32 %v425, 4294901760
      %v427 = vsub.f32 %v425, %v426
      %v428 = vand.u32 %v427, 4294901760
      %429 = vmatmul.mubr.f32.gmra.mrb[0].mxu0 %v428
      %v430 = vpop.f32.mrb[0].mxu0
      %v431 = vadd.f32 0.0, %v430
      %v432 = vpop.f32.mrb[0].mxu0
      %433 = vmatprep.mubr.f32.mxu0 0.0
      %v434 = vand.u32 %v276, 4294901760
      %v435 = vsub.f32 %v276, %v434
      %v436 = vand.u32 %v435, 4294901760
      %v437 = vsub.f32 %v435, %v436
      %v438 = vand.u32 %v437, 4294901760
      %439 = vmatmul.mubr.f32.gmra.mrb[0].mxu0 %v438
      %v440 = vpop.f32.mrb[0].mxu0
      %v441 = vadd.f32 0.0, %v440
      %v442 = vpop.f32.mrb[0].mxu0
      %443 = vmatprep.mubr.f32.mxu0 0.0
      %v444 = vand.u32 %v279, 4294901760
      %v445 = vsub.f32 %v279, %v444
      %v446 = vand.u32 %v445, 4294901760
      %v447 = vsub.f32 %v445, %v446
      %v448 = vand.u32 %v447, 4294901760
      %449 = vmatmul.mubr.f32.gmra.mrb[0].mxu0 %v448
      %v450 = vpop.f32.mrb[0].mxu0
      %v451 = vadd.f32 0.0, %v450
      %v452 = vpop.f32.mrb[0].mxu0
      %453 = vmatprep.mubr.f32.mxu0 0.0
      %v454 = vand.u32 %v282, 4294901760
      %v455 = vsub.f32 %v282, %v454
      %v456 = vand.u32 %v455, 4294901760
      %v457 = vsub.f32 %v455, %v456
      %v458 = vand.u32 %v457, 4294901760
      %459 = vmatmul.mubr.f32.gmra.mrb[0].mxu0 %v458
      %v460 = vpop.f32.mrb[0].mxu0
      %v461 = vadd.f32 0.0, %v460
      %v462 = vpop.f32.mrb[0].mxu0
      %463 = vmatprep.mubr.f32.mxu0 0.0
      %v464 = vand.u32 %v285, 4294901760
      %v465 = vsub.f32 %v285, %v464
      %v466 = vand.u32 %v465, 4294901760
      %v467 = vsub.f32 %v465, %v466
      %v468 = vand.u32 %v467, 4294901760
      %469 = vmatmul.mubr.f32.gmra.mrb[0].mxu0 %v468
      %v470 = vpop.f32.mrb[0].mxu0
      %v471 = vadd.f32 0.0, %v470
      %v472 = vpop.f32.mrb[0].mxu0
      %473 = vmatprep.mubr.f32.mxu0 0.0
      %v474 = vand.u32 %v288, 4294901760
      %v475 = vsub.f32 %v288, %v474
      %v476 = vand.u32 %v475, 4294901760
      %v477 = vsub.f32 %v475, %v476
      %v478 = vand.u32 %v477, 4294901760
      %479 = vmatmul.mubr.f32.gmra.mrb[0].mxu0 %v478
      %v480 = vpop.f32.mrb[0].mxu0
      %v481 = vadd.f32 0.0, %v480
      %v482 = vpop.f32.mrb[0].mxu0
      %483 = vmatprep.mubr.f32.mxu0 0.0
      %v484 = vand.u32 %v291, 4294901760
      %v485 = vsub.f32 %v291, %v484
      %v486 = vand.u32 %v485, 4294901760
      %v487 = vsub.f32 %v485, %v486
      %v488 = vand.u32 %v487, 4294901760
      %489 = vmatmul.mubr.f32.gmra.mrb[0].mxu0 %v488
      %v490 = vpop.f32.mrb[0].mxu0
      %v491 = vadd.f32 0.0, %v490
      %v492 = vpop.f32.mrb[0].mxu0
      %493 = vmatprep.mubr.f32.mxu0 0.0
      %v494 = vand.u32 %v294, 4294901760
      %v495 = vsub.f32 %v294, %v494
      %v496 = vand.u32 %v495, 4294901760
      %v497 = vsub.f32 %v495, %v496
      %v498 = vand.u32 %v497, 4294901760
      %499 = vmatmul.mubr.f32.gmra.mrb[0].mxu0 %v498
      %v500 = vpop.f32.mrb[0].mxu0
      %v501 = vadd.f32 0.0, %v500
      %v502 = vpop.f32.mrb[0].mxu0
      %503 = vmatprep.mubr.f32.mxu0 0.0
      %v504 = vand.u32 %v297, 4294901760
      %v505 = vsub.f32 %v297, %v504
      %v506 = vand.u32 %v505, 4294901760
      %v507 = vsub.f32 %v505, %v506
      %v508 = vand.u32 %v507, 4294901760
      %509 = vmatmul.mubr.f32.gmra.mrb[0].mxu0 %v508
      %v510 = vpop.f32.mrb[0].mxu0
      %v511 = vadd.f32 0.0, %v510
      %v512 = vpop.f32.mrb[0].mxu0
      %513 = vmatprep.mubr.f32.mxu0 0.0
      %v514 = vand.u32 %v300, 4294901760
      %v515 = vsub.f32 %v300, %v514
      %v516 = vand.u32 %v515, 4294901760
      %v517 = vsub.f32 %v515, %v516
      %v518 = vand.u32 %v517, 4294901760
      %519 = vmatmul.mubr.f32.gmra.mrb[0].mxu0 %v518
      %v520 = vpop.f32.mrb[0].mxu0
      %v521 = vadd.f32 0.0, %v520
      %v522 = vpop.f32.mrb[0].mxu0
      %523 = vmatprep.mubr.f32.mxu0 0.0
      %v524 = vand.u32 %v303, 4294901760
      %v525 = vsub.f32 %v303, %v524
      %v526 = vand.u32 %v525, 4294901760
      %v527 = vsub.f32 %v525, %v526
      %v528 = vand.u32 %v527, 4294901760
      %529 = vmatmul.mubr.f32.gmra.mrb[0].mxu0 %v528
      %v530 = vpop.f32.mrb[0].mxu0
      %v531 = vadd.f32 0.0, %v530
      %v532 = vpop.f32.mrb[0].mxu0
      %533 = vdwg.mxu0
      %534 = vmatprep.subr.mxu0 0.0
      %v535 = vand.u32 %v236, 4294901760
      %v536 = vsub.f32 %v236, %v535
      %v537 = vand.u32 %v536, 4294901760
      %v538 = vsub.f32 %v536, %v537
      %v539 = vand.u32 %v538, 4294901760
      %540 = vmatpush1.msra.mxu0 %v539
      %541 = vmatprep.subr.mxu0 0.0
      %v542 = vand.u32 %v237, 4294901760
      %v543 = vsub.f32 %v237, %v542
      %v544 = vand.u32 %v543, 4294901760
      %v545 = vsub.f32 %v543, %v544
      %v546 = vand.u32 %v545, 4294901760
      %547 = vmatpush1.msra.mxu0 %v546
      %548 = vmatprep.subr.mxu0 0.0
      %v549 = vand.u32 %v238, 4294901760
      %v550 = vsub.f32 %v238, %v549
      %v551 = vand.u32 %v550, 4294901760
      %v552 = vsub.f32 %v550, %v551
      %v553 = vand.u32 %v552, 4294901760
      %554 = vmatpush1.msra.mxu0 %v553
      %555 = vmatprep.subr.mxu0 0.0
      %v556 = vand.u32 %v239, 4294901760
      %v557 = vsub.f32 %v239, %v556
      %v558 = vand.u32 %v557, 4294901760
      %v559 = vsub.f32 %v557, %v558
      %v560 = vand.u32 %v559, 4294901760
      %561 = vmatpush1.msra.mxu0 %v560
      %562 = vmatprep.subr.mxu0 0.0
      %563 = vmatpush1.msra.mxu0 0.0
      %564 = vmatprep.subr.mxu0 0.0
      %565 = vmatpush1.msra.mxu0 0.0
      %566 = vmatprep.subr.mxu0 0.0
      %567 = vmatpush1.msra.mxu0 0.0
      %568 = vmatprep.subr.mxu0 0.0
      %569 = vmatpush1.msra.mxu0 0.0
      %570 = vmatprep.subr.mxu0 0.0
      %571 = vmatpush1.msra.mxu0 0.0
      %572 = vmatprep.subr.mxu0 0.0
      %573 = vmatpush1.msra.mxu0 0.0
      %574 = vmatprep.subr.mxu0 0.0
      %575 = vmatpush1.msra.mxu0 0.0
      %576 = vmatprep.subr.mxu0 0.0
      %577 = vmatpush1.msra.mxu0 0.0
      %578 = vmatprep.subr.mxu0 0.0
      %579 = vmatpush1.msra.mxu0 0.0
      %580 = vmatprep.subr.mxu0 0.0
      %581 = vmatpush1.msra.mxu0 0.0
      %582 = vmatprep.subr.mxu0 0.0
      %583 = vmatpush1.msra.mxu0 0.0
      %584 = vmatprep.subr.mxu0 0.0
      %585 = vmatpush1.msra.mxu0 0.0
      %586 = vmatprep.subr.mxu0 0.0
      %587 = vmatpush1.msra.mxu0 0.0
      %588 = vmatprep.subr.mxu0 0.0
      %589 = vmatpush1.msra.mxu0 0.0
      %590 = vmatprep.subr.mxu0 0.0
      %591 = vmatpush1.msra.mxu0 0.0
      %592 = vmatprep.subr.mxu0 0.0
      %593 = vmatpush1.msra.mxu0 0.0
      %594 = vmatprep.subr.mxu0 0.0
      %595 = vmatpush1.msra.mxu0 0.0
      %596 = vmatprep.subr.mxu0 0.0
      %597 = vmatpush1.msra.mxu0 0.0
      %598 = vmatprep.subr.mxu0 0.0
      %599 = vmatpush1.msra.mxu0 0.0
      %600 = vmatprep.subr.mxu0 0.0
      %601 = vmatpush1.msra.mxu0 0.0
      %602 = vmatprep.subr.mxu0 0.0
      %603 = vmatpush1.msra.mxu0 0.0
      %604 = vmatprep.subr.mxu0 0.0
      %605 = vmatpush1.msra.mxu0 0.0
      %606 = vmatprep.subr.mxu0 0.0
      %607 = vmatpush1.msra.mxu0 0.0
      %608 = vmatprep.subr.mxu0 0.0
      %609 = vmatpush1.msra.mxu0 0.0
      %610 = vmatprep.subr.mxu0 0.0
      %611 = vmatpush1.msra.mxu0 0.0
      %612 = vmatprep.subr.mxu0 0.0
      %613 = vmatpush1.msra.mxu0 0.0
      %614 = vmatprep.subr.mxu0 0.0
      %615 = vmatpush1.msra.mxu0 0.0
      %616 = vmatprep.subr.mxu0 0.0
      %617 = vmatpush1.msra.mxu0 0.0
      %618 = vmatprep.mubr.f32.mxu0 0.0
      %v619 = vand.u32 %v258, 4294901760
      %620 = vmatmul.mubr.f32.gmra.mrb[0].mxu0 %v619
      %v621 = vpop.f32.mrb[0].mxu0
      %v622 = vadd.f32 %v381, %v621
      %v623 = vpop.f32.mrb[0].mxu0
      %624 = vmatprep.mubr.f32.mxu0 0.0
      %v625 = vand.u32 %v261, 4294901760
      %626 = vmatmul.mubr.f32.gmra.mrb[0].mxu0 %v625
      %v627 = vpop.f32.mrb[0].mxu0
      %v628 = vadd.f32 %v391, %v627
      %v629 = vpop.f32.mrb[0].mxu0
      %630 = vmatprep.mubr.f32.mxu0 0.0
      %v631 = vand.u32 %v264, 4294901760
      %632 = vmatmul.mubr.f32.gmra.mrb[0].mxu0 %v631
      %v633 = vpop.f32.mrb[0].mxu0
      %v634 = vadd.f32 %v401, %v633
      %v635 = vpop.f32.mrb[0].mxu0
      %636 = vmatprep.mubr.f32.mxu0 0.0
      %v637 = vand.u32 %v267, 4294901760
      %638 = vmatmul.mubr.f32.gmra.mrb[0].mxu0 %v637
      %v639 = vpop.f32.mrb[0].mxu0
      %v640 = vadd.f32 %v411, %v639
      %v641 = vpop.f32.mrb[0].mxu0
      %642 = vmatprep.mubr.f32.mxu0 0.0
      %v643 = vand.u32 %v270, 4294901760
      %644 = vmatmul.mubr.f32.gmra.mrb[0].mxu0 %v643
      %v645 = vpop.f32.mrb[0].mxu0
      %v646 = vadd.f32 %v421, %v645
      %v647 = vpop.f32.mrb[0].mxu0
      %648 = vmatprep.mubr.f32.mxu0 0.0
      %v649 = vand.u32 %v273, 4294901760
      %650 = vmatmul.mubr.f32.gmra.mrb[0].mxu0 %v649
      %v651 = vpop.f32.mrb[0].mxu0
      %v652 = vadd.f32 %v431, %v651
      %v653 = vpop.f32.mrb[0].mxu0
      %654 = vmatprep.mubr.f32.mxu0 0.0
      %v655 = vand.u32 %v276, 4294901760
      %656 = vmatmul.mubr.f32.gmra.mrb[0].mxu0 %v655
      %v657 = vpop.f32.mrb[0].mxu0
      %v658 = vadd.f32 %v441, %v657
      %v659 = vpop.f32.mrb[0].mxu0
      %660 = vmatprep.mubr.f32.mxu0 0.0
      %v661 = vand.u32 %v279, 4294901760
      %662 = vmatmul.mubr.f32.gmra.mrb[0].mxu0 %v661
      %v663 = vpop.f32.mrb[0].mxu0
      %v664 = vadd.f32 %v451, %v663
      %v665 = vpop.f32.mrb[0].mxu0
      %666 = vmatprep.mubr.f32.mxu0 0.0
      %v667 = vand.u32 %v282, 4294901760
      %668 = vmatmul.mubr.f32.gmra.mrb[0].mxu0 %v667
      %v669 = vpop.f32.mrb[0].mxu0
      %v670 = vadd.f32 %v461, %v669
      %v671 = vpop.f32.mrb[0].mxu0
      %672 = vmatprep.mubr.f32.mxu0 0.0
      %v673 = vand.u32 %v285, 4294901760
      %674 = vmatmul.mubr.f32.gmra.mrb[0].mxu0 %v673
      %v675 = vpop.f32.mrb[0].mxu0
      %v676 = vadd.f32 %v471, %v675
      %v677 = vpop.f32.mrb[0].mxu0
      %678 = vmatprep.mubr.f32.mxu0 0.0
      %v679 = vand.u32 %v288, 4294901760
      %680 = vmatmul.mubr.f32.gmra.mrb[0].mxu0 %v679
      %v681 = vpop.f32.mrb[0].mxu0
      %v682 = vadd.f32 %v481, %v681
      %v683 = vpop.f32.mrb[0].mxu0
      %684 = vmatprep.mubr.f32.mxu0 0.0
      %v685 = vand.u32 %v291, 4294901760
      %686 = vmatmul.mubr.f32.gmra.mrb[0].mxu0 %v685
      %v687 = vpop.f32.mrb[0].mxu0
      %v688 = vadd.f32 %v491, %v687
      %v689 = vpop.f32.mrb[0].mxu0
      %690 = vmatprep.mubr.f32.mxu0 0.0
      %v691 = vand.u32 %v294, 4294901760
      %692 = vmatmul.mubr.f32.gmra.mrb[0].mxu0 %v691
      %v693 = vpop.f32.mrb[0].mxu0
      %v694 = vadd.f32 %v501, %v693
      %v695 = vpop.f32.mrb[0].mxu0
      %696 = vmatprep.mubr.f32.mxu0 0.0
      %v697 = vand.u32 %v297, 4294901760
      %698 = vmatmul.mubr.f32.gmra.mrb[0].mxu0 %v697
      %v699 = vpop.f32.mrb[0].mxu0
      %v700 = vadd.f32 %v511, %v699
      %v701 = vpop.f32.mrb[0].mxu0
      %702 = vmatprep.mubr.f32.mxu0 0.0
      %v703 = vand.u32 %v300, 4294901760
      %704 = vmatmul.mubr.f32.gmra.mrb[0].mxu0 %v703
      %v705 = vpop.f32.mrb[0].mxu0
      %v706 = vadd.f32 %v521, %v705
      %v707 = vpop.f32.mrb[0].mxu0
      %708 = vmatprep.mubr.f32.mxu0 0.0
      %v709 = vand.u32 %v303, 4294901760
      %710 = vmatmul.mubr.f32.gmra.mrb[0].mxu0 %v709
      %v711 = vpop.f32.mrb[0].mxu0
      %v712 = vadd.f32 %v531, %v711
      %v713 = vpop.f32.mrb[0].mxu0
      %714 = vdwg.mxu0
      %715 = vmatprep.subr.mxu0 0.0
      %v716 = vand.u32 %v236, 4294901760
      %v717 = vsub.f32 %v236, %v716
      %718 = vmatpush1.msra.mxu0 %v717
      %719 = vmatprep.subr.mxu0 0.0
      %v720 = vand.u32 %v237, 4294901760
      %v721 = vsub.f32 %v237, %v720
      %722 = vmatpush1.msra.mxu0 %v721
      %723 = vmatprep.subr.mxu0 0.0
      %v724 = vand.u32 %v238, 4294901760
      %v725 = vsub.f32 %v238, %v724
      %726 = vmatpush1.msra.mxu0 %v725
      %727 = vmatprep.subr.mxu0 0.0
      %v728 = vand.u32 %v239, 4294901760
      %v729 = vsub.f32 %v239, %v728
      %730 = vmatpush1.msra.mxu0 %v729
      %731 = vmatprep.subr.mxu0 0.0
      %732 = vmatpush1.msra.mxu0 0.0
      %733 = vmatprep.subr.mxu0 0.0
      %734 = vmatpush1.msra.mxu0 0.0
      %735 = vmatprep.subr.mxu0 0.0
      %736 = vmatpush1.msra.mxu0 0.0
      %737 = vmatprep.subr.mxu0 0.0
      %738 = vmatpush1.msra.mxu0 0.0
      %739 = vmatprep.subr.mxu0 0.0
      %740 = vmatpush1.msra.mxu0 0.0
      %741 = vmatprep.subr.mxu0 0.0
      %742 = vmatpush1.msra.mxu0 0.0
      %743 = vmatprep.subr.mxu0 0.0
      %744 = vmatpush1.msra.mxu0 0.0
      %745 = vmatprep.subr.mxu0 0.0
      %746 = vmatpush1.msra.mxu0 0.0
      %747 = vmatprep.subr.mxu0 0.0
      %748 = vmatpush1.msra.mxu0 0.0
      %749 = vmatprep.subr.mxu0 0.0
      %750 = vmatpush1.msra.mxu0 0.0
      %751 = vmatprep.subr.mxu0 0.0
      %752 = vmatpush1.msra.mxu0 0.0
      %753 = vmatprep.subr.mxu0 0.0
      %754 = vmatpush1.msra.mxu0 0.0
      %755 = vmatprep.subr.mxu0 0.0
      %756 = vmatpush1.msra.mxu0 0.0
      %757 = vmatprep.subr.mxu0 0.0
      %758 = vmatpush1.msra.mxu0 0.0
      %759 = vmatprep.subr.mxu0 0.0
      %760 = vmatpush1.msra.mxu0 0.0
      %761 = vmatprep.subr.mxu0 0.0
      %762 = vmatpush1.msra.mxu0 0.0
      %763 = vmatprep.subr.mxu0 0.0
      %764 = vmatpush1.msra.mxu0 0.0
      %765 = vmatprep.subr.mxu0 0.0
      %766 = vmatpush1.msra.mxu0 0.0
      %767 = vmatprep.subr.mxu0 0.0
      %768 = vmatpush1.msra.mxu0 0.0
      %769 = vmatprep.subr.mxu0 0.0
      %770 = vmatpush1.msra.mxu0 0.0
      %771 = vmatprep.subr.mxu0 0.0
      %772 = vmatpush1.msra.mxu0 0.0
      %773 = vmatprep.subr.mxu0 0.0
      %774 = vmatpush1.msra.mxu0 0.0
      %775 = vmatprep.subr.mxu0 0.0
      %776 = vmatpush1.msra.mxu0 0.0
      %777 = vmatprep.subr.mxu0 0.0
      %778 = vmatpush1.msra.mxu0 0.0
      %779 = vmatprep.subr.mxu0 0.0
      %780 = vmatpush1.msra.mxu0 0.0
      %781 = vmatprep.subr.mxu0 0.0
      %782 = vmatpush1.msra.mxu0 0.0
      %783 = vmatprep.subr.mxu0 0.0
      %784 = vmatpush1.msra.mxu0 0.0
      %785 = vmatprep.subr.mxu0 0.0
      %786 = vmatpush1.msra.mxu0 0.0
      %787 = vmatprep.mubr.f32.mxu0 0.0
      %v788 = vand.u32 %v258, 4294901760
      %v789 = vsub.f32 %v258, %v788
      %790 = vmatmul.mubr.f32.gmra.mrb[0].mxu0 %v789
      %v791 = vpop.f32.mrb[0].mxu0
      %v792 = vadd.f32 %v622, %v791
      %v793 = vpop.f32.mrb[0].mxu0
      %794 = vmatprep.mubr.f32.mxu0 0.0
      %v795 = vand.u32 %v261, 4294901760
      %v796 = vsub.f32 %v261, %v795
      %797 = vmatmul.mubr.f32.gmra.mrb[0].mxu0 %v796
      %v798 = vpop.f32.mrb[0].mxu0
      %v799 = vadd.f32 %v628, %v798
      %v800 = vpop.f32.mrb[0].mxu0
      %801 = vmatprep.mubr.f32.mxu0 0.0
      %v802 = vand.u32 %v264, 4294901760
      %v803 = vsub.f32 %v264, %v802
      %804 = vmatmul.mubr.f32.gmra.mrb[0].mxu0 %v803
      %v805 = vpop.f32.mrb[0].mxu0
      %v806 = vadd.f32 %v634, %v805
      %v807 = vpop.f32.mrb[0].mxu0
      %808 = vmatprep.mubr.f32.mxu0 0.0
      %v809 = vand.u32 %v267, 4294901760
      %v810 = vsub.f32 %v267, %v809
      %811 = vmatmul.mubr.f32.gmra.mrb[0].mxu0 %v810
      %v812 = vpop.f32.mrb[0].mxu0
      %v813 = vadd.f32 %v640, %v812
      %v814 = vpop.f32.mrb[0].mxu0
      %815 = vmatprep.mubr.f32.mxu0 0.0
      %v816 = vand.u32 %v270, 4294901760
      %v817 = vsub.f32 %v270, %v816
      %818 = vmatmul.mubr.f32.gmra.mrb[0].mxu0 %v817
      %v819 = vpop.f32.mrb[0].mxu0
      %v820 = vadd.f32 %v646, %v819
      %v821 = vpop.f32.mrb[0].mxu0
      %822 = vmatprep.mubr.f32.mxu0 0.0
      %v823 = vand.u32 %v273, 4294901760
      %v824 = vsub.f32 %v273, %v823
      %825 = vmatmul.mubr.f32.gmra.mrb[0].mxu0 %v824
      %v826 = vpop.f32.mrb[0].mxu0
      %v827 = vadd.f32 %v652, %v826
      %v828 = vpop.f32.mrb[0].mxu0
      %829 = vmatprep.mubr.f32.mxu0 0.0
      %v830 = vand.u32 %v276, 4294901760
      %v831 = vsub.f32 %v276, %v830
      %832 = vmatmul.mubr.f32.gmra.mrb[0].mxu0 %v831
      %v833 = vpop.f32.mrb[0].mxu0
      %v834 = vadd.f32 %v658, %v833
      %v835 = vpop.f32.mrb[0].mxu0
      %836 = vmatprep.mubr.f32.mxu0 0.0
      %v837 = vand.u32 %v279, 4294901760
      %v838 = vsub.f32 %v279, %v837
      %839 = vmatmul.mubr.f32.gmra.mrb[0].mxu0 %v838
      %v840 = vpop.f32.mrb[0].mxu0
      %v841 = vadd.f32 %v664, %v840
      %v842 = vpop.f32.mrb[0].mxu0
      %843 = vmatprep.mubr.f32.mxu0 0.0
      %v844 = vand.u32 %v282, 4294901760
      %v845 = vsub.f32 %v282, %v844
      %846 = vmatmul.mubr.f32.gmra.mrb[0].mxu0 %v845
      %v847 = vpop.f32.mrb[0].mxu0
      %v848 = vadd.f32 %v670, %v847
      %v849 = vpop.f32.mrb[0].mxu0
      %850 = vmatprep.mubr.f32.mxu0 0.0
      %v851 = vand.u32 %v285, 4294901760
      %v852 = vsub.f32 %v285, %v851
      %853 = vmatmul.mubr.f32.gmra.mrb[0].mxu0 %v852
      %v854 = vpop.f32.mrb[0].mxu0
      %v855 = vadd.f32 %v676, %v854
      %v856 = vpop.f32.mrb[0].mxu0
      %857 = vmatprep.mubr.f32.mxu0 0.0
      %v858 = vand.u32 %v288, 4294901760
      %v859 = vsub.f32 %v288, %v858
      %860 = vmatmul.mubr.f32.gmra.mrb[0].mxu0 %v859
      %v861 = vpop.f32.mrb[0].mxu0
      %v862 = vadd.f32 %v682, %v861
      %v863 = vpop.f32.mrb[0].mxu0
      %864 = vmatprep.mubr.f32.mxu0 0.0
      %v865 = vand.u32 %v291, 4294901760
      %v866 = vsub.f32 %v291, %v865
      %867 = vmatmul.mubr.f32.gmra.mrb[0].mxu0 %v866
      %v868 = vpop.f32.mrb[0].mxu0
      %v869 = vadd.f32 %v688, %v868
      %v870 = vpop.f32.mrb[0].mxu0
      %871 = vmatprep.mubr.f32.mxu0 0.0
      %v872 = vand.u32 %v294, 4294901760
      %v873 = vsub.f32 %v294, %v872
      %874 = vmatmul.mubr.f32.gmra.mrb[0].mxu0 %v873
      %v875 = vpop.f32.mrb[0].mxu0
      %v876 = vadd.f32 %v694, %v875
      %v877 = vpop.f32.mrb[0].mxu0
      %878 = vmatprep.mubr.f32.mxu0 0.0
      %v879 = vand.u32 %v297, 4294901760
      %v880 = vsub.f32 %v297, %v879
      %881 = vmatmul.mubr.f32.gmra.mrb[0].mxu0 %v880
      %v882 = vpop.f32.mrb[0].mxu0
      %v883 = vadd.f32 %v700, %v882
      %v884 = vpop.f32.mrb[0].mxu0
      %885 = vmatprep.mubr.f32.mxu0 0.0
      %v886 = vand.u32 %v300, 4294901760
      %v887 = vsub.f32 %v300, %v886
      %888 = vmatmul.mubr.f32.gmra.mrb[0].mxu0 %v887
      %v889 = vpop.f32.mrb[0].mxu0
      %v890 = vadd.f32 %v706, %v889
      %v891 = vpop.f32.mrb[0].mxu0
      %892 = vmatprep.mubr.f32.mxu0 0.0
      %v893 = vand.u32 %v303, 4294901760
      %v894 = vsub.f32 %v303, %v893
      %895 = vmatmul.mubr.f32.gmra.mrb[0].mxu0 %v894
      %v896 = vpop.f32.mrb[0].mxu0
      %v897 = vadd.f32 %v712, %v896
      %v898 = vpop.f32.mrb[0].mxu0
      %899 = vdwg.mxu0
      %900 = vmatprep.subr.mxu0 0.0
      %v901 = vand.u32 %v236, 4294901760
      %902 = vmatpush1.msra.mxu0 %v901
      %903 = vmatprep.subr.mxu0 0.0
      %v904 = vand.u32 %v237, 4294901760
      %905 = vmatpush1.msra.mxu0 %v904
      %906 = vmatprep.subr.mxu0 0.0
      %v907 = vand.u32 %v238, 4294901760
      %908 = vmatpush1.msra.mxu0 %v907
      %909 = vmatprep.subr.mxu0 0.0
      %v910 = vand.u32 %v239, 4294901760
      %911 = vmatpush1.msra.mxu0 %v910
      %912 = vmatprep.subr.mxu0 0.0
      %913 = vmatpush1.msra.mxu0 0.0
      %914 = vmatprep.subr.mxu0 0.0
      %915 = vmatpush1.msra.mxu0 0.0
      %916 = vmatprep.subr.mxu0 0.0
      %917 = vmatpush1.msra.mxu0 0.0
      %918 = vmatprep.subr.mxu0 0.0
      %919 = vmatpush1.msra.mxu0 0.0
      %920 = vmatprep.subr.mxu0 0.0
      %921 = vmatpush1.msra.mxu0 0.0
      %922 = vmatprep.subr.mxu0 0.0
      %923 = vmatpush1.msra.mxu0 0.0
      %924 = vmatprep.subr.mxu0 0.0
      %925 = vmatpush1.msra.mxu0 0.0
      %926 = vmatprep.subr.mxu0 0.0
      %927 = vmatpush1.msra.mxu0 0.0
      %928 = vmatprep.subr.mxu0 0.0
      %929 = vmatpush1.msra.mxu0 0.0
      %930 = vmatprep.subr.mxu0 0.0
      %931 = vmatpush1.msra.mxu0 0.0
      %932 = vmatprep.subr.mxu0 0.0
      %933 = vmatpush1.msra.mxu0 0.0
      %934 = vmatprep.subr.mxu0 0.0
      %935 = vmatpush1.msra.mxu0 0.0
      %936 = vmatprep.subr.mxu0 0.0
      %937 = vmatpush1.msra.mxu0 0.0
      %938 = vmatprep.subr.mxu0 0.0
      %939 = vmatpush1.msra.mxu0 0.0
      %940 = vmatprep.subr.mxu0 0.0
      %941 = vmatpush1.msra.mxu0 0.0
      %942 = vmatprep.subr.mxu0 0.0
      %943 = vmatpush1.msra.mxu0 0.0
      %944 = vmatprep.subr.mxu0 0.0
      %945 = vmatpush1.msra.mxu0 0.0
      %946 = vmatprep.subr.mxu0 0.0
      %947 = vmatpush1.msra.mxu0 0.0
      %948 = vmatprep.subr.mxu0 0.0
      %949 = vmatpush1.msra.mxu0 0.0
      %950 = vmatprep.subr.mxu0 0.0
      %951 = vmatpush1.msra.mxu0 0.0
      %952 = vmatprep.subr.mxu0 0.0
      %953 = vmatpush1.msra.mxu0 0.0
      %954 = vmatprep.subr.mxu0 0.0
      %955 = vmatpush1.msra.mxu0 0.0
      %956 = vmatprep.subr.mxu0 0.0
      %957 = vmatpush1.msra.mxu0 0.0
      %958 = vmatprep.subr.mxu0 0.0
      %959 = vmatpush1.msra.mxu0 0.0
      %960 = vmatprep.subr.mxu0 0.0
      %961 = vmatpush1.msra.mxu0 0.0
      %962 = vmatprep.subr.mxu0 0.0
      %963 = vmatpush1.msra.mxu0 0.0
      %964 = vmatprep.subr.mxu0 0.0
      %965 = vmatpush1.msra.mxu0 0.0
      %966 = vmatprep.subr.mxu0 0.0
      %967 = vmatpush1.msra.mxu0 0.0
      %968 = vmatprep.mubr.f32.mxu0 0.0
      %v969 = vand.u32 %v258, 4294901760
      %v970 = vsub.f32 %v258, %v969
      %v971 = vand.u32 %v970, 4294901760
      %972 = vmatmul.mubr.f32.gmra.mrb[0].mxu0 %v971
      %v973 = vpop.f32.mrb[0].mxu0
      %v974 = vadd.f32 %v792, %v973
      %v975 = vpop.f32.mrb[0].mxu0
      %976 = vmatprep.mubr.f32.mxu0 0.0
      %v977 = vand.u32 %v261, 4294901760
      %v978 = vsub.f32 %v261, %v977
      %v979 = vand.u32 %v978, 4294901760
      %980 = vmatmul.mubr.f32.gmra.mrb[0].mxu0 %v979
      %v981 = vpop.f32.mrb[0].mxu0
      %v982 = vadd.f32 %v799, %v981
      %v983 = vpop.f32.mrb[0].mxu0
      %984 = vmatprep.mubr.f32.mxu0 0.0
      %v985 = vand.u32 %v264, 4294901760
      %v986 = vsub.f32 %v264, %v985
      %v987 = vand.u32 %v986, 4294901760
      %988 = vmatmul.mubr.f32.gmra.mrb[0].mxu0 %v987
      %v989 = vpop.f32.mrb[0].mxu0
      %v990 = vadd.f32 %v806, %v989
      %v991 = vpop.f32.mrb[0].mxu0
      %992 = vmatprep.mubr.f32.mxu0 0.0
      %v993 = vand.u32 %v267, 4294901760
      %v994 = vsub.f32 %v267, %v993
      %v995 = vand.u32 %v994, 4294901760
      %996 = vmatmul.mubr.f32.gmra.mrb[0].mxu0 %v995
      %v997 = vpop.f32.mrb[0].mxu0
      %v998 = vadd.f32 %v813, %v997
      %v999 = vpop.f32.mrb[0].mxu0
      %1000 = vmatprep.mubr.f32.mxu0 0.0
      %v1001 = vand.u32 %v270, 4294901760
      %v1002 = vsub.f32 %v270, %v1001
      %v1003 = vand.u32 %v1002, 4294901760
      %1004 = vmatmul.mubr.f32.gmra.mrb[0].mxu0 %v1003
      %v1005 = vpop.f32.mrb[0].mxu0
      %v1006 = vadd.f32 %v820, %v1005
      %v1007 = vpop.f32.mrb[0].mxu0
      %1008 = vmatprep.mubr.f32.mxu0 0.0
      %v1009 = vand.u32 %v273, 4294901760
      %v1010 = vsub.f32 %v273, %v1009
      %v1011 = vand.u32 %v1010, 4294901760
      %1012 = vmatmul.mubr.f32.gmra.mrb[0].mxu0 %v1011
      %v1013 = vpop.f32.mrb[0].mxu0
      %v1014 = vadd.f32 %v827, %v1013
      %v1015 = vpop.f32.mrb[0].mxu0
      %1016 = vmatprep.mubr.f32.mxu0 0.0
      %v1017 = vand.u32 %v276, 4294901760
      %v1018 = vsub.f32 %v276, %v1017
      %v1019 = vand.u32 %v1018, 4294901760
      %1020 = vmatmul.mubr.f32.gmra.mrb[0].mxu0 %v1019
      %v1021 = vpop.f32.mrb[0].mxu0
      %v1022 = vadd.f32 %v834, %v1021
      %v1023 = vpop.f32.mrb[0].mxu0
      %1024 = vmatprep.mubr.f32.mxu0 0.0
      %v1025 = vand.u32 %v279, 4294901760
      %v1026 = vsub.f32 %v279, %v1025
      %v1027 = vand.u32 %v1026, 4294901760
      %1028 = vmatmul.mubr.f32.gmra.mrb[0].mxu0 %v1027
      %v1029 = vpop.f32.mrb[0].mxu0
      %v1030 = vadd.f32 %v841, %v1029
      %v1031 = vpop.f32.mrb[0].mxu0
      %1032 = vmatprep.mubr.f32.mxu0 0.0
      %v1033 = vand.u32 %v282, 4294901760
      %v1034 = vsub.f32 %v282, %v1033
      %v1035 = vand.u32 %v1034, 4294901760
      %1036 = vmatmul.mubr.f32.gmra.mrb[0].mxu0 %v1035
      %v1037 = vpop.f32.mrb[0].mxu0
      %v1038 = vadd.f32 %v848, %v1037
      %v1039 = vpop.f32.mrb[0].mxu0
      %1040 = vmatprep.mubr.f32.mxu0 0.0
      %v1041 = vand.u32 %v285, 4294901760
      %v1042 = vsub.f32 %v285, %v1041
      %v1043 = vand.u32 %v1042, 4294901760
      %1044 = vmatmul.mubr.f32.gmra.mrb[0].mxu0 %v1043
      %v1045 = vpop.f32.mrb[0].mxu0
      %v1046 = vadd.f32 %v855, %v1045
      %v1047 = vpop.f32.mrb[0].mxu0
      %1048 = vmatprep.mubr.f32.mxu0 0.0
      %v1049 = vand.u32 %v288, 4294901760
      %v1050 = vsub.f32 %v288, %v1049
      %v1051 = vand.u32 %v1050, 4294901760
      %1052 = vmatmul.mubr.f32.gmra.mrb[0].mxu0 %v1051
      %v1053 = vpop.f32.mrb[0].mxu0
      %v1054 = vadd.f32 %v862, %v1053
      %v1055 = vpop.f32.mrb[0].mxu0
      %1056 = vmatprep.mubr.f32.mxu0 0.0
      %v1057 = vand.u32 %v291, 4294901760
      %v1058 = vsub.f32 %v291, %v1057
      %v1059 = vand.u32 %v1058, 4294901760
      %1060 = vmatmul.mubr.f32.gmra.mrb[0].mxu0 %v1059
      %v1061 = vpop.f32.mrb[0].mxu0
      %v1062 = vadd.f32 %v869, %v1061
      %v1063 = vpop.f32.mrb[0].mxu0
      %1064 = vmatprep.mubr.f32.mxu0 0.0
      %v1065 = vand.u32 %v294, 4294901760
      %v1066 = vsub.f32 %v294, %v1065
      %v1067 = vand.u32 %v1066, 4294901760
      %1068 = vmatmul.mubr.f32.gmra.mrb[0].mxu0 %v1067
      %v1069 = vpop.f32.mrb[0].mxu0
      %v1070 = vadd.f32 %v876, %v1069
      %v1071 = vpop.f32.mrb[0].mxu0
      %1072 = vmatprep.mubr.f32.mxu0 0.0
      %v1073 = vand.u32 %v297, 4294901760
      %v1074 = vsub.f32 %v297, %v1073
      %v1075 = vand.u32 %v1074, 4294901760
      %1076 = vmatmul.mubr.f32.gmra.mrb[0].mxu0 %v1075
      %v1077 = vpop.f32.mrb[0].mxu0
      %v1078 = vadd.f32 %v883, %v1077
      %v1079 = vpop.f32.mrb[0].mxu0
      %1080 = vmatprep.mubr.f32.mxu0 0.0
      %v1081 = vand.u32 %v300, 4294901760
      %v1082 = vsub.f32 %v300, %v1081
      %v1083 = vand.u32 %v1082, 4294901760
      %1084 = vmatmul.mubr.f32.gmra.mrb[0].mxu0 %v1083
      %v1085 = vpop.f32.mrb[0].mxu0
      %v1086 = vadd.f32 %v890, %v1085
      %v1087 = vpop.f32.mrb[0].mxu0
      %1088 = vmatprep.mubr.f32.mxu0 0.0
      %v1089 = vand.u32 %v303, 4294901760
      %v1090 = vsub.f32 %v303, %v1089
      %v1091 = vand.u32 %v1090, 4294901760
      %1092 = vmatmul.mubr.f32.gmra.mrb[0].mxu0 %v1091
      %v1093 = vpop.f32.mrb[0].mxu0
      %v1094 = vadd.f32 %v897, %v1093
      %v1095 = vpop.f32.mrb[0].mxu0
      %1096 = vdwg.mxu0
      %1097 = vmatprep.subr.mxu0 0.0
      %v1098 = vand.u32 %v236, 4294901760
      %v1099 = vsub.f32 %v236, %v1098
      %v1100 = vand.u32 %v1099, 4294901760
      %1101 = vmatpush1.msra.mxu0 %v1100
      %1102 = vmatprep.subr.mxu0 0.0
      %v1103 = vand.u32 %v237, 4294901760
      %v1104 = vsub.f32 %v237, %v1103
      %v1105 = vand.u32 %v1104, 4294901760
      %1106 = vmatpush1.msra.mxu0 %v1105
      %1107 = vmatprep.subr.mxu0 0.0
      %v1108 = vand.u32 %v238, 4294901760
      %v1109 = vsub.f32 %v238, %v1108
      %v1110 = vand.u32 %v1109, 4294901760
      %1111 = vmatpush1.msra.mxu0 %v1110
      %1112 = vmatprep.subr.mxu0 0.0
      %v1113 = vand.u32 %v239, 4294901760
      %v1114 = vsub.f32 %v239, %v1113
      %v1115 = vand.u32 %v1114, 4294901760
      %1116 = vmatpush1.msra.mxu0 %v1115
      %1117 = vmatprep.subr.mxu0 0.0
      %1118 = vmatpush1.msra.mxu0 0.0
      %1119 = vmatprep.subr.mxu0 0.0
      %1120 = vmatpush1.msra.mxu0 0.0
      %1121 = vmatprep.subr.mxu0 0.0
      %1122 = vmatpush1.msra.mxu0 0.0
      %1123 = vmatprep.subr.mxu0 0.0
      %1124 = vmatpush1.msra.mxu0 0.0
      %1125 = vmatprep.subr.mxu0 0.0
      %1126 = vmatpush1.msra.mxu0 0.0
      %1127 = vmatprep.subr.mxu0 0.0
      %1128 = vmatpush1.msra.mxu0 0.0
      %1129 = vmatprep.subr.mxu0 0.0
      %1130 = vmatpush1.msra.mxu0 0.0
      %1131 = vmatprep.subr.mxu0 0.0
      %1132 = vmatpush1.msra.mxu0 0.0
      %1133 = vmatprep.subr.mxu0 0.0
      %1134 = vmatpush1.msra.mxu0 0.0
      %1135 = vmatprep.subr.mxu0 0.0
      %1136 = vmatpush1.msra.mxu0 0.0
      %1137 = vmatprep.subr.mxu0 0.0
      %1138 = vmatpush1.msra.mxu0 0.0
      %1139 = vmatprep.subr.mxu0 0.0
      %1140 = vmatpush1.msra.mxu0 0.0
      %1141 = vmatprep.subr.mxu0 0.0
      %1142 = vmatpush1.msra.mxu0 0.0
      %1143 = vmatprep.subr.mxu0 0.0
      %1144 = vmatpush1.msra.mxu0 0.0
      %1145 = vmatprep.subr.mxu0 0.0
      %1146 = vmatpush1.msra.mxu0 0.0
      %1147 = vmatprep.subr.mxu0 0.0
      %1148 = vmatpush1.msra.mxu0 0.0
      %1149 = vmatprep.subr.mxu0 0.0
      %1150 = vmatpush1.msra.mxu0 0.0
      %1151 = vmatprep.subr.mxu0 0.0
      %1152 = vmatpush1.msra.mxu0 0.0
      %1153 = vmatprep.subr.mxu0 0.0
      %1154 = vmatpush1.msra.mxu0 0.0
      %1155 = vmatprep.subr.mxu0 0.0
      %1156 = vmatpush1.msra.mxu0 0.0
      %1157 = vmatprep.subr.mxu0 0.0
      %1158 = vmatpush1.msra.mxu0 0.0
      %1159 = vmatprep.subr.mxu0 0.0
      %1160 = vmatpush1.msra.mxu0 0.0
      %1161 = vmatprep.subr.mxu0 0.0
      %1162 = vmatpush1.msra.mxu0 0.0
      %1163 = vmatprep.subr.mxu0 0.0
      %1164 = vmatpush1.msra.mxu0 0.0
      %1165 = vmatprep.subr.mxu0 0.0
      %1166 = vmatpush1.msra.mxu0 0.0
      %1167 = vmatprep.subr.mxu0 0.0
      %1168 = vmatpush1.msra.mxu0 0.0
      %1169 = vmatprep.subr.mxu0 0.0
      %1170 = vmatpush1.msra.mxu0 0.0
      %1171 = vmatprep.subr.mxu0 0.0
      %1172 = vmatpush1.msra.mxu0 0.0
      %1173 = vmatprep.mubr.f32.mxu0 0.0
      %v1174 = vand.u32 %v258, 4294901760
      %1175 = vmatmul.mubr.f32.gmra.mrb[0].mxu0 %v1174
      %v1176 = vpop.f32.mrb[0].mxu0
      %v1177 = vadd.f32 %v974, %v1176
      %v1178 = vpop.f32.mrb[0].mxu0
      %1179 = vmatprep.mubr.f32.mxu0 0.0
      %v1180 = vand.u32 %v261, 4294901760
      %1181 = vmatmul.mubr.f32.gmra.mrb[0].mxu0 %v1180
      %v1182 = vpop.f32.mrb[0].mxu0
      %v1183 = vadd.f32 %v982, %v1182
      %v1184 = vpop.f32.mrb[0].mxu0
      %1185 = vmatprep.mubr.f32.mxu0 0.0
      %v1186 = vand.u32 %v264, 4294901760
      %1187 = vmatmul.mubr.f32.gmra.mrb[0].mxu0 %v1186
      %v1188 = vpop.f32.mrb[0].mxu0
      %v1189 = vadd.f32 %v990, %v1188
      %v1190 = vpop.f32.mrb[0].mxu0
      %1191 = vmatprep.mubr.f32.mxu0 0.0
      %v1192 = vand.u32 %v267, 4294901760
      %1193 = vmatmul.mubr.f32.gmra.mrb[0].mxu0 %v1192
      %v1194 = vpop.f32.mrb[0].mxu0
      %v1195 = vadd.f32 %v998, %v1194
      %v1196 = vpop.f32.mrb[0].mxu0
      %1197 = vmatprep.mubr.f32.mxu0 0.0
      %v1198 = vand.u32 %v270, 4294901760
      %1199 = vmatmul.mubr.f32.gmra.mrb[0].mxu0 %v1198
      %v1200 = vpop.f32.mrb[0].mxu0
      %v1201 = vadd.f32 %v1006, %v1200
      %v1202 = vpop.f32.mrb[0].mxu0
      %1203 = vmatprep.mubr.f32.mxu0 0.0
      %v1204 = vand.u32 %v273, 4294901760
      %1205 = vmatmul.mubr.f32.gmra.mrb[0].mxu0 %v1204
      %v1206 = vpop.f32.mrb[0].mxu0
      %v1207 = vadd.f32 %v1014, %v1206
      %v1208 = vpop.f32.mrb[0].mxu0
      %1209 = vmatprep.mubr.f32.mxu0 0.0
      %v1210 = vand.u32 %v276, 4294901760
      %1211 = vmatmul.mubr.f32.gmra.mrb[0].mxu0 %v1210
      %v1212 = vpop.f32.mrb[0].mxu0
      %v1213 = vadd.f32 %v1022, %v1212
      %v1214 = vpop.f32.mrb[0].mxu0
      %1215 = vmatprep.mubr.f32.mxu0 0.0
      %v1216 = vand.u32 %v279, 4294901760
      %1217 = vmatmul.mubr.f32.gmra.mrb[0].mxu0 %v1216
      %v1218 = vpop.f32.mrb[0].mxu0
      %v1219 = vadd.f32 %v1030, %v1218
      %v1220 = vpop.f32.mrb[0].mxu0
      %1221 = vmatprep.mubr.f32.mxu0 0.0
      %v1222 = vand.u32 %v282, 4294901760
      %1223 = vmatmul.mubr.f32.gmra.mrb[0].mxu0 %v1222
      %v1224 = vpop.f32.mrb[0].mxu0
      %v1225 = vadd.f32 %v1038, %v1224
      %v1226 = vpop.f32.mrb[0].mxu0
      %1227 = vmatprep.mubr.f32.mxu0 0.0
      %v1228 = vand.u32 %v285, 4294901760
      %1229 = vmatmul.mubr.f32.gmra.mrb[0].mxu0 %v1228
      %v1230 = vpop.f32.mrb[0].mxu0
      %v1231 = vadd.f32 %v1046, %v1230
      %v1232 = vpop.f32.mrb[0].mxu0
      %1233 = vmatprep.mubr.f32.mxu0 0.0
      %v1234 = vand.u32 %v288, 4294901760
      %1235 = vmatmul.mubr.f32.gmra.mrb[0].mxu0 %v1234
      %v1236 = vpop.f32.mrb[0].mxu0
      %v1237 = vadd.f32 %v1054, %v1236
      %v1238 = vpop.f32.mrb[0].mxu0
      %1239 = vmatprep.mubr.f32.mxu0 0.0
      %v1240 = vand.u32 %v291, 4294901760
      %1241 = vmatmul.mubr.f32.gmra.mrb[0].mxu0 %v1240
      %v1242 = vpop.f32.mrb[0].mxu0
      %v1243 = vadd.f32 %v1062, %v1242
      %v1244 = vpop.f32.mrb[0].mxu0
      %1245 = vmatprep.mubr.f32.mxu0 0.0
      %v1246 = vand.u32 %v294, 4294901760
      %1247 = vmatmul.mubr.f32.gmra.mrb[0].mxu0 %v1246
      %v1248 = vpop.f32.mrb[0].mxu0
      %v1249 = vadd.f32 %v1070, %v1248
      %v1250 = vpop.f32.mrb[0].mxu0
      %1251 = vmatprep.mubr.f32.mxu0 0.0
      %v1252 = vand.u32 %v297, 4294901760
      %1253 = vmatmul.mubr.f32.gmra.mrb[0].mxu0 %v1252
      %v1254 = vpop.f32.mrb[0].mxu0
      %v1255 = vadd.f32 %v1078, %v1254
      %v1256 = vpop.f32.mrb[0].mxu0
      %1257 = vmatprep.mubr.f32.mxu0 0.0
      %v1258 = vand.u32 %v300, 4294901760
      %1259 = vmatmul.mubr.f32.gmra.mrb[0].mxu0 %v1258
      %v1260 = vpop.f32.mrb[0].mxu0
      %v1261 = vadd.f32 %v1086, %v1260
      %v1262 = vpop.f32.mrb[0].mxu0
      %1263 = vmatprep.mubr.f32.mxu0 0.0
      %v1264 = vand.u32 %v303, 4294901760
      %1265 = vmatmul.mubr.f32.gmra.mrb[0].mxu0 %v1264
      %v1266 = vpop.f32.mrb[0].mxu0
      %v1267 = vadd.f32 %v1094, %v1266
      %v1268 = vpop.f32.mrb[0].mxu0
      %1269 = vdwg.mxu0
      %1270 = vmatprep.subr.mxu0 0.0
      %v1271 = vand.u32 %v236, 4294901760
      %1272 = vmatpush1.msra.mxu0 %v1271
      %1273 = vmatprep.subr.mxu0 0.0
      %v1274 = vand.u32 %v237, 4294901760
      %1275 = vmatpush1.msra.mxu0 %v1274
      %1276 = vmatprep.subr.mxu0 0.0
      %v1277 = vand.u32 %v238, 4294901760
      %1278 = vmatpush1.msra.mxu0 %v1277
      %1279 = vmatprep.subr.mxu0 0.0
      %v1280 = vand.u32 %v239, 4294901760
      %1281 = vmatpush1.msra.mxu0 %v1280
      %1282 = vmatprep.subr.mxu0 0.0
      %1283 = vmatpush1.msra.mxu0 0.0
      %1284 = vmatprep.subr.mxu0 0.0
      %1285 = vmatpush1.msra.mxu0 0.0
      %1286 = vmatprep.subr.mxu0 0.0
      %1287 = vmatpush1.msra.mxu0 0.0
      %1288 = vmatprep.subr.mxu0 0.0
      %1289 = vmatpush1.msra.mxu0 0.0
      %1290 = vmatprep.subr.mxu0 0.0
      %1291 = vmatpush1.msra.mxu0 0.0
      %1292 = vmatprep.subr.mxu0 0.0
      %1293 = vmatpush1.msra.mxu0 0.0
      %1294 = vmatprep.subr.mxu0 0.0
      %1295 = vmatpush1.msra.mxu0 0.0
      %1296 = vmatprep.subr.mxu0 0.0
      %1297 = vmatpush1.msra.mxu0 0.0
      %1298 = vmatprep.subr.mxu0 0.0
      %1299 = vmatpush1.msra.mxu0 0.0
      %1300 = vmatprep.subr.mxu0 0.0
      %1301 = vmatpush1.msra.mxu0 0.0
      %1302 = vmatprep.subr.mxu0 0.0
      %1303 = vmatpush1.msra.mxu0 0.0
      %1304 = vmatprep.subr.mxu0 0.0
      %1305 = vmatpush1.msra.mxu0 0.0
      %1306 = vmatprep.subr.mxu0 0.0
      %1307 = vmatpush1.msra.mxu0 0.0
      %1308 = vmatprep.subr.mxu0 0.0
      %1309 = vmatpush1.msra.mxu0 0.0
      %1310 = vmatprep.subr.mxu0 0.0
      %1311 = vmatpush1.msra.mxu0 0.0
      %1312 = vmatprep.subr.mxu0 0.0
      %1313 = vmatpush1.msra.mxu0 0.0
      %1314 = vmatprep.subr.mxu0 0.0
      %1315 = vmatpush1.msra.mxu0 0.0
      %1316 = vmatprep.subr.mxu0 0.0
      %1317 = vmatpush1.msra.mxu0 0.0
      %1318 = vmatprep.subr.mxu0 0.0
      %1319 = vmatpush1.msra.mxu0 0.0
      %1320 = vmatprep.subr.mxu0 0.0
      %1321 = vmatpush1.msra.mxu0 0.0
      %1322 = vmatprep.subr.mxu0 0.0
      %1323 = vmatpush1.msra.mxu0 0.0
      %1324 = vmatprep.subr.mxu0 0.0
      %1325 = vmatpush1.msra.mxu0 0.0
      %1326 = vmatprep.subr.mxu0 0.0
      %1327 = vmatpush1.msra.mxu0 0.0
      %1328 = vmatprep.subr.mxu0 0.0
      %1329 = vmatpush1.msra.mxu0 0.0
      %1330 = vmatprep.subr.mxu0 0.0
      %1331 = vmatpush1.msra.mxu0 0.0
      %1332 = vmatprep.subr.mxu0 0.0
      %1333 = vmatpush1.msra.mxu0 0.0
      %1334 = vmatprep.subr.mxu0 0.0
      %1335 = vmatpush1.msra.mxu0 0.0
      %1336 = vmatprep.subr.mxu0 0.0
      %1337 = vmatpush1.msra.mxu0 0.0
      %1338 = vmatprep.mubr.f32.mxu0 0.0
      %v1339 = vand.u32 %v258, 4294901760
      %1340 = vmatmul.mubr.f32.gmra.mrb[0].mxu0 %v1339
      %v1341 = vpop.f32.mrb[0].mxu0
      %v1342 = vadd.f32 %v1177, %v1341
      %v1343 = vpop.f32.mrb[0].mxu0
      %1344 = vmatprep.mubr.f32.mxu0 0.0
      %v1345 = vand.u32 %v261, 4294901760
      %1346 = vmatmul.mubr.f32.gmra.mrb[0].mxu0 %v1345
      %v1347 = vpop.f32.mrb[0].mxu0
      %v1348 = vadd.f32 %v1183, %v1347
      %v1349 = vpop.f32.mrb[0].mxu0
      %1350 = vmatprep.mubr.f32.mxu0 0.0
      %v1351 = vand.u32 %v264, 4294901760
      %1352 = vmatmul.mubr.f32.gmra.mrb[0].mxu0 %v1351
      %v1353 = vpop.f32.mrb[0].mxu0
      %v1354 = vadd.f32 %v1189, %v1353
      %v1355 = vpop.f32.mrb[0].mxu0
      %1356 = vmatprep.mubr.f32.mxu0 0.0
      %v1357 = vand.u32 %v267, 4294901760
      %1358 = vmatmul.mubr.f32.gmra.mrb[0].mxu0 %v1357
      %v1359 = vpop.f32.mrb[0].mxu0
      %v1360 = vadd.f32 %v1195, %v1359
      %v1361 = vpop.f32.mrb[0].mxu0
      %1362 = vmatprep.mubr.f32.mxu0 0.0
      %v1363 = vand.u32 %v270, 4294901760
      %1364 = vmatmul.mubr.f32.gmra.mrb[0].mxu0 %v1363
      %v1365 = vpop.f32.mrb[0].mxu0
      %v1366 = vadd.f32 %v1201, %v1365
      %v1367 = vpop.f32.mrb[0].mxu0
      %1368 = vmatprep.mubr.f32.mxu0 0.0
      %v1369 = vand.u32 %v273, 4294901760
      %1370 = vmatmul.mubr.f32.gmra.mrb[0].mxu0 %v1369
      %v1371 = vpop.f32.mrb[0].mxu0
      %v1372 = vadd.f32 %v1207, %v1371
      %v1373 = vpop.f32.mrb[0].mxu0
      %1374 = vmatprep.mubr.f32.mxu0 0.0
      %v1375 = vand.u32 %v276, 4294901760
      %1376 = vmatmul.mubr.f32.gmra.mrb[0].mxu0 %v1375
      %v1377 = vpop.f32.mrb[0].mxu0
      %v1378 = vadd.f32 %v1213, %v1377
      %v1379 = vpop.f32.mrb[0].mxu0
      %1380 = vmatprep.mubr.f32.mxu0 0.0
      %v1381 = vand.u32 %v279, 4294901760
      %1382 = vmatmul.mubr.f32.gmra.mrb[0].mxu0 %v1381
      %v1383 = vpop.f32.mrb[0].mxu0
      %v1384 = vadd.f32 %v1219, %v1383
      %v1385 = vpop.f32.mrb[0].mxu0
      %1386 = vmatprep.mubr.f32.mxu0 0.0
      %v1387 = vand.u32 %v282, 4294901760
      %1388 = vmatmul.mubr.f32.gmra.mrb[0].mxu0 %v1387
      %v1389 = vpop.f32.mrb[0].mxu0
      %v1390 = vadd.f32 %v1225, %v1389
      %v1391 = vpop.f32.mrb[0].mxu0
      %1392 = vmatprep.mubr.f32.mxu0 0.0
      %v1393 = vand.u32 %v285, 4294901760
      %1394 = vmatmul.mubr.f32.gmra.mrb[0].mxu0 %v1393
      %v1395 = vpop.f32.mrb[0].mxu0
      %v1396 = vadd.f32 %v1231, %v1395
      %v1397 = vpop.f32.mrb[0].mxu0
      %1398 = vmatprep.mubr.f32.mxu0 0.0
      %v1399 = vand.u32 %v288, 4294901760
      %1400 = vmatmul.mubr.f32.gmra.mrb[0].mxu0 %v1399
      %v1401 = vpop.f32.mrb[0].mxu0
      %v1402 = vadd.f32 %v1237, %v1401
      %v1403 = vpop.f32.mrb[0].mxu0
      %1404 = vmatprep.mubr.f32.mxu0 0.0
      %v1405 = vand.u32 %v291, 4294901760
      %1406 = vmatmul.mubr.f32.gmra.mrb[0].mxu0 %v1405
      %v1407 = vpop.f32.mrb[0].mxu0
      %v1408 = vadd.f32 %v1243, %v1407
      %v1409 = vpop.f32.mrb[0].mxu0
      %1410 = vmatprep.mubr.f32.mxu0 0.0
      %v1411 = vand.u32 %v294, 4294901760
      %1412 = vmatmul.mubr.f32.gmra.mrb[0].mxu0 %v1411
      %v1413 = vpop.f32.mrb[0].mxu0
      %v1414 = vadd.f32 %v1249, %v1413
      %v1415 = vpop.f32.mrb[0].mxu0
      %1416 = vmatprep.mubr.f32.mxu0 0.0
      %v1417 = vand.u32 %v297, 4294901760
      %1418 = vmatmul.mubr.f32.gmra.mrb[0].mxu0 %v1417
      %v1419 = vpop.f32.mrb[0].mxu0
      %v1420 = vadd.f32 %v1255, %v1419
      %v1421 = vpop.f32.mrb[0].mxu0
      %1422 = vmatprep.mubr.f32.mxu0 0.0
      %v1423 = vand.u32 %v300, 4294901760
      %1424 = vmatmul.mubr.f32.gmra.mrb[0].mxu0 %v1423
      %v1425 = vpop.f32.mrb[0].mxu0
      %v1426 = vadd.f32 %v1261, %v1425
      %v1427 = vpop.f32.mrb[0].mxu0
      %1428 = vmatprep.mubr.f32.mxu0 0.0
      %v1429 = vand.u32 %v303, 4294901760
      %1430 = vmatmul.mubr.f32.gmra.mrb[0].mxu0 %v1429
      %v1431 = vpop.f32.mrb[0].mxu0
      %v1432 = vadd.f32 %v1267, %v1431
      %v1433 = vpop.f32.mrb[0].mxu0
      %1434 = vdwg.mxu0
      %v1435 = vmax.f32 %v1342, 0.0
      %v1436 = vmax.f32 %v1348, 0.0
      %v1437 = vmax.f32 %v1354, 0.0
      %v1438 = vmax.f32 %v1360, 0.0
      %v1439 = vmax.f32 %v1366, 0.0
      %v1440 = vmax.f32 %v1372, 0.0
      %v1441 = vmax.f32 %v1378, 0.0
      %v1442 = vmax.f32 %v1384, 0.0
      %v1443 = vmax.f32 %v1390, 0.0
      %v1444 = vmax.f32 %v1396, 0.0
      %v1445 = vmax.f32 %v1402, 0.0
      %v1446 = vmax.f32 %v1408, 0.0
      %v1447 = vmax.f32 %v1414, 0.0
      %v1448 = vmax.f32 %v1420, 0.0
      %v1449 = vmax.f32 %v1426, 0.0
      %v1450 = vmax.f32 %v1432, 0.0
      %v1451 = vld [vmem:[%s2] sm:$0xff]
      %v1452 = vld [vmem:[%s2 + $0x8] sm:$0xff]
      %v1453 = vld [vmem:[%s2 + $0x10] sm:$0xff]
      %v1454 = vld [vmem:[%s2 + $0x18] sm:$0xff]
      %1455 = vmatprep.subr.mxu0 0.0
      %v1456 = vand.u32 %v1435, 4294901760
      %1457 = vmatpush1.msra.mxu0 %v1456
      %1458 = vmatprep.subr.mxu0 0.0
      %v1459 = vand.u32 %v1436, 4294901760
      %1460 = vmatpush1.msra.mxu0 %v1459
      %1461 = vmatprep.subr.mxu0 0.0
      %v1462 = vand.u32 %v1437, 4294901760
      %1463 = vmatpush1.msra.mxu0 %v1462
      %1464 = vmatprep.subr.mxu0 0.0
      %v1465 = vand.u32 %v1438, 4294901760
      %1466 = vmatpush1.msra.mxu0 %v1465
      %1467 = vmatprep.subr.mxu0 0.0
      %v1468 = vand.u32 %v1439, 4294901760
      %1469 = vmatpush1.msra.mxu0 %v1468
      %1470 = vmatprep.subr.mxu0 0.0
      %v1471 = vand.u32 %v1440, 4294901760
      %1472 = vmatpush1.msra.mxu0 %v1471
      %1473 = vmatprep.subr.mxu0 0.0
      %v1474 = vand.u32 %v1441, 4294901760
      %1475 = vmatpush1.msra.mxu0 %v1474
      %1476 = vmatprep.subr.mxu0 0.0
      %v1477 = vand.u32 %v1442, 4294901760
      %1478 = vmatpush1.msra.mxu0 %v1477
      %1479 = vmatprep.subr.mxu0 0.0
      %v1480 = vand.u32 %v1443, 4294901760
      %1481 = vmatpush1.msra.mxu0 %v1480
      %1482 = vmatprep.subr.mxu0 0.0
      %v1483 = vand.u32 %v1444, 4294901760
      %1484 = vmatpush1.msra.mxu0 %v1483
      %1485 = vmatprep.subr.mxu0 0.0
      %v1486 = vand.u32 %v1445, 4294901760
      %1487 = vmatpush1.msra.mxu0 %v1486
      %1488 = vmatprep.subr.mxu0 0.0
      %v1489 = vand.u32 %v1446, 4294901760
      %1490 = vmatpush1.msra.mxu0 %v1489
      %1491 = vmatprep.subr.mxu0 0.0
      %v1492 = vand.u32 %v1447, 4294901760
      %1493 = vmatpush1.msra.mxu0 %v1492
      %1494 = vmatprep.subr.mxu0 0.0
      %v1495 = vand.u32 %v1448, 4294901760
      %1496 = vmatpush1.msra.mxu0 %v1495
      %1497 = vmatprep.subr.mxu0 0.0
      %v1498 = vand.u32 %v1449, 4294901760
      %1499 = vmatpush1.msra.mxu0 %v1498
      %1500 = vmatprep.subr.mxu0 0.0
      %v1501 = vand.u32 %v1450, 4294901760
      %1502 = vmatpush1.msra.mxu0 %v1501
      %1503 = vmatprep.subr.mxu0 0.0
      %1504 = vmatpush1.msra.mxu0 0.0
      %1505 = vmatprep.subr.mxu0 0.0
      %1506 = vmatpush1.msra.mxu0 0.0
      %1507 = vmatprep.subr.mxu0 0.0
      %1508 = vmatpush1.msra.mxu0 0.0
      %1509 = vmatprep.subr.mxu0 0.0
      %1510 = vmatpush1.msra.mxu0 0.0
      %1511 = vmatprep.subr.mxu0 0.0
      %1512 = vmatpush1.msra.mxu0 0.0
      %1513 = vmatprep.subr.mxu0 0.0
      %1514 = vmatpush1.msra.mxu0 0.0
      %1515 = vmatprep.subr.mxu0 0.0
      %1516 = vmatpush1.msra.mxu0 0.0
      %1517 = vmatprep.subr.mxu0 0.0
      %1518 = vmatpush1.msra.mxu0 0.0
      %1519 = vmatprep.subr.mxu0 0.0
      %1520 = vmatpush1.msra.mxu0 0.0
      %1521 = vmatprep.subr.mxu0 0.0
      %1522 = vmatpush1.msra.mxu0 0.0
      %1523 = vmatprep.subr.mxu0 0.0
      %1524 = vmatpush1.msra.mxu0 0.0
      %1525 = vmatprep.subr.mxu0 0.0
      %1526 = vmatpush1.msra.mxu0 0.0
      %1527 = vmatprep.subr.mxu0 0.0
      %1528 = vmatpush1.msra.mxu0 0.0
      %1529 = vmatprep.subr.mxu0 0.0
      %1530 = vmatpush1.msra.mxu0 0.0
      %1531 = vmatprep.subr.mxu0 0.0
      %1532 = vmatpush1.msra.mxu0 0.0
      %1533 = vmatprep.subr.mxu0 0.0
      %1534 = vmatpush1.msra.mxu0 0.0
      %1535 = vmatprep.mubr.f32.mxu0 0.0
      %v1536 = vand.u32 %v1451, 4294901760
      %v1537 = vsub.f32 %v1451, %v1536
      %v1538 = vand.u32 %v1537, 4294901760
      %v1539 = vsub.f32 %v1537, %v1538
      %v1540 = vand.u32 %v1539, 4294901760
      %1541 = vmatmul.mubr.f32.gmra.mrb[0].mxu0 %v1540
      %v1542 = vpop.f32.mrb[0].mxu0
      %v1543 = vadd.f32 0.0, %v1542
      %v1544 = vpop.f32.mrb[0].mxu0
      %1545 = vmatprep.mubr.f32.mxu0 0.0
      %v1546 = vand.u32 %v1452, 4294901760
      %v1547 = vsub.f32 %v1452, %v1546
      %v1548 = vand.u32 %v1547, 4294901760
      %v1549 = vsub.f32 %v1547, %v1548
      %v1550 = vand.u32 %v1549, 4294901760
      %1551 = vmatmul.mubr.f32.gmra.mrb[0].mxu0 %v1550
      %v1552 = vpop.f32.mrb[0].mxu0
      %v1553 = vadd.f32 0.0, %v1552
      %v1554 = vpop.f32.mrb[0].mxu0
      %1555 = vmatprep.mubr.f32.mxu0 0.0
      %v1556 = vand.u32 %v1453, 4294901760
      %v1557 = vsub.f32 %v1453, %v1556
      %v1558 = vand.u32 %v1557, 4294901760
      %v1559 = vsub.f32 %v1557, %v1558
      %v1560 = vand.u32 %v1559, 4294901760
      %1561 = vmatmul.mubr.f32.gmra.mrb[0].mxu0 %v1560
      %v1562 = vpop.f32.mrb[0].mxu0
      %v1563 = vadd.f32 0.0, %v1562
      %v1564 = vpop.f32.mrb[0].mxu0
      %1565 = vmatprep.mubr.f32.mxu0 0.0
      %v1566 = vand.u32 %v1454, 4294901760
      %v1567 = vsub.f32 %v1454, %v1566
      %v1568 = vand.u32 %v1567, 4294901760
      %v1569 = vsub.f32 %v1567, %v1568
      %v1570 = vand.u32 %v1569, 4294901760
      %1571 = vmatmul.mubr.f32.gmra.mrb[0].mxu0 %v1570
      %v1572 = vpop.f32.mrb[0].mxu0
      %v1573 = vadd.f32 0.0, %v1572
      %v1574 = vpop.f32.mrb[0].mxu0
      %1575 = vdwg.mxu0
      %1576 = vmatprep.subr.mxu0 0.0
      %v1577 = vand.u32 %v1435, 4294901760
      %v1578 = vsub.f32 %v1435, %v1577
      %v1579 = vand.u32 %v1578, 4294901760
      %v1580 = vsub.f32 %v1578, %v1579
      %v1581 = vand.u32 %v1580, 4294901760
      %1582 = vmatpush1.msra.mxu0 %v1581
      %1583 = vmatprep.subr.mxu0 0.0
      %v1584 = vand.u32 %v1436, 4294901760
      %v1585 = vsub.f32 %v1436, %v1584
      %v1586 = vand.u32 %v1585, 4294901760
      %v1587 = vsub.f32 %v1585, %v1586
      %v1588 = vand.u32 %v1587, 4294901760
      %1589 = vmatpush1.msra.mxu0 %v1588
      %1590 = vmatprep.subr.mxu0 0.0
      %v1591 = vand.u32 %v1437, 4294901760
      %v1592 = vsub.f32 %v1437, %v1591
      %v1593 = vand.u32 %v1592, 4294901760
      %v1594 = vsub.f32 %v1592, %v1593
      %v1595 = vand.u32 %v1594, 4294901760
      %1596 = vmatpush1.msra.mxu0 %v1595
      %1597 = vmatprep.subr.mxu0 0.0
      %v1598 = vand.u32 %v1438, 4294901760
      %v1599 = vsub.f32 %v1438, %v1598
      %v1600 = vand.u32 %v1599, 4294901760
      %v1601 = vsub.f32 %v1599, %v1600
      %v1602 = vand.u32 %v1601, 4294901760
      %1603 = vmatpush1.msra.mxu0 %v1602
      %1604 = vmatprep.subr.mxu0 0.0
      %v1605 = vand.u32 %v1439, 4294901760
      %v1606 = vsub.f32 %v1439, %v1605
      %v1607 = vand.u32 %v1606, 4294901760
      %v1608 = vsub.f32 %v1606, %v1607
      %v1609 = vand.u32 %v1608, 4294901760
      %1610 = vmatpush1.msra.mxu0 %v1609
      %1611 = vmatprep.subr.mxu0 0.0
      %v1612 = vand.u32 %v1440, 4294901760
      %v1613 = vsub.f32 %v1440, %v1612
      %v1614 = vand.u32 %v1613, 4294901760
      %v1615 = vsub.f32 %v1613, %v1614
      %v1616 = vand.u32 %v1615, 4294901760
      %1617 = vmatpush1.msra.mxu0 %v1616
      %1618 = vmatprep.subr.mxu0 0.0
      %v1619 = vand.u32 %v1441, 4294901760
      %v1620 = vsub.f32 %v1441, %v1619
      %v1621 = vand.u32 %v1620, 4294901760
      %v1622 = vsub.f32 %v1620, %v1621
      %v1623 = vand.u32 %v1622, 4294901760
      %1624 = vmatpush1.msra.mxu0 %v1623
      %1625 = vmatprep.subr.mxu0 0.0
      %v1626 = vand.u32 %v1442, 4294901760
      %v1627 = vsub.f32 %v1442, %v1626
      %v1628 = vand.u32 %v1627, 4294901760
      %v1629 = vsub.f32 %v1627, %v1628
      %v1630 = vand.u32 %v1629, 4294901760
      %1631 = vmatpush1.msra.mxu0 %v1630
      %1632 = vmatprep.subr.mxu0 0.0
      %v1633 = vand.u32 %v1443, 4294901760
      %v1634 = vsub.f32 %v1443, %v1633
      %v1635 = vand.u32 %v1634, 4294901760
      %v1636 = vsub.f32 %v1634, %v1635
      %v1637 = vand.u32 %v1636, 4294901760
      %1638 = vmatpush1.msra.mxu0 %v1637
      %1639 = vmatprep.subr.mxu0 0.0
      %v1640 = vand.u32 %v1444, 4294901760
      %v1641 = vsub.f32 %v1444, %v1640
      %v1642 = vand.u32 %v1641, 4294901760
      %v1643 = vsub.f32 %v1641, %v1642
      %v1644 = vand.u32 %v1643, 4294901760
      %1645 = vmatpush1.msra.mxu0 %v1644
      %1646 = vmatprep.subr.mxu0 0.0
      %v1647 = vand.u32 %v1445, 4294901760
      %v1648 = vsub.f32 %v1445, %v1647
      %v1649 = vand.u32 %v1648, 4294901760
      %v1650 = vsub.f32 %v1648, %v1649
      %v1651 = vand.u32 %v1650, 4294901760
      %1652 = vmatpush1.msra.mxu0 %v1651
      %1653 = vmatprep.subr.mxu0 0.0
      %v1654 = vand.u32 %v1446, 4294901760
      %v1655 = vsub.f32 %v1446, %v1654
      %v1656 = vand.u32 %v1655, 4294901760
      %v1657 = vsub.f32 %v1655, %v1656
      %v1658 = vand.u32 %v1657, 4294901760
      %1659 = vmatpush1.msra.mxu0 %v1658
      %1660 = vmatprep.subr.mxu0 0.0
      %v1661 = vand.u32 %v1447, 4294901760
      %v1662 = vsub.f32 %v1447, %v1661
      %v1663 = vand.u32 %v1662, 4294901760
      %v1664 = vsub.f32 %v1662, %v1663
      %v1665 = vand.u32 %v1664, 4294901760
      %1666 = vmatpush1.msra.mxu0 %v1665
      %1667 = vmatprep.subr.mxu0 0.0
      %v1668 = vand.u32 %v1448, 4294901760
      %v1669 = vsub.f32 %v1448, %v1668
      %v1670 = vand.u32 %v1669, 4294901760
      %v1671 = vsub.f32 %v1669, %v1670
      %v1672 = vand.u32 %v1671, 4294901760
      %1673 = vmatpush1.msra.mxu0 %v1672
      %1674 = vmatprep.subr.mxu0 0.0
      %v1675 = vand.u32 %v1449, 4294901760
      %v1676 = vsub.f32 %v1449, %v1675
      %v1677 = vand.u32 %v1676, 4294901760
      %v1678 = vsub.f32 %v1676, %v1677
      %v1679 = vand.u32 %v1678, 4294901760
      %1680 = vmatpush1.msra.mxu0 %v1679
      %1681 = vmatprep.subr.mxu0 0.0
      %v1682 = vand.u32 %v1450, 4294901760
      %v1683 = vsub.f32 %v1450, %v1682
      %v1684 = vand.u32 %v1683, 4294901760
      %v1685 = vsub.f32 %v1683, %v1684
      %v1686 = vand.u32 %v1685, 4294901760
      %1687 = vmatpush1.msra.mxu0 %v1686
      %1688 = vmatprep.subr.mxu0 0.0
      %1689 = vmatpush1.msra.mxu0 0.0
      %1690 = vmatprep.subr.mxu0 0.0
      %1691 = vmatpush1.msra.mxu0 0.0
      %1692 = vmatprep.subr.mxu0 0.0
      %1693 = vmatpush1.msra.mxu0 0.0
      %1694 = vmatprep.subr.mxu0 0.0
      %1695 = vmatpush1.msra.mxu0 0.0
      %1696 = vmatprep.subr.mxu0 0.0
      %1697 = vmatpush1.msra.mxu0 0.0
      %1698 = vmatprep.subr.mxu0 0.0
      %1699 = vmatpush1.msra.mxu0 0.0
      %1700 = vmatprep.subr.mxu0 0.0
      %1701 = vmatpush1.msra.mxu0 0.0
      %1702 = vmatprep.subr.mxu0 0.0
      %1703 = vmatpush1.msra.mxu0 0.0
      %1704 = vmatprep.subr.mxu0 0.0
      %1705 = vmatpush1.msra.mxu0 0.0
      %1706 = vmatprep.subr.mxu0 0.0
      %1707 = vmatpush1.msra.mxu0 0.0
      %1708 = vmatprep.subr.mxu0 0.0
      %1709 = vmatpush1.msra.mxu0 0.0
      %1710 = vmatprep.subr.mxu0 0.0
      %1711 = vmatpush1.msra.mxu0 0.0
      %1712 = vmatprep.subr.mxu0 0.0
      %1713 = vmatpush1.msra.mxu0 0.0
      %1714 = vmatprep.subr.mxu0 0.0
      %1715 = vmatpush1.msra.mxu0 0.0
      %1716 = vmatprep.subr.mxu0 0.0
      %1717 = vmatpush1.msra.mxu0 0.0
      %1718 = vmatprep.subr.mxu0 0.0
      %1719 = vmatpush1.msra.mxu0 0.0
      %1720 = vmatprep.mubr.f32.mxu0 0.0
      %v1721 = vand.u32 %v1451, 4294901760
      %1722 = vmatmul.mubr.f32.gmra.mrb[0].mxu0 %v1721
      %v1723 = vpop.f32.mrb[0].mxu0
      %v1724 = vadd.f32 %v1543, %v1723
      %v1725 = vpop.f32.mrb[0].mxu0
      %1726 = vmatprep.mubr.f32.mxu0 0.0
      %v1727 = vand.u32 %v1452, 4294901760
      %1728 = vmatmul.mubr.f32.gmra.mrb[0].mxu0 %v1727
      %v1729 = vpop.f32.mrb[0].mxu0
      %v1730 = vadd.f32 %v1553, %v1729
      %v1731 = vpop.f32.mrb[0].mxu0
      %1732 = vmatprep.mubr.f32.mxu0 0.0
      %v1733 = vand.u32 %v1453, 4294901760
      %1734 = vmatmul.mubr.f32.gmra.mrb[0].mxu0 %v1733
      %v1735 = vpop.f32.mrb[0].mxu0
      %v1736 = vadd.f32 %v1563, %v1735
      %v1737 = vpop.f32.mrb[0].mxu0
      %1738 = vmatprep.mubr.f32.mxu0 0.0
      %v1739 = vand.u32 %v1454, 4294901760
      %1740 = vmatmul.mubr.f32.gmra.mrb[0].mxu0 %v1739
      %v1741 = vpop.f32.mrb[0].mxu0
      %v1742 = vadd.f32 %v1573, %v1741
      %v1743 = vpop.f32.mrb[0].mxu0
      %1744 = vdwg.mxu0
      %1745 = vmatprep.subr.mxu0 0.0
      %v1746 = vand.u32 %v1435, 4294901760
      %v1747 = vsub.f32 %v1435, %v1746
      %1748 = vmatpush1.msra.mxu0 %v1747
      %1749 = vmatprep.subr.mxu0 0.0
      %v1750 = vand.u32 %v1436, 4294901760
      %v1751 = vsub.f32 %v1436, %v1750
      %1752 = vmatpush1.msra.mxu0 %v1751
      %1753 = vmatprep.subr.mxu0 0.0
      %v1754 = vand.u32 %v1437, 4294901760
      %v1755 = vsub.f32 %v1437, %v1754
      %1756 = vmatpush1.msra.mxu0 %v1755
      %1757 = vmatprep.subr.mxu0 0.0
      %v1758 = vand.u32 %v1438, 4294901760
      %v1759 = vsub.f32 %v1438, %v1758
      %1760 = vmatpush1.msra.mxu0 %v1759
      %1761 = vmatprep.subr.mxu0 0.0
      %v1762 = vand.u32 %v1439, 4294901760
      %v1763 = vsub.f32 %v1439, %v1762
      %1764 = vmatpush1.msra.mxu0 %v1763
      %1765 = vmatprep.subr.mxu0 0.0
      %v1766 = vand.u32 %v1440, 4294901760
      %v1767 = vsub.f32 %v1440, %v1766
      %1768 = vmatpush1.msra.mxu0 %v1767
      %1769 = vmatprep.subr.mxu0 0.0
      %v1770 = vand.u32 %v1441, 4294901760
      %v1771 = vsub.f32 %v1441, %v1770
      %1772 = vmatpush1.msra.mxu0 %v1771
      %1773 = vmatprep.subr.mxu0 0.0
      %v1774 = vand.u32 %v1442, 4294901760
      %v1775 = vsub.f32 %v1442, %v1774
      %1776 = vmatpush1.msra.mxu0 %v1775
      %1777 = vmatprep.subr.mxu0 0.0
      %v1778 = vand.u32 %v1443, 4294901760
      %v1779 = vsub.f32 %v1443, %v1778
      %1780 = vmatpush1.msra.mxu0 %v1779
      %1781 = vmatprep.subr.mxu0 0.0
      %v1782 = vand.u32 %v1444, 4294901760
      %v1783 = vsub.f32 %v1444, %v1782
      %1784 = vmatpush1.msra.mxu0 %v1783
      %1785 = vmatprep.subr.mxu0 0.0
      %v1786 = vand.u32 %v1445, 4294901760
      %v1787 = vsub.f32 %v1445, %v1786
      %1788 = vmatpush1.msra.mxu0 %v1787
      %1789 = vmatprep.subr.mxu0 0.0
      %v1790 = vand.u32 %v1446, 4294901760
      %v1791 = vsub.f32 %v1446, %v1790
      %1792 = vmatpush1.msra.mxu0 %v1791
      %1793 = vmatprep.subr.mxu0 0.0
      %v1794 = vand.u32 %v1447, 4294901760
      %v1795 = vsub.f32 %v1447, %v1794
      %1796 = vmatpush1.msra.mxu0 %v1795
      %1797 = vmatprep.subr.mxu0 0.0
      %v1798 = vand.u32 %v1448, 4294901760
      %v1799 = vsub.f32 %v1448, %v1798
      %1800 = vmatpush1.msra.mxu0 %v1799
      %1801 = vmatprep.subr.mxu0 0.0
      %v1802 = vand.u32 %v1449, 4294901760
      %v1803 = vsub.f32 %v1449, %v1802
      %1804 = vmatpush1.msra.mxu0 %v1803
      %1805 = vmatprep.subr.mxu0 0.0
      %v1806 = vand.u32 %v1450, 4294901760
      %v1807 = vsub.f32 %v1450, %v1806
      %1808 = vmatpush1.msra.mxu0 %v1807
      %1809 = vmatprep.subr.mxu0 0.0
      %1810 = vmatpush1.msra.mxu0 0.0
      %1811 = vmatprep.subr.mxu0 0.0
      %1812 = vmatpush1.msra.mxu0 0.0
      %1813 = vmatprep.subr.mxu0 0.0
      %1814 = vmatpush1.msra.mxu0 0.0
      %1815 = vmatprep.subr.mxu0 0.0
      %1816 = vmatpush1.msra.mxu0 0.0
      %1817 = vmatprep.subr.mxu0 0.0
      %1818 = vmatpush1.msra.mxu0 0.0
      %1819 = vmatprep.subr.mxu0 0.0
      %1820 = vmatpush1.msra.mxu0 0.0
      %1821 = vmatprep.subr.mxu0 0.0
      %1822 = vmatpush1.msra.mxu0 0.0
      %1823 = vmatprep.subr.mxu0 0.0
      %1824 = vmatpush1.msra.mxu0 0.0
      %1825 = vmatprep.subr.mxu0 0.0
      %1826 = vmatpush1.msra.mxu0 0.0
      %1827 = vmatprep.subr.mxu0 0.0
      %1828 = vmatpush1.msra.mxu0 0.0
      %1829 = vmatprep.subr.mxu0 0.0
      %1830 = vmatpush1.msra.mxu0 0.0
      %1831 = vmatprep.subr.mxu0 0.0
      %1832 = vmatpush1.msra.mxu0 0.0
      %1833 = vmatprep.subr.mxu0 0.0
      %1834 = vmatpush1.msra.mxu0 0.0
      %1835 = vmatprep.subr.mxu0 0.0
      %1836 = vmatpush1.msra.mxu0 0.0
      %1837 = vmatprep.subr.mxu0 0.0
      %1838 = vmatpush1.msra.mxu0 0.0
      %1839 = vmatprep.subr.mxu0 0.0
      %1840 = vmatpush1.msra.mxu0 0.0
      %1841 = vmatprep.mubr.f32.mxu0 0.0
      %v1842 = vand.u32 %v1451, 4294901760
      %v1843 = vsub.f32 %v1451, %v1842
      %1844 = vmatmul.mubr.f32.gmra.mrb[0].mxu0 %v1843
      %v1845 = vpop.f32.mrb[0].mxu0
      %v1846 = vadd.f32 %v1724, %v1845
      %v1847 = vpop.f32.mrb[0].mxu0
      %1848 = vmatprep.mubr.f32.mxu0 0.0
      %v1849 = vand.u32 %v1452, 4294901760
      %v1850 = vsub.f32 %v1452, %v1849
      %1851 = vmatmul.mubr.f32.gmra.mrb[0].mxu0 %v1850
      %v1852 = vpop.f32.mrb[0].mxu0
      %v1853 = vadd.f32 %v1730, %v1852
      %v1854 = vpop.f32.mrb[0].mxu0
      %1855 = vmatprep.mubr.f32.mxu0 0.0
      %v1856 = vand.u32 %v1453, 4294901760
      %v1857 = vsub.f32 %v1453, %v1856
      %1858 = vmatmul.mubr.f32.gmra.mrb[0].mxu0 %v1857
      %v1859 = vpop.f32.mrb[0].mxu0
      %v1860 = vadd.f32 %v1736, %v1859
      %v1861 = vpop.f32.mrb[0].mxu0
      %1862 = vmatprep.mubr.f32.mxu0 0.0
      %v1863 = vand.u32 %v1454, 4294901760
      %v1864 = vsub.f32 %v1454, %v1863
      %1865 = vmatmul.mubr.f32.gmra.mrb[0].mxu0 %v1864
      %v1866 = vpop.f32.mrb[0].mxu0
      %v1867 = vadd.f32 %v1742, %v1866
      %v1868 = vpop.f32.mrb[0].mxu0
      %1869 = vdwg.mxu0
      %1870 = vmatprep.subr.mxu0 0.0
      %v1871 = vand.u32 %v1435, 4294901760
      %1872 = vmatpush1.msra.mxu0 %v1871
      %1873 = vmatprep.subr.mxu0 0.0
      %v1874 = vand.u32 %v1436, 4294901760
      %1875 = vmatpush1.msra.mxu0 %v1874
      %1876 = vmatprep.subr.mxu0 0.0
      %v1877 = vand.u32 %v1437, 4294901760
      %1878 = vmatpush1.msra.mxu0 %v1877
      %1879 = vmatprep.subr.mxu0 0.0
      %v1880 = vand.u32 %v1438, 4294901760
      %1881 = vmatpush1.msra.mxu0 %v1880
      %1882 = vmatprep.subr.mxu0 0.0
      %v1883 = vand.u32 %v1439, 4294901760
      %1884 = vmatpush1.msra.mxu0 %v1883
      %1885 = vmatprep.subr.mxu0 0.0
      %v1886 = vand.u32 %v1440, 4294901760
      %1887 = vmatpush1.msra.mxu0 %v1886
      %1888 = vmatprep.subr.mxu0 0.0
      %v1889 = vand.u32 %v1441, 4294901760
      %1890 = vmatpush1.msra.mxu0 %v1889
      %1891 = vmatprep.subr.mxu0 0.0
      %v1892 = vand.u32 %v1442, 4294901760
      %1893 = vmatpush1.msra.mxu0 %v1892
      %1894 = vmatprep.subr.mxu0 0.0
      %v1895 = vand.u32 %v1443, 4294901760
      %1896 = vmatpush1.msra.mxu0 %v1895
      %1897 = vmatprep.subr.mxu0 0.0
      %v1898 = vand.u32 %v1444, 4294901760
      %1899 = vmatpush1.msra.mxu0 %v1898
      %1900 = vmatprep.subr.mxu0 0.0
      %v1901 = vand.u32 %v1445, 4294901760
      %1902 = vmatpush1.msra.mxu0 %v1901
      %1903 = vmatprep.subr.mxu0 0.0
      %v1904 = vand.u32 %v1446, 4294901760
      %1905 = vmatpush1.msra.mxu0 %v1904
      %1906 = vmatprep.subr.mxu0 0.0
      %v1907 = vand.u32 %v1447, 4294901760
      %1908 = vmatpush1.msra.mxu0 %v1907
      %1909 = vmatprep.subr.mxu0 0.0
      %v1910 = vand.u32 %v1448, 4294901760
      %1911 = vmatpush1.msra.mxu0 %v1910
      %1912 = vmatprep.subr.mxu0 0.0
      %v1913 = vand.u32 %v1449, 4294901760
      %1914 = vmatpush1.msra.mxu0 %v1913
      %1915 = vmatprep.subr.mxu0 0.0
      %v1916 = vand.u32 %v1450, 4294901760
      %1917 = vmatpush1.msra.mxu0 %v1916
      %1918 = vmatprep.subr.mxu0 0.0
      %1919 = vmatpush1.msra.mxu0 0.0
      %1920 = vmatprep.subr.mxu0 0.0
      %1921 = vmatpush1.msra.mxu0 0.0
      %1922 = vmatprep.subr.mxu0 0.0
      %1923 = vmatpush1.msra.mxu0 0.0
      %1924 = vmatprep.subr.mxu0 0.0
      %1925 = vmatpush1.msra.mxu0 0.0
      %1926 = vmatprep.subr.mxu0 0.0
      %1927 = vmatpush1.msra.mxu0 0.0
      %1928 = vmatprep.subr.mxu0 0.0
      %1929 = vmatpush1.msra.mxu0 0.0
      %1930 = vmatprep.subr.mxu0 0.0
      %1931 = vmatpush1.msra.mxu0 0.0
      %1932 = vmatprep.subr.mxu0 0.0
      %1933 = vmatpush1.msra.mxu0 0.0
      %1934 = vmatprep.subr.mxu0 0.0
      %1935 = vmatpush1.msra.mxu0 0.0
      %1936 = vmatprep.subr.mxu0 0.0
      %1937 = vmatpush1.msra.mxu0 0.0
      %1938 = vmatprep.subr.mxu0 0.0
      %1939 = vmatpush1.msra.mxu0 0.0
      %1940 = vmatprep.subr.mxu0 0.0
      %1941 = vmatpush1.msra.mxu0 0.0
      %1942 = vmatprep.subr.mxu0 0.0
      %1943 = vmatpush1.msra.mxu0 0.0
      %1944 = vmatprep.subr.mxu0 0.0
      %1945 = vmatpush1.msra.mxu0 0.0
      %1946 = vmatprep.subr.mxu0 0.0
      %1947 = vmatpush1.msra.mxu0 0.0
      %1948 = vmatprep.subr.mxu0 0.0
      %1949 = vmatpush1.msra.mxu0 0.0
      %1950 = vmatprep.mubr.f32.mxu0 0.0
      %v1951 = vand.u32 %v1451, 4294901760
      %v1952 = vsub.f32 %v1451, %v1951
      %v1953 = vand.u32 %v1952, 4294901760
      %1954 = vmatmul.mubr.f32.gmra.mrb[0].mxu0 %v1953
      %v1955 = vpop.f32.mrb[0].mxu0
      %v1956 = vadd.f32 %v1846, %v1955
      %v1957 = vpop.f32.mrb[0].mxu0
      %1958 = vmatprep.mubr.f32.mxu0 0.0
      %v1959 = vand.u32 %v1452, 4294901760
      %v1960 = vsub.f32 %v1452, %v1959
      %v1961 = vand.u32 %v1960, 4294901760
      %1962 = vmatmul.mubr.f32.gmra.mrb[0].mxu0 %v1961
      %v1963 = vpop.f32.mrb[0].mxu0
      %v1964 = vadd.f32 %v1853, %v1963
      %v1965 = vpop.f32.mrb[0].mxu0
      %1966 = vmatprep.mubr.f32.mxu0 0.0
      %v1967 = vand.u32 %v1453, 4294901760
      %v1968 = vsub.f32 %v1453, %v1967
      %v1969 = vand.u32 %v1968, 4294901760
      %1970 = vmatmul.mubr.f32.gmra.mrb[0].mxu0 %v1969
      %v1971 = vpop.f32.mrb[0].mxu0
      %v1972 = vadd.f32 %v1860, %v1971
      %v1973 = vpop.f32.mrb[0].mxu0
      %1974 = vmatprep.mubr.f32.mxu0 0.0
      %v1975 = vand.u32 %v1454, 4294901760
      %v1976 = vsub.f32 %v1454, %v1975
      %v1977 = vand.u32 %v1976, 4294901760
      %1978 = vmatmul.mubr.f32.gmra.mrb[0].mxu0 %v1977
      %v1979 = vpop.f32.mrb[0].mxu0
      %v1980 = vadd.f32 %v1867, %v1979
      %v1981 = vpop.f32.mrb[0].mxu0
      %1982 = vdwg.mxu0
      %1983 = vmatprep.subr.mxu0 0.0
      %v1984 = vand.u32 %v1435, 4294901760
      %v1985 = vsub.f32 %v1435, %v1984
      %v1986 = vand.u32 %v1985, 4294901760
      %1987 = vmatpush1.msra.mxu0 %v1986
      %1988 = vmatprep.subr.mxu0 0.0
      %v1989 = vand.u32 %v1436, 4294901760
      %v1990 = vsub.f32 %v1436, %v1989
      %v1991 = vand.u32 %v1990, 4294901760
      %1992 = vmatpush1.msra.mxu0 %v1991
      %1993 = vmatprep.subr.mxu0 0.0
      %v1994 = vand.u32 %v1437, 4294901760
      %v1995 = vsub.f32 %v1437, %v1994
      %v1996 = vand.u32 %v1995, 4294901760
      %1997 = vmatpush1.msra.mxu0 %v1996
      %1998 = vmatprep.subr.mxu0 0.0
      %v1999 = vand.u32 %v1438, 4294901760
      %v2000 = vsub.f32 %v1438, %v1999
      %v2001 = vand.u32 %v2000, 4294901760
      %2002 = vmatpush1.msra.mxu0 %v2001
      %2003 = vmatprep.subr.mxu0 0.0
      %v2004 = vand.u32 %v1439, 4294901760
      %v2005 = vsub.f32 %v1439, %v2004
      %v2006 = vand.u32 %v2005, 4294901760
      %2007 = vmatpush1.msra.mxu0 %v2006
      %2008 = vmatprep.subr.mxu0 0.0
      %v2009 = vand.u32 %v1440, 4294901760
      %v2010 = vsub.f32 %v1440, %v2009
      %v2011 = vand.u32 %v2010, 4294901760
      %2012 = vmatpush1.msra.mxu0 %v2011
      %2013 = vmatprep.subr.mxu0 0.0
      %v2014 = vand.u32 %v1441, 4294901760
      %v2015 = vsub.f32 %v1441, %v2014
      %v2016 = vand.u32 %v2015, 4294901760
      %2017 = vmatpush1.msra.mxu0 %v2016
      %2018 = vmatprep.subr.mxu0 0.0
      %v2019 = vand.u32 %v1442, 4294901760
      %v2020 = vsub.f32 %v1442, %v2019
      %v2021 = vand.u32 %v2020, 4294901760
      %2022 = vmatpush1.msra.mxu0 %v2021
      %2023 = vmatprep.subr.mxu0 0.0
      %v2024 = vand.u32 %v1443, 4294901760
      %v2025 = vsub.f32 %v1443, %v2024
      %v2026 = vand.u32 %v2025, 4294901760
      %2027 = vmatpush1.msra.mxu0 %v2026
      %2028 = vmatprep.subr.mxu0 0.0
      %v2029 = vand.u32 %v1444, 4294901760
      %v2030 = vsub.f32 %v1444, %v2029
      %v2031 = vand.u32 %v2030, 4294901760
      %2032 = vmatpush1.msra.mxu0 %v2031
      %2033 = vmatprep.subr.mxu0 0.0
      %v2034 = vand.u32 %v1445, 4294901760
      %v2035 = vsub.f32 %v1445, %v2034
      %v2036 = vand.u32 %v2035, 4294901760
      %2037 = vmatpush1.msra.mxu0 %v2036
      %2038 = vmatprep.subr.mxu0 0.0
      %v2039 = vand.u32 %v1446, 4294901760
      %v2040 = vsub.f32 %v1446, %v2039
      %v2041 = vand.u32 %v2040, 4294901760
      %2042 = vmatpush1.msra.mxu0 %v2041
      %2043 = vmatprep.subr.mxu0 0.0
      %v2044 = vand.u32 %v1447, 4294901760
      %v2045 = vsub.f32 %v1447, %v2044
      %v2046 = vand.u32 %v2045, 4294901760
      %2047 = vmatpush1.msra.mxu0 %v2046
      %2048 = vmatprep.subr.mxu0 0.0
      %v2049 = vand.u32 %v1448, 4294901760
      %v2050 = vsub.f32 %v1448, %v2049
      %v2051 = vand.u32 %v2050, 4294901760
      %2052 = vmatpush1.msra.mxu0 %v2051
      %2053 = vmatprep.subr.mxu0 0.0
      %v2054 = vand.u32 %v1449, 4294901760
      %v2055 = vsub.f32 %v1449, %v2054
      %v2056 = vand.u32 %v2055, 4294901760
      %2057 = vmatpush1.msra.mxu0 %v2056
      %2058 = vmatprep.subr.mxu0 0.0
      %v2059 = vand.u32 %v1450, 4294901760
      %v2060 = vsub.f32 %v1450, %v2059
      %v2061 = vand.u32 %v2060, 4294901760
      %2062 = vmatpush1.msra.mxu0 %v2061
      %2063 = vmatprep.subr.mxu0 0.0
      %2064 = vmatpush1.msra.mxu0 0.0
      %2065 = vmatprep.subr.mxu0 0.0
      %2066 = vmatpush1.msra.mxu0 0.0
      %2067 = vmatprep.subr.mxu0 0.0
      %2068 = vmatpush1.msra.mxu0 0.0
      %2069 = vmatprep.subr.mxu0 0.0
      %2070 = vmatpush1.msra.mxu0 0.0
      %2071 = vmatprep.subr.mxu0 0.0
      %2072 = vmatpush1.msra.mxu0 0.0
      %2073 = vmatprep.subr.mxu0 0.0
      %2074 = vmatpush1.msra.mxu0 0.0
      %2075 = vmatprep.subr.mxu0 0.0
      %2076 = vmatpush1.msra.mxu0 0.0
      %2077 = vmatprep.subr.mxu0 0.0
      %2078 = vmatpush1.msra.mxu0 0.0
      %2079 = vmatprep.subr.mxu0 0.0
      %2080 = vmatpush1.msra.mxu0 0.0
      %2081 = vmatprep.subr.mxu0 0.0
      %2082 = vmatpush1.msra.mxu0 0.0
      %2083 = vmatprep.subr.mxu0 0.0
      %2084 = vmatpush1.msra.mxu0 0.0
      %2085 = vmatprep.subr.mxu0 0.0
      %2086 = vmatpush1.msra.mxu0 0.0
      %2087 = vmatprep.subr.mxu0 0.0
      %2088 = vmatpush1.msra.mxu0 0.0
      %2089 = vmatprep.subr.mxu0 0.0
      %2090 = vmatpush1.msra.mxu0 0.0
      %2091 = vmatprep.subr.mxu0 0.0
      %2092 = vmatpush1.msra.mxu0 0.0
      %2093 = vmatprep.subr.mxu0 0.0
      %2094 = vmatpush1.msra.mxu0 0.0
      %2095 = vmatprep.mubr.f32.mxu0 0.0
      %v2096 = vand.u32 %v1451, 4294901760
      %2097 = vmatmul.mubr.f32.gmra.mrb[0].mxu0 %v2096
      %v2098 = vpop.f32.mrb[0].mxu0
      %v2099 = vadd.f32 %v1956, %v2098
      %v2100 = vpop.f32.mrb[0].mxu0
      %2101 = vmatprep.mubr.f32.mxu0 0.0
      %v2102 = vand.u32 %v1452, 4294901760
      %2103 = vmatmul.mubr.f32.gmra.mrb[0].mxu0 %v2102
      %v2104 = vpop.f32.mrb[0].mxu0
      %v2105 = vadd.f32 %v1964, %v2104
      %v2106 = vpop.f32.mrb[0].mxu0
      %2107 = vmatprep.mubr.f32.mxu0 0.0
      %v2108 = vand.u32 %v1453, 4294901760
      %2109 = vmatmul.mubr.f32.gmra.mrb[0].mxu0 %v2108
      %v2110 = vpop.f32.mrb[0].mxu0
      %v2111 = vadd.f32 %v1972, %v2110
      %v2112 = vpop.f32.mrb[0].mxu0
      %2113 = vmatprep.mubr.f32.mxu0 0.0
      %v2114 = vand.u32 %v1454, 4294901760
      %2115 = vmatmul.mubr.f32.gmra.mrb[0].mxu0 %v2114
      %v2116 = vpop.f32.mrb[0].mxu0
      %v2117 = vadd.f32 %v1980, %v2116
      %v2118 = vpop.f32.mrb[0].mxu0
      %2119 = vdwg.mxu0
      %2120 = vmatprep.subr.mxu0 0.0
      %v2121 = vand.u32 %v1435, 4294901760
      %2122 = vmatpush1.msra.mxu0 %v2121
      %2123 = vmatprep.subr.mxu0 0.0
      %v2124 = vand.u32 %v1436, 4294901760
      %2125 = vmatpush1.msra.mxu0 %v2124
      %2126 = vmatprep.subr.mxu0 0.0
      %v2127 = vand.u32 %v1437, 4294901760
      %2128 = vmatpush1.msra.mxu0 %v2127
      %2129 = vmatprep.subr.mxu0 0.0
      %v2130 = vand.u32 %v1438, 4294901760
      %2131 = vmatpush1.msra.mxu0 %v2130
      %2132 = vmatprep.subr.mxu0 0.0
      %v2133 = vand.u32 %v1439, 4294901760
      %2134 = vmatpush1.msra.mxu0 %v2133
      %2135 = vmatprep.subr.mxu0 0.0
      %v2136 = vand.u32 %v1440, 4294901760
      %2137 = vmatpush1.msra.mxu0 %v2136
      %2138 = vmatprep.subr.mxu0 0.0
      %v2139 = vand.u32 %v1441, 4294901760
      %2140 = vmatpush1.msra.mxu0 %v2139
      %2141 = vmatprep.subr.mxu0 0.0
      %v2142 = vand.u32 %v1442, 4294901760
      %2143 = vmatpush1.msra.mxu0 %v2142
      %2144 = vmatprep.subr.mxu0 0.0
      %v2145 = vand.u32 %v1443, 4294901760
      %2146 = vmatpush1.msra.mxu0 %v2145
      %2147 = vmatprep.subr.mxu0 0.0
      %v2148 = vand.u32 %v1444, 4294901760
      %2149 = vmatpush1.msra.mxu0 %v2148
      %2150 = vmatprep.subr.mxu0 0.0
      %v2151 = vand.u32 %v1445, 4294901760
      %2152 = vmatpush1.msra.mxu0 %v2151
      %2153 = vmatprep.subr.mxu0 0.0
      %v2154 = vand.u32 %v1446, 4294901760
      %2155 = vmatpush1.msra.mxu0 %v2154
      %2156 = vmatprep.subr.mxu0 0.0
      %v2157 = vand.u32 %v1447, 4294901760
      %2158 = vmatpush1.msra.mxu0 %v2157
      %2159 = vmatprep.subr.mxu0 0.0
      %v2160 = vand.u32 %v1448, 4294901760
      %2161 = vmatpush1.msra.mxu0 %v2160
      %2162 = vmatprep.subr.mxu0 0.0
      %v2163 = vand.u32 %v1449, 4294901760
      %2164 = vmatpush1.msra.mxu0 %v2163
      %2165 = vmatprep.subr.mxu0 0.0
      %v2166 = vand.u32 %v1450, 4294901760
      %2167 = vmatpush1.msra.mxu0 %v2166
      %2168 = vmatprep.subr.mxu0 0.0
      %2169 = vmatpush1.msra.mxu0 0.0
      %2170 = vmatprep.subr.mxu0 0.0
      %2171 = vmatpush1.msra.mxu0 0.0
      %2172 = vmatprep.subr.mxu0 0.0
      %2173 = vmatpush1.msra.mxu0 0.0
      %2174 = vmatprep.subr.mxu0 0.0
      %2175 = vmatpush1.msra.mxu0 0.0
      %2176 = vmatprep.subr.mxu0 0.0
      %2177 = vmatpush1.msra.mxu0 0.0
      %2178 = vmatprep.subr.mxu0 0.0
      %2179 = vmatpush1.msra.mxu0 0.0
      %2180 = vmatprep.subr.mxu0 0.0
      %2181 = vmatpush1.msra.mxu0 0.0
      %2182 = vmatprep.subr.mxu0 0.0
      %2183 = vmatpush1.msra.mxu0 0.0
      %2184 = vmatprep.subr.mxu0 0.0
      %2185 = vmatpush1.msra.mxu0 0.0
      %2186 = vmatprep.subr.mxu0 0.0
      %2187 = vmatpush1.msra.mxu0 0.0
      %2188 = vmatprep.subr.mxu0 0.0
      %2189 = vmatpush1.msra.mxu0 0.0
      %2190 = vmatprep.subr.mxu0 0.0
      %2191 = vmatpush1.msra.mxu0 0.0
      %2192 = vmatprep.subr.mxu0 0.0
      %2193 = vmatpush1.msra.mxu0 0.0
      %2194 = vmatprep.subr.mxu0 0.0
      %2195 = vmatpush1.msra.mxu0 0.0
      %2196 = vmatprep.subr.mxu0 0.0
      %2197 = vmatpush1.msra.mxu0 0.0
      %2198 = vmatprep.subr.mxu0 0.0
      %2199 = vmatpush1.msra.mxu0 0.0
      %2200 = vmatprep.mubr.f32.mxu0 0.0
      %v2201 = vand.u32 %v1451, 4294901760
      %2202 = vmatmul.mubr.f32.gmra.mrb[0].mxu0 %v2201
      %v2203 = vpop.f32.mrb[0].mxu0
      %v2204 = vadd.f32 %v2099, %v2203
      %v2205 = vpop.f32.mrb[0].mxu0
      %2206 = vmatprep.mubr.f32.mxu0 0.0
      %v2207 = vand.u32 %v1452, 4294901760
      %2208 = vmatmul.mubr.f32.gmra.mrb[0].mxu0 %v2207
      %v2209 = vpop.f32.mrb[0].mxu0
      %v2210 = vadd.f32 %v2105, %v2209
      %v2211 = vpop.f32.mrb[0].mxu0
      %2212 = vmatprep.mubr.f32.mxu0 0.0
      %v2213 = vand.u32 %v1453, 4294901760
      %2214 = vmatmul.mubr.f32.gmra.mrb[0].mxu0 %v2213
      %v2215 = vpop.f32.mrb[0].mxu0
      %v2216 = vadd.f32 %v2111, %v2215
      %v2217 = vpop.f32.mrb[0].mxu0
      %2218 = vmatprep.mubr.f32.mxu0 0.0
      %v2219 = vand.u32 %v1454, 4294901760
      %2220 = vmatmul.mubr.f32.gmra.mrb[0].mxu0 %v2219
      %v2221 = vpop.f32.mrb[0].mxu0
      %v2222 = vadd.f32 %v2117, %v2221
      %v2223 = vpop.f32.mrb[0].mxu0
      %2224 = vdwg.mxu0
      %2229 = vrot.lane.b32.xlu0 %v2204, 127
      %v2230 = vpop.permute.xlu0 %2229
      %2231 = vrot.lane.b32.xlu0 %v2210, 127
      %v2232 = vpop.permute.xlu0 %2231
      %2233 = vrot.lane.b32.xlu0 %v2216, 127
      %v2234 = vpop.permute.xlu0 %2233
      %2235 = vrot.lane.b32.xlu0 %v2222, 127
      %v2236 = vpop.permute.xlu0 %2235
      %v2241 = vadd.f32 %v2204, %v2230
      %v2242 = vadd.f32 %v2210, %v2232
      %v2243 = vadd.f32 %v2216, %v2234
      %v2244 = vadd.f32 %v2222, %v2236
      %v2245 = vxor.u32 %v2241, 2147483648
      %v2246 = vxor.u32 %v2242, 2147483648
      %v2247 = vxor.u32 %v2243, 2147483648
      %v2248 = vxor.u32 %v2244, 2147483648
      %v2249 = vmul.f32 %v2245, 1.442695
      %v2250 = vpow.pop %v2249
      %v2251 = vmul.f32 %v2246, 1.442695
      %v2252 = vpow.pop %v2251
      %v2253 = vmul.f32 %v2247, 1.442695
      %v2254 = vpow.pop %v2253
      %v2255 = vmul.f32 %v2248, 1.442695
      %v2256 = vpow.pop %v2255
      %v2257 = vadd.f32 %v2250, 1.0
      %v2258 = vadd.f32 %v2252, 1.0
      %v2259 = vadd.f32 %v2254, 1.0
      %v2260 = vadd.f32 %v2256, 1.0
      %v2261 = vrcp.pop %v2257
      %v2262 = vmul.f32 1.0, %v2261
      %v2263 = vrcp.pop %v2258
      %v2264 = vmul.f32 1.0, %v2263
      %v2265 = vrcp.pop %v2259
      %v2266 = vmul.f32 1.0, %v2265
      %v2267 = vrcp.pop %v2260
      %v2268 = vmul.f32 1.0, %v2267
      %2270 = vset.pattern.permute.xlu0 0
      %2271 = vperm.xlu0 %2270, %v2262
      %v2272 = vpop.permute.xlu0 %2271
      %2275 = vset.pattern.permute.xlu0 0
      %2276 = vperm.xlu0 %2275, %v2264
      %v2277 = vpop.permute.xlu0 %2276
      %2280 = vset.pattern.permute.xlu0 0
      %2281 = vperm.xlu0 %2280, %v2266
      %v2282 = vpop.permute.xlu0 %2281
      %2285 = vset.pattern.permute.xlu0 0
      %2286 = vperm.xlu0 %2285, %v2268
      %v2287 = vpop.permute.xlu0 %2286
      %v2289 = vmul.f32 %v198, %v2272
      %v2290 = vmul.f32 %v199, %v2272
      %v2291 = vmul.f32 %v200, %v2277
      %v2292 = vmul.f32 %v201, %v2277
      %v2293 = vmul.f32 %v202, %v2282
      %v2294 = vmul.f32 %v203, %v2282
      %v2295 = vmul.f32 %v204, %v2287
      %v2296 = vmul.f32 %v205, %v2287
      %v2297 = vadd.f32 %v2289, %v2291
      %v2298 = vadd.f32 %v2297, %v2293
      %v2299 = vadd.f32 %v2298, %v2295
      %v2300 = vrot.slane %v2299, 4
      %v2301 = vadd.f32 %v2299, %v2300
      %v2302 = vrot.slane %v2301, 2
      %v2303 = vadd.f32 %v2301, %v2302
      %v2304 = vrot.slane %v2303, 1
      %v2305 = vadd.f32 %v2303, %v2304
      %v2306 = vadd.f32 %v2290, %v2292
      %v2307 = vadd.f32 %v2306, %v2294
      %v2308 = vadd.f32 %v2307, %v2296
      %v2309 = vrot.slane %v2308, 4
      %v2310 = vadd.f32 %v2308, %v2309
      %v2311 = vrot.slane %v2310, 2
      %v2312 = vadd.f32 %v2310, %v2311
      %v2313 = vrot.slane %v2312, 1
      %v2314 = vadd.f32 %v2312, %v2313
      %v2315 = vrcp.pop 32.0
      %v2316 = vmul.f32 %v2305, %v2315
      %v2317 = vmul.f32 %v2314, %v2315
      %v2318 = vmax.f32 %v2289, %v2293
      %v2319 = vmax.f32 %v2291, %v2295
      %v2320 = vmax.f32 %v2318, %v2319
      %v2321 = vrot.slane %v2320, 4
      %v2322 = vmax.f32 %v2320, %v2321
      %v2323 = vrot.slane %v2322, 2
      %v2324 = vmax.f32 %v2322, %v2323
      %v2325 = vrot.slane %v2324, 1
      %v2326 = vmax.f32 %v2324, %v2325
      %v2327 = vmax.f32 %v2290, %v2294
      %v2328 = vmax.f32 %v2292, %v2296
      %v2329 = vmax.f32 %v2327, %v2328
      %v2330 = vrot.slane %v2329, 4
      %v2331 = vmax.f32 %v2329, %v2330
      %v2332 = vrot.slane %v2331, 2
      %v2333 = vmax.f32 %v2331, %v2332
      %v2334 = vrot.slane %v2333, 1
      %v2335 = vmax.f32 %v2333, %v2334
      %v2336 = vld [vmem:[%s3] sm:$0xff]
      %v2337 = vld [vmem:[%s3 + $0x8] sm:$0xff]
      %v2338 = vld [vmem:[%s3 + $0x10] sm:$0xff]
      %v2339 = vld [vmem:[%s3 + $0x18] sm:$0xff]
      %v2340 = vld [vmem:[%s3 + $0x20] sm:$0xff]
      %v2341 = vld [vmem:[%s3 + $0x28] sm:$0xff]
      %v2342 = vld [vmem:[%s3 + $0x30] sm:$0xff]
      %v2343 = vld [vmem:[%s3 + $0x38] sm:$0xff]
      %v2344 = vld [vmem:[%s3 + $0x40] sm:$0xff]
      %v2345 = vld [vmem:[%s3 + $0x48] sm:$0xff]
      %v2346 = vld [vmem:[%s3 + $0x50] sm:$0xff]
      %v2347 = vld [vmem:[%s3 + $0x58] sm:$0xff]
      %v2348 = vld [vmem:[%s3 + $0x60] sm:$0xff]
      %v2349 = vld [vmem:[%s3 + $0x68] sm:$0xff]
      %v2350 = vld [vmem:[%s3 + $0x70] sm:$0xff]
      %v2351 = vld [vmem:[%s3 + $0x78] sm:$0xff]
      %v2352 = vld [vmem:[%s3 + $0x80] sm:$0xff]
      %v2353 = vld [vmem:[%s3 + $0x88] sm:$0xff]
      %v2354 = vld [vmem:[%s3 + $0x90] sm:$0xff]
      %v2355 = vld [vmem:[%s3 + $0x98] sm:$0xff]
      %v2356 = vld [vmem:[%s3 + $0xa0] sm:$0xff]
      %v2357 = vld [vmem:[%s3 + $0xa8] sm:$0xff]
      %v2358 = vld [vmem:[%s3 + $0xb0] sm:$0xff]
      %v2359 = vld [vmem:[%s3 + $0xb8] sm:$0xff]
      %v2360 = vld [vmem:[%s3 + $0xc0] sm:$0xff]
      %v2361 = vld [vmem:[%s3 + $0xc8] sm:$0xff]
      %v2362 = vld [vmem:[%s3 + $0xd0] sm:$0xff]
      %v2363 = vld [vmem:[%s3 + $0xd8] sm:$0xff]
      %v2364 = vld [vmem:[%s3 + $0xe0] sm:$0xff]
      %v2365 = vld [vmem:[%s3 + $0xe8] sm:$0xff]
      %v2366 = vld [vmem:[%s3 + $0xf0] sm:$0xff]
      %v2367 = vld [vmem:[%s3 + $0xf8] sm:$0xff]
      %v2368 = vld [vmem:[%s3 + $0x100] sm:$0xff]
      %v2369 = vld [vmem:[%s3 + $0x108] sm:$0xff]
      %v2370 = vld [vmem:[%s3 + $0x110] sm:$0xff]
      %v2371 = vld [vmem:[%s3 + $0x118] sm:$0xff]
      %v2372 = vld [vmem:[%s3 + $0x120] sm:$0xff]
      %v2373 = vld [vmem:[%s3 + $0x128] sm:$0xff]
      %v2374 = vld [vmem:[%s3 + $0x130] sm:$0xff]
      %v2375 = vld [vmem:[%s3 + $0x138] sm:$0xff]
      %v2376 = vld [vmem:[%s3 + $0x140] sm:$0xff]
      %v2377 = vld [vmem:[%s3 + $0x148] sm:$0xff]
      %v2378 = vld [vmem:[%s3 + $0x150] sm:$0xff]
      %v2379 = vld [vmem:[%s3 + $0x158] sm:$0xff]
      %v2380 = vld [vmem:[%s3 + $0x160] sm:$0xff]
      %v2381 = vld [vmem:[%s3 + $0x168] sm:$0xff]
      %v2382 = vld [vmem:[%s3 + $0x170] sm:$0xff]
      %v2383 = vld [vmem:[%s3 + $0x178] sm:$0xff]
      %v2384 = vld [vmem:[%s3 + $0x180] sm:$0xff]
      %v2385 = vld [vmem:[%s3 + $0x188] sm:$0xff]
      %v2386 = vld [vmem:[%s3 + $0x190] sm:$0xff]
      %v2387 = vld [vmem:[%s3 + $0x198] sm:$0xff]
      %v2388 = vld [vmem:[%s3 + $0x1a0] sm:$0xff]
      %v2389 = vld [vmem:[%s3 + $0x1a8] sm:$0xff]
      %v2390 = vld [vmem:[%s3 + $0x1b0] sm:$0xff]
      %v2391 = vld [vmem:[%s3 + $0x1b8] sm:$0xff]
      %v2392 = vld [vmem:[%s3 + $0x1c0] sm:$0xff]
      %v2393 = vld [vmem:[%s3 + $0x1c8] sm:$0xff]
      %v2394 = vld [vmem:[%s3 + $0x1d0] sm:$0xff]
      %v2395 = vld [vmem:[%s3 + $0x1d8] sm:$0xff]
      %v2396 = vld [vmem:[%s3 + $0x1e0] sm:$0xff]
      %v2397 = vld [vmem:[%s3 + $0x1e8] sm:$0xff]
      %v2398 = vld [vmem:[%s3 + $0x1f0] sm:$0xff]
      %v2399 = vld [vmem:[%s3 + $0x1f8] sm:$0xff]
      %v2400 = vld [vmem:[%s3 + $0x200] sm:$0xff]
      %v2401 = vld [vmem:[%s3 + $0x208] sm:$0xff]
      %v2402 = vld [vmem:[%s3 + $0x210] sm:$0xff]
      %v2403 = vld [vmem:[%s3 + $0x218] sm:$0xff]
      %v2404 = vld [vmem:[%s3 + $0x220] sm:$0xff]
      %v2405 = vld [vmem:[%s3 + $0x228] sm:$0xff]
      %v2406 = vld [vmem:[%s3 + $0x230] sm:$0xff]
      %v2407 = vld [vmem:[%s3 + $0x238] sm:$0xff]
      %v2408 = vld [vmem:[%s3 + $0x240] sm:$0xff]
      %v2409 = vld [vmem:[%s3 + $0x248] sm:$0xff]
      %v2410 = vld [vmem:[%s3 + $0x250] sm:$0xff]
      %v2411 = vld [vmem:[%s3 + $0x258] sm:$0xff]
      %v2412 = vld [vmem:[%s3 + $0x260] sm:$0xff]
      %v2413 = vld [vmem:[%s3 + $0x268] sm:$0xff]
      %v2414 = vld [vmem:[%s3 + $0x270] sm:$0xff]
      %v2415 = vld [vmem:[%s3 + $0x278] sm:$0xff]
      %v2416 = vld [vmem:[%s3 + $0x280] sm:$0xff]
      %v2417 = vld [vmem:[%s3 + $0x288] sm:$0xff]
      %v2418 = vld [vmem:[%s3 + $0x290] sm:$0xff]
      %v2419 = vld [vmem:[%s3 + $0x298] sm:$0xff]
      %v2420 = vld [vmem:[%s3 + $0x2a0] sm:$0xff]
      %v2421 = vld [vmem:[%s3 + $0x2a8] sm:$0xff]
      %v2422 = vld [vmem:[%s3 + $0x2b0] sm:$0xff]
      %v2423 = vld [vmem:[%s3 + $0x2b8] sm:$0xff]
      %v2424 = vld [vmem:[%s3 + $0x2c0] sm:$0xff]
      %v2425 = vld [vmem:[%s3 + $0x2c8] sm:$0xff]
      %v2426 = vld [vmem:[%s3 + $0x2d0] sm:$0xff]
      %v2427 = vld [vmem:[%s3 + $0x2d8] sm:$0xff]
      %v2428 = vld [vmem:[%s3 + $0x2e0] sm:$0xff]
      %v2429 = vld [vmem:[%s3 + $0x2e8] sm:$0xff]
      %v2430 = vld [vmem:[%s3 + $0x2f0] sm:$0xff]
      %v2431 = vld [vmem:[%s3 + $0x2f8] sm:$0xff]
      %v2432 = vld [vmem:[%s3 + $0x300] sm:$0xff]
      %v2433 = vld [vmem:[%s3 + $0x308] sm:$0xff]
      %v2434 = vld [vmem:[%s3 + $0x310] sm:$0xff]
      %v2435 = vld [vmem:[%s3 + $0x318] sm:$0xff]
      %v2436 = vld [vmem:[%s3 + $0x320] sm:$0xff]
      %v2437 = vld [vmem:[%s3 + $0x328] sm:$0xff]
      %v2438 = vld [vmem:[%s3 + $0x330] sm:$0xff]
      %v2439 = vld [vmem:[%s3 + $0x338] sm:$0xff]
      %v2440 = vld [vmem:[%s3 + $0x340] sm:$0xff]
      %v2441 = vld [vmem:[%s3 + $0x348] sm:$0xff]
      %v2442 = vld [vmem:[%s3 + $0x350] sm:$0xff]
      %v2443 = vld [vmem:[%s3 + $0x358] sm:$0xff]
      %v2444 = vld [vmem:[%s3 + $0x360] sm:$0xff]
      %v2445 = vld [vmem:[%s3 + $0x368] sm:$0xff]
      %v2446 = vld [vmem:[%s3 + $0x370] sm:$0xff]
      %v2447 = vld [vmem:[%s3 + $0x378] sm:$0xff]
      %v2448 = vld [vmem:[%s3 + $0x380] sm:$0xff]
      %v2449 = vld [vmem:[%s3 + $0x388] sm:$0xff]
      %v2450 = vld [vmem:[%s3 + $0x390] sm:$0xff]
      %v2451 = vld [vmem:[%s3 + $0x398] sm:$0xff]
      %v2452 = vld [vmem:[%s3 + $0x3a0] sm:$0xff]
      %v2453 = vld [vmem:[%s3 + $0x3a8] sm:$0xff]
      %v2454 = vld [vmem:[%s3 + $0x3b0] sm:$0xff]
      %v2455 = vld [vmem:[%s3 + $0x3b8] sm:$0xff]
      %v2456 = vld [vmem:[%s3 + $0x3c0] sm:$0xff]
      %v2457 = vld [vmem:[%s3 + $0x3c8] sm:$0xff]
      %v2458 = vld [vmem:[%s3 + $0x3d0] sm:$0xff]
      %v2459 = vld [vmem:[%s3 + $0x3d8] sm:$0xff]
      %v2460 = vld [vmem:[%s3 + $0x3e0] sm:$0xff]
      %v2461 = vld [vmem:[%s3 + $0x3e8] sm:$0xff]
      %v2462 = vld [vmem:[%s3 + $0x3f0] sm:$0xff]
      %v2463 = vld [vmem:[%s3 + $0x3f8] sm:$0xff]
      %v2464 = vand.u32 %v2337, 4294901760
      %2465 = vmatprep.subr.mxu0 %v2464
      %v2466 = vand.u32 %v2336, 4294901760
      %2467 = vmatpush1.msra.mxu0 %v2466
      %v2468 = vand.u32 %v2339, 4294901760
      %2469 = vmatprep.subr.mxu0 %v2468
      %v2470 = vand.u32 %v2338, 4294901760
      %2471 = vmatpush1.msra.mxu0 %v2470
      %v2472 = vand.u32 %v2341, 4294901760
      %2473 = vmatprep.subr.mxu0 %v2472
      %v2474 = vand.u32 %v2340, 4294901760
      %2475 = vmatpush1.msra.mxu0 %v2474
      %v2476 = vand.u32 %v2343, 4294901760
      %2477 = vmatprep.subr.mxu0 %v2476
      %v2478 = vand.u32 %v2342, 4294901760
      %2479 = vmatpush1.msra.mxu0 %v2478
      %v2480 = vand.u32 %v2345, 4294901760
      %2481 = vmatprep.subr.mxu0 %v2480
      %v2482 = vand.u32 %v2344, 4294901760
      %2483 = vmatpush1.msra.mxu0 %v2482
      %v2484 = vand.u32 %v2347, 4294901760
      %2485 = vmatprep.subr.mxu0 %v2484
      %v2486 = vand.u32 %v2346, 4294901760
      %2487 = vmatpush1.msra.mxu0 %v2486
      %v2488 = vand.u32 %v2349, 4294901760
      %2489 = vmatprep.subr.mxu0 %v2488
      %v2490 = vand.u32 %v2348, 4294901760
      %2491 = vmatpush1.msra.mxu0 %v2490
      %v2492 = vand.u32 %v2351, 4294901760
      %2493 = vmatprep.subr.mxu0 %v2492
      %v2494 = vand.u32 %v2350, 4294901760
      %2495 = vmatpush1.msra.mxu0 %v2494
      %v2496 = vand.u32 %v2353, 4294901760
      %2497 = vmatprep.subr.mxu0 %v2496
      %v2498 = vand.u32 %v2352, 4294901760
      %2499 = vmatpush1.msra.mxu0 %v2498
      %v2500 = vand.u32 %v2355, 4294901760
      %2501 = vmatprep.subr.mxu0 %v2500
      %v2502 = vand.u32 %v2354, 4294901760
      %2503 = vmatpush1.msra.mxu0 %v2502
      %v2504 = vand.u32 %v2357, 4294901760
      %2505 = vmatprep.subr.mxu0 %v2504
      %v2506 = vand.u32 %v2356, 4294901760
      %2507 = vmatpush1.msra.mxu0 %v2506
      %v2508 = vand.u32 %v2359, 4294901760
      %2509 = vmatprep.subr.mxu0 %v2508
      %v2510 = vand.u32 %v2358, 4294901760
      %2511 = vmatpush1.msra.mxu0 %v2510
      %v2512 = vand.u32 %v2361, 4294901760
      %2513 = vmatprep.subr.mxu0 %v2512
      %v2514 = vand.u32 %v2360, 4294901760
      %2515 = vmatpush1.msra.mxu0 %v2514
      %v2516 = vand.u32 %v2363, 4294901760
      %2517 = vmatprep.subr.mxu0 %v2516
      %v2518 = vand.u32 %v2362, 4294901760
      %2519 = vmatpush1.msra.mxu0 %v2518
      %v2520 = vand.u32 %v2365, 4294901760
      %2521 = vmatprep.subr.mxu0 %v2520
      %v2522 = vand.u32 %v2364, 4294901760
      %2523 = vmatpush1.msra.mxu0 %v2522
      %v2524 = vand.u32 %v2367, 4294901760
      %2525 = vmatprep.subr.mxu0 %v2524
      %v2526 = vand.u32 %v2366, 4294901760
      %2527 = vmatpush1.msra.mxu0 %v2526
      %v2528 = vand.u32 %v2369, 4294901760
      %2529 = vmatprep.subr.mxu0 %v2528
      %v2530 = vand.u32 %v2368, 4294901760
      %2531 = vmatpush1.msra.mxu0 %v2530
      %v2532 = vand.u32 %v2371, 4294901760
      %2533 = vmatprep.subr.mxu0 %v2532
      %v2534 = vand.u32 %v2370, 4294901760
      %2535 = vmatpush1.msra.mxu0 %v2534
      %v2536 = vand.u32 %v2373, 4294901760
      %2537 = vmatprep.subr.mxu0 %v2536
      %v2538 = vand.u32 %v2372, 4294901760
      %2539 = vmatpush1.msra.mxu0 %v2538
      %v2540 = vand.u32 %v2375, 4294901760
      %2541 = vmatprep.subr.mxu0 %v2540
      %v2542 = vand.u32 %v2374, 4294901760
      %2543 = vmatpush1.msra.mxu0 %v2542
      %v2544 = vand.u32 %v2377, 4294901760
      %2545 = vmatprep.subr.mxu0 %v2544
      %v2546 = vand.u32 %v2376, 4294901760
      %2547 = vmatpush1.msra.mxu0 %v2546
      %v2548 = vand.u32 %v2379, 4294901760
      %2549 = vmatprep.subr.mxu0 %v2548
      %v2550 = vand.u32 %v2378, 4294901760
      %2551 = vmatpush1.msra.mxu0 %v2550
      %v2552 = vand.u32 %v2381, 4294901760
      %2553 = vmatprep.subr.mxu0 %v2552
      %v2554 = vand.u32 %v2380, 4294901760
      %2555 = vmatpush1.msra.mxu0 %v2554
      %v2556 = vand.u32 %v2383, 4294901760
      %2557 = vmatprep.subr.mxu0 %v2556
      %v2558 = vand.u32 %v2382, 4294901760
      %2559 = vmatpush1.msra.mxu0 %v2558
      %v2560 = vand.u32 %v2385, 4294901760
      %2561 = vmatprep.subr.mxu0 %v2560
      %v2562 = vand.u32 %v2384, 4294901760
      %2563 = vmatpush1.msra.mxu0 %v2562
      %v2564 = vand.u32 %v2387, 4294901760
      %2565 = vmatprep.subr.mxu0 %v2564
      %v2566 = vand.u32 %v2386, 4294901760
      %2567 = vmatpush1.msra.mxu0 %v2566
      %v2568 = vand.u32 %v2389, 4294901760
      %2569 = vmatprep.subr.mxu0 %v2568
      %v2570 = vand.u32 %v2388, 4294901760
      %2571 = vmatpush1.msra.mxu0 %v2570
      %v2572 = vand.u32 %v2391, 4294901760
      %2573 = vmatprep.subr.mxu0 %v2572
      %v2574 = vand.u32 %v2390, 4294901760
      %2575 = vmatpush1.msra.mxu0 %v2574
      %v2576 = vand.u32 %v2393, 4294901760
      %2577 = vmatprep.subr.mxu0 %v2576
      %v2578 = vand.u32 %v2392, 4294901760
      %2579 = vmatpush1.msra.mxu0 %v2578
      %v2580 = vand.u32 %v2395, 4294901760
      %2581 = vmatprep.subr.mxu0 %v2580
      %v2582 = vand.u32 %v2394, 4294901760
      %2583 = vmatpush1.msra.mxu0 %v2582
      %v2584 = vand.u32 %v2397, 4294901760
      %2585 = vmatprep.subr.mxu0 %v2584
      %v2586 = vand.u32 %v2396, 4294901760
      %2587 = vmatpush1.msra.mxu0 %v2586
      %v2588 = vand.u32 %v2399, 4294901760
      %2589 = vmatprep.subr.mxu0 %v2588
      %v2590 = vand.u32 %v2398, 4294901760
      %2591 = vmatpush1.msra.mxu0 %v2590
      %v2592 = vand.u32 %v2317, 4294901760
      %v2593 = vsub.f32 %v2317, %v2592
      %v2594 = vand.u32 %v2593, 4294901760
      %v2595 = vsub.f32 %v2593, %v2594
      %v2596 = vand.u32 %v2595, 4294901760
      %2597 = vmatprep.mubr.f32.mxu0 %v2596
      %v2598 = vand.u32 %v2316, 4294901760
      %v2599 = vsub.f32 %v2316, %v2598
      %v2600 = vand.u32 %v2599, 4294901760
      %v2601 = vsub.f32 %v2599, %v2600
      %v2602 = vand.u32 %v2601, 4294901760
      %2603 = vmatmul.mubr.f32.gmra.mrb[0].mxu0 %v2602
      %v2604 = vpop.f32.mrb[0].mxu0
      %v2605 = vadd.f32 0.0, %v2604
      %v2606 = vpop.f32.mrb[0].mxu0
      %v2607 = vadd.f32 0.0, %v2606
      %2608 = vdwg.mxu0
      %v2609 = vand.u32 %v2337, 4294901760
      %v2610 = vsub.f32 %v2337, %v2609
      %v2611 = vand.u32 %v2610, 4294901760
      %v2612 = vsub.f32 %v2610, %v2611
      %v2613 = vand.u32 %v2612, 4294901760
      %2614 = vmatprep.subr.mxu0 %v2613
      %v2615 = vand.u32 %v2336, 4294901760
      %v2616 = vsub.f32 %v2336, %v2615
      %v2617 = vand.u32 %v2616, 4294901760
      %v2618 = vsub.f32 %v2616, %v2617
      %v2619 = vand.u32 %v2618, 4294901760
      %2620 = vmatpush1.msra.mxu0 %v2619
      %v2621 = vand.u32 %v2339, 4294901760
      %v2622 = vsub.f32 %v2339, %v2621
      %v2623 = vand.u32 %v2622, 4294901760
      %v2624 = vsub.f32 %v2622, %v2623
      %v2625 = vand.u32 %v2624, 4294901760
      %2626 = vmatprep.subr.mxu0 %v2625
      %v2627 = vand.u32 %v2338, 4294901760
      %v2628 = vsub.f32 %v2338, %v2627
      %v2629 = vand.u32 %v2628, 4294901760
      %v2630 = vsub.f32 %v2628, %v2629
      %v2631 = vand.u32 %v2630, 4294901760
      %2632 = vmatpush1.msra.mxu0 %v2631
      %v2633 = vand.u32 %v2341, 4294901760
      %v2634 = vsub.f32 %v2341, %v2633
      %v2635 = vand.u32 %v2634, 4294901760
      %v2636 = vsub.f32 %v2634, %v2635
      %v2637 = vand.u32 %v2636, 4294901760
      %2638 = vmatprep.subr.mxu0 %v2637
      %v2639 = vand.u32 %v2340, 4294901760
      %v2640 = vsub.f32 %v2340, %v2639
      %v2641 = vand.u32 %v2640, 4294901760
      %v2642 = vsub.f32 %v2640, %v2641
      %v2643 = vand.u32 %v2642, 4294901760
      %2644 = vmatpush1.msra.mxu0 %v2643
      %v2645 = vand.u32 %v2343, 4294901760
      %v2646 = vsub.f32 %v2343, %v2645
      %v2647 = vand.u32 %v2646, 4294901760
      %v2648 = vsub.f32 %v2646, %v2647
      %v2649 = vand.u32 %v2648, 4294901760
      %2650 = vmatprep.subr.mxu0 %v2649
      %v2651 = vand.u32 %v2342, 4294901760
      %v2652 = vsub.f32 %v2342, %v2651
      %v2653 = vand.u32 %v2652, 4294901760
      %v2654 = vsub.f32 %v2652, %v2653
      %v2655 = vand.u32 %v2654, 4294901760
      %2656 = vmatpush1.msra.mxu0 %v2655
      %v2657 = vand.u32 %v2345, 4294901760
      %v2658 = vsub.f32 %v2345, %v2657
      %v2659 = vand.u32 %v2658, 4294901760
      %v2660 = vsub.f32 %v2658, %v2659
      %v2661 = vand.u32 %v2660, 4294901760
      %2662 = vmatprep.subr.mxu0 %v2661
      %v2663 = vand.u32 %v2344, 4294901760
      %v2664 = vsub.f32 %v2344, %v2663
      %v2665 = vand.u32 %v2664, 4294901760
      %v2666 = vsub.f32 %v2664, %v2665
      %v2667 = vand.u32 %v2666, 4294901760
      %2668 = vmatpush1.msra.mxu0 %v2667
      %v2669 = vand.u32 %v2347, 4294901760
      %v2670 = vsub.f32 %v2347, %v2669
      %v2671 = vand.u32 %v2670, 4294901760
      %v2672 = vsub.f32 %v2670, %v2671
      %v2673 = vand.u32 %v2672, 4294901760
      %2674 = vmatprep.subr.mxu0 %v2673
      %v2675 = vand.u32 %v2346, 4294901760
      %v2676 = vsub.f32 %v2346, %v2675
      %v2677 = vand.u32 %v2676, 4294901760
      %v2678 = vsub.f32 %v2676, %v2677
      %v2679 = vand.u32 %v2678, 4294901760
      %2680 = vmatpush1.msra.mxu0 %v2679
      %v2681 = vand.u32 %v2349, 4294901760
      %v2682 = vsub.f32 %v2349, %v2681
      %v2683 = vand.u32 %v2682, 4294901760
      %v2684 = vsub.f32 %v2682, %v2683
      %v2685 = vand.u32 %v2684, 4294901760
      %2686 = vmatprep.subr.mxu0 %v2685
      %v2687 = vand.u32 %v2348, 4294901760
      %v2688 = vsub.f32 %v2348, %v2687
      %v2689 = vand.u32 %v2688, 4294901760
      %v2690 = vsub.f32 %v2688, %v2689
      %v2691 = vand.u32 %v2690, 4294901760
      %2692 = vmatpush1.msra.mxu0 %v2691
      %v2693 = vand.u32 %v2351, 4294901760
      %v2694 = vsub.f32 %v2351, %v2693
      %v2695 = vand.u32 %v2694, 4294901760
      %v2696 = vsub.f32 %v2694, %v2695
      %v2697 = vand.u32 %v2696, 4294901760
      %2698 = vmatprep.subr.mxu0 %v2697
      %v2699 = vand.u32 %v2350, 4294901760
      %v2700 = vsub.f32 %v2350, %v2699
      %v2701 = vand.u32 %v2700, 4294901760
      %v2702 = vsub.f32 %v2700, %v2701
      %v2703 = vand.u32 %v2702, 4294901760
      %2704 = vmatpush1.msra.mxu0 %v2703
      %v2705 = vand.u32 %v2353, 4294901760
      %v2706 = vsub.f32 %v2353, %v2705
      %v2707 = vand.u32 %v2706, 4294901760
      %v2708 = vsub.f32 %v2706, %v2707
      %v2709 = vand.u32 %v2708, 4294901760
      %2710 = vmatprep.subr.mxu0 %v2709
      %v2711 = vand.u32 %v2352, 4294901760
      %v2712 = vsub.f32 %v2352, %v2711
      %v2713 = vand.u32 %v2712, 4294901760
      %v2714 = vsub.f32 %v2712, %v2713
      %v2715 = vand.u32 %v2714, 4294901760
      %2716 = vmatpush1.msra.mxu0 %v2715
      %v2717 = vand.u32 %v2355, 4294901760
      %v2718 = vsub.f32 %v2355, %v2717
      %v2719 = vand.u32 %v2718, 4294901760
      %v2720 = vsub.f32 %v2718, %v2719
      %v2721 = vand.u32 %v2720, 4294901760
      %2722 = vmatprep.subr.mxu0 %v2721
      %v2723 = vand.u32 %v2354, 4294901760
      %v2724 = vsub.f32 %v2354, %v2723
      %v2725 = vand.u32 %v2724, 4294901760
      %v2726 = vsub.f32 %v2724, %v2725
      %v2727 = vand.u32 %v2726, 4294901760
      %2728 = vmatpush1.msra.mxu0 %v2727
      %v2729 = vand.u32 %v2357, 4294901760
      %v2730 = vsub.f32 %v2357, %v2729
      %v2731 = vand.u32 %v2730, 4294901760
      %v2732 = vsub.f32 %v2730, %v2731
      %v2733 = vand.u32 %v2732, 4294901760
      %2734 = vmatprep.subr.mxu0 %v2733
      %v2735 = vand.u32 %v2356, 4294901760
      %v2736 = vsub.f32 %v2356, %v2735
      %v2737 = vand.u32 %v2736, 4294901760
      %v2738 = vsub.f32 %v2736, %v2737
      %v2739 = vand.u32 %v2738, 4294901760
      %2740 = vmatpush1.msra.mxu0 %v2739
      %v2741 = vand.u32 %v2359, 4294901760
      %v2742 = vsub.f32 %v2359, %v2741
      %v2743 = vand.u32 %v2742, 4294901760
      %v2744 = vsub.f32 %v2742, %v2743
      %v2745 = vand.u32 %v2744, 4294901760
      %2746 = vmatprep.subr.mxu0 %v2745
      %v2747 = vand.u32 %v2358, 4294901760
      %v2748 = vsub.f32 %v2358, %v2747
      %v2749 = vand.u32 %v2748, 4294901760
      %v2750 = vsub.f32 %v2748, %v2749
      %v2751 = vand.u32 %v2750, 4294901760
      %2752 = vmatpush1.msra.mxu0 %v2751
      %v2753 = vand.u32 %v2361, 4294901760
      %v2754 = vsub.f32 %v2361, %v2753
      %v2755 = vand.u32 %v2754, 4294901760
      %v2756 = vsub.f32 %v2754, %v2755
      %v2757 = vand.u32 %v2756, 4294901760
      %2758 = vmatprep.subr.mxu0 %v2757
      %v2759 = vand.u32 %v2360, 4294901760
      %v2760 = vsub.f32 %v2360, %v2759
      %v2761 = vand.u32 %v2760, 4294901760
      %v2762 = vsub.f32 %v2760, %v2761
      %v2763 = vand.u32 %v2762, 4294901760
      %2764 = vmatpush1.msra.mxu0 %v2763
      %v2765 = vand.u32 %v2363, 4294901760
      %v2766 = vsub.f32 %v2363, %v2765
      %v2767 = vand.u32 %v2766, 4294901760
      %v2768 = vsub.f32 %v2766, %v2767
      %v2769 = vand.u32 %v2768, 4294901760
      %2770 = vmatprep.subr.mxu0 %v2769
      %v2771 = vand.u32 %v2362, 4294901760
      %v2772 = vsub.f32 %v2362, %v2771
      %v2773 = vand.u32 %v2772, 4294901760
      %v2774 = vsub.f32 %v2772, %v2773
      %v2775 = vand.u32 %v2774, 4294901760
      %2776 = vmatpush1.msra.mxu0 %v2775
      %v2777 = vand.u32 %v2365, 4294901760
      %v2778 = vsub.f32 %v2365, %v2777
      %v2779 = vand.u32 %v2778, 4294901760
      %v2780 = vsub.f32 %v2778, %v2779
      %v2781 = vand.u32 %v2780, 4294901760
      %2782 = vmatprep.subr.mxu0 %v2781
      %v2783 = vand.u32 %v2364, 4294901760
      %v2784 = vsub.f32 %v2364, %v2783
      %v2785 = vand.u32 %v2784, 4294901760
      %v2786 = vsub.f32 %v2784, %v2785
      %v2787 = vand.u32 %v2786, 4294901760
      %2788 = vmatpush1.msra.mxu0 %v2787
      %v2789 = vand.u32 %v2367, 4294901760
      %v2790 = vsub.f32 %v2367, %v2789
      %v2791 = vand.u32 %v2790, 4294901760
      %v2792 = vsub.f32 %v2790, %v2791
      %v2793 = vand.u32 %v2792, 4294901760
      %2794 = vmatprep.subr.mxu0 %v2793
      %v2795 = vand.u32 %v2366, 4294901760
      %v2796 = vsub.f32 %v2366, %v2795
      %v2797 = vand.u32 %v2796, 4294901760
      %v2798 = vsub.f32 %v2796, %v2797
      %v2799 = vand.u32 %v2798, 4294901760
      %2800 = vmatpush1.msra.mxu0 %v2799
      %v2801 = vand.u32 %v2369, 4294901760
      %v2802 = vsub.f32 %v2369, %v2801
      %v2803 = vand.u32 %v2802, 4294901760
      %v2804 = vsub.f32 %v2802, %v2803
      %v2805 = vand.u32 %v2804, 4294901760
      %2806 = vmatprep.subr.mxu0 %v2805
      %v2807 = vand.u32 %v2368, 4294901760
      %v2808 = vsub.f32 %v2368, %v2807
      %v2809 = vand.u32 %v2808, 4294901760
      %v2810 = vsub.f32 %v2808, %v2809
      %v2811 = vand.u32 %v2810, 4294901760
      %2812 = vmatpush1.msra.mxu0 %v2811
      %v2813 = vand.u32 %v2371, 4294901760
      %v2814 = vsub.f32 %v2371, %v2813
      %v2815 = vand.u32 %v2814, 4294901760
      %v2816 = vsub.f32 %v2814, %v2815
      %v2817 = vand.u32 %v2816, 4294901760
      %2818 = vmatprep.subr.mxu0 %v2817
      %v2819 = vand.u32 %v2370, 4294901760
      %v2820 = vsub.f32 %v2370, %v2819
      %v2821 = vand.u32 %v2820, 4294901760
      %v2822 = vsub.f32 %v2820, %v2821
      %v2823 = vand.u32 %v2822, 4294901760
      %2824 = vmatpush1.msra.mxu0 %v2823
      %v2825 = vand.u32 %v2373, 4294901760
      %v2826 = vsub.f32 %v2373, %v2825
      %v2827 = vand.u32 %v2826, 4294901760
      %v2828 = vsub.f32 %v2826, %v2827
      %v2829 = vand.u32 %v2828, 4294901760
      %2830 = vmatprep.subr.mxu0 %v2829
      %v2831 = vand.u32 %v2372, 4294901760
      %v2832 = vsub.f32 %v2372, %v2831
      %v2833 = vand.u32 %v2832, 4294901760
      %v2834 = vsub.f32 %v2832, %v2833
      %v2835 = vand.u32 %v2834, 4294901760
      %2836 = vmatpush1.msra.mxu0 %v2835
      %v2837 = vand.u32 %v2375, 4294901760
      %v2838 = vsub.f32 %v2375, %v2837
      %v2839 = vand.u32 %v2838, 4294901760
      %v2840 = vsub.f32 %v2838, %v2839
      %v2841 = vand.u32 %v2840, 4294901760
      %2842 = vmatprep.subr.mxu0 %v2841
      %v2843 = vand.u32 %v2374, 4294901760
      %v2844 = vsub.f32 %v2374, %v2843
      %v2845 = vand.u32 %v2844, 4294901760
      %v2846 = vsub.f32 %v2844, %v2845
      %v2847 = vand.u32 %v2846, 4294901760
      %2848 = vmatpush1.msra.mxu0 %v2847
      %v2849 = vand.u32 %v2377, 4294901760
      %v2850 = vsub.f32 %v2377, %v2849
      %v2851 = vand.u32 %v2850, 4294901760
      %v2852 = vsub.f32 %v2850, %v2851
      %v2853 = vand.u32 %v2852, 4294901760
      %2854 = vmatprep.subr.mxu0 %v2853
      %v2855 = vand.u32 %v2376, 4294901760
      %v2856 = vsub.f32 %v2376, %v2855
      %v2857 = vand.u32 %v2856, 4294901760
      %v2858 = vsub.f32 %v2856, %v2857
      %v2859 = vand.u32 %v2858, 4294901760
      %2860 = vmatpush1.msra.mxu0 %v2859
      %v2861 = vand.u32 %v2379, 4294901760
      %v2862 = vsub.f32 %v2379, %v2861
      %v2863 = vand.u32 %v2862, 4294901760
      %v2864 = vsub.f32 %v2862, %v2863
      %v2865 = vand.u32 %v2864, 4294901760
      %2866 = vmatprep.subr.mxu0 %v2865
      %v2867 = vand.u32 %v2378, 4294901760
      %v2868 = vsub.f32 %v2378, %v2867
      %v2869 = vand.u32 %v2868, 4294901760
      %v2870 = vsub.f32 %v2868, %v2869
      %v2871 = vand.u32 %v2870, 4294901760
      %2872 = vmatpush1.msra.mxu0 %v2871
      %v2873 = vand.u32 %v2381, 4294901760
      %v2874 = vsub.f32 %v2381, %v2873
      %v2875 = vand.u32 %v2874, 4294901760
      %v2876 = vsub.f32 %v2874, %v2875
      %v2877 = vand.u32 %v2876, 4294901760
      %2878 = vmatprep.subr.mxu0 %v2877
      %v2879 = vand.u32 %v2380, 4294901760
      %v2880 = vsub.f32 %v2380, %v2879
      %v2881 = vand.u32 %v2880, 4294901760
      %v2882 = vsub.f32 %v2880, %v2881
      %v2883 = vand.u32 %v2882, 4294901760
      %2884 = vmatpush1.msra.mxu0 %v2883
      %v2885 = vand.u32 %v2383, 4294901760
      %v2886 = vsub.f32 %v2383, %v2885
      %v2887 = vand.u32 %v2886, 4294901760
      %v2888 = vsub.f32 %v2886, %v2887
      %v2889 = vand.u32 %v2888, 4294901760
      %2890 = vmatprep.subr.mxu0 %v2889
      %v2891 = vand.u32 %v2382, 4294901760
      %v2892 = vsub.f32 %v2382, %v2891
      %v2893 = vand.u32 %v2892, 4294901760
      %v2894 = vsub.f32 %v2892, %v2893
      %v2895 = vand.u32 %v2894, 4294901760
      %2896 = vmatpush1.msra.mxu0 %v2895
      %v2897 = vand.u32 %v2385, 4294901760
      %v2898 = vsub.f32 %v2385, %v2897
      %v2899 = vand.u32 %v2898, 4294901760
      %v2900 = vsub.f32 %v2898, %v2899
      %v2901 = vand.u32 %v2900, 4294901760
      %2902 = vmatprep.subr.mxu0 %v2901
      %v2903 = vand.u32 %v2384, 4294901760
      %v2904 = vsub.f32 %v2384, %v2903
      %v2905 = vand.u32 %v2904, 4294901760
      %v2906 = vsub.f32 %v2904, %v2905
      %v2907 = vand.u32 %v2906, 4294901760
      %2908 = vmatpush1.msra.mxu0 %v2907
      %v2909 = vand.u32 %v2387, 4294901760
      %v2910 = vsub.f32 %v2387, %v2909
      %v2911 = vand.u32 %v2910, 4294901760
      %v2912 = vsub.f32 %v2910, %v2911
      %v2913 = vand.u32 %v2912, 4294901760
      %2914 = vmatprep.subr.mxu0 %v2913
      %v2915 = vand.u32 %v2386, 4294901760
      %v2916 = vsub.f32 %v2386, %v2915
      %v2917 = vand.u32 %v2916, 4294901760
      %v2918 = vsub.f32 %v2916, %v2917
      %v2919 = vand.u32 %v2918, 4294901760
      %2920 = vmatpush1.msra.mxu0 %v2919
      %v2921 = vand.u32 %v2389, 4294901760
      %v2922 = vsub.f32 %v2389, %v2921
      %v2923 = vand.u32 %v2922, 4294901760
      %v2924 = vsub.f32 %v2922, %v2923
      %v2925 = vand.u32 %v2924, 4294901760
      %2926 = vmatprep.subr.mxu0 %v2925
      %v2927 = vand.u32 %v2388, 4294901760
      %v2928 = vsub.f32 %v2388, %v2927
      %v2929 = vand.u32 %v2928, 4294901760
      %v2930 = vsub.f32 %v2928, %v2929
      %v2931 = vand.u32 %v2930, 4294901760
      %2932 = vmatpush1.msra.mxu0 %v2931
      %v2933 = vand.u32 %v2391, 4294901760
      %v2934 = vsub.f32 %v2391, %v2933
      %v2935 = vand.u32 %v2934, 4294901760
      %v2936 = vsub.f32 %v2934, %v2935
      %v2937 = vand.u32 %v2936, 4294901760
      %2938 = vmatprep.subr.mxu0 %v2937
      %v2939 = vand.u32 %v2390, 4294901760
      %v2940 = vsub.f32 %v2390, %v2939
      %v2941 = vand.u32 %v2940, 4294901760
      %v2942 = vsub.f32 %v2940, %v2941
      %v2943 = vand.u32 %v2942, 4294901760
      %2944 = vmatpush1.msra.mxu0 %v2943
      %v2945 = vand.u32 %v2393, 4294901760
      %v2946 = vsub.f32 %v2393, %v2945
      %v2947 = vand.u32 %v2946, 4294901760
      %v2948 = vsub.f32 %v2946, %v2947
      %v2949 = vand.u32 %v2948, 4294901760
      %2950 = vmatprep.subr.mxu0 %v2949
      %v2951 = vand.u32 %v2392, 4294901760
      %v2952 = vsub.f32 %v2392, %v2951
      %v2953 = vand.u32 %v2952, 4294901760
      %v2954 = vsub.f32 %v2952, %v2953
      %v2955 = vand.u32 %v2954, 4294901760
      %2956 = vmatpush1.msra.mxu0 %v2955
      %v2957 = vand.u32 %v2395, 4294901760
      %v2958 = vsub.f32 %v2395, %v2957
      %v2959 = vand.u32 %v2958, 4294901760
      %v2960 = vsub.f32 %v2958, %v2959
      %v2961 = vand.u32 %v2960, 4294901760
      %2962 = vmatprep.subr.mxu0 %v2961
      %v2963 = vand.u32 %v2394, 4294901760
      %v2964 = vsub.f32 %v2394, %v2963
      %v2965 = vand.u32 %v2964, 4294901760
      %v2966 = vsub.f32 %v2964, %v2965
      %v2967 = vand.u32 %v2966, 4294901760
      %2968 = vmatpush1.msra.mxu0 %v2967
      %v2969 = vand.u32 %v2397, 4294901760
      %v2970 = vsub.f32 %v2397, %v2969
      %v2971 = vand.u32 %v2970, 4294901760
      %v2972 = vsub.f32 %v2970, %v2971
      %v2973 = vand.u32 %v2972, 4294901760
      %2974 = vmatprep.subr.mxu0 %v2973
      %v2975 = vand.u32 %v2396, 4294901760
      %v2976 = vsub.f32 %v2396, %v2975
      %v2977 = vand.u32 %v2976, 4294901760
      %v2978 = vsub.f32 %v2976, %v2977
      %v2979 = vand.u32 %v2978, 4294901760
      %2980 = vmatpush1.msra.mxu0 %v2979
      %v2981 = vand.u32 %v2399, 4294901760
      %v2982 = vsub.f32 %v2399, %v2981
      %v2983 = vand.u32 %v2982, 4294901760
      %v2984 = vsub.f32 %v2982, %v2983
      %v2985 = vand.u32 %v2984, 4294901760
      %2986 = vmatprep.subr.mxu0 %v2985
      %v2987 = vand.u32 %v2398, 4294901760
      %v2988 = vsub.f32 %v2398, %v2987
      %v2989 = vand.u32 %v2988, 4294901760
      %v2990 = vsub.f32 %v2988, %v2989
      %v2991 = vand.u32 %v2990, 4294901760
      %2992 = vmatpush1.msra.mxu0 %v2991
      %v2993 = vand.u32 %v2317, 4294901760
      %2994 = vmatprep.mubr.f32.mxu0 %v2993
      %v2995 = vand.u32 %v2316, 4294901760
      %2996 = vmatmul.mubr.f32.gmra.mrb[0].mxu0 %v2995
      %v2997 = vpop.f32.mrb[0].mxu0
      %v2998 = vadd.f32 %v2605, %v2997
      %v2999 = vpop.f32.mrb[0].mxu0
      %v3000 = vadd.f32 %v2607, %v2999
      %3001 = vdwg.mxu0
      %v3002 = vand.u32 %v2337, 4294901760
      %v3003 = vsub.f32 %v2337, %v3002
      %3004 = vmatprep.subr.mxu0 %v3003
      %v3005 = vand.u32 %v2336, 4294901760
      %v3006 = vsub.f32 %v2336, %v3005
      %3007 = vmatpush1.msra.mxu0 %v3006
      %v3008 = vand.u32 %v2339, 4294901760
      %v3009 = vsub.f32 %v2339, %v3008
      %3010 = vmatprep.subr.mxu0 %v3009
      %v3011 = vand.u32 %v2338, 4294901760
      %v3012 = vsub.f32 %v2338, %v3011
      %3013 = vmatpush1.msra.mxu0 %v3012
      %v3014 = vand.u32 %v2341, 4294901760
      %v3015 = vsub.f32 %v2341, %v3014
      %3016 = vmatprep.subr.mxu0 %v3015
      %v3017 = vand.u32 %v2340, 4294901760
      %v3018 = vsub.f32 %v2340, %v3017
      %3019 = vmatpush1.msra.mxu0 %v3018
      %v3020 = vand.u32 %v2343, 4294901760
      %v3021 = vsub.f32 %v2343, %v3020
      %3022 = vmatprep.subr.mxu0 %v3021
      %v3023 = vand.u32 %v2342, 4294901760
      %v3024 = vsub.f32 %v2342, %v3023
      %3025 = vmatpush1.msra.mxu0 %v3024
      %v3026 = vand.u32 %v2345, 4294901760
      %v3027 = vsub.f32 %v2345, %v3026
      %3028 = vmatprep.subr.mxu0 %v3027
      %v3029 = vand.u32 %v2344, 4294901760
      %v3030 = vsub.f32 %v2344, %v3029
      %3031 = vmatpush1.msra.mxu0 %v3030
      %v3032 = vand.u32 %v2347, 4294901760
      %v3033 = vsub.f32 %v2347, %v3032
      %3034 = vmatprep.subr.mxu0 %v3033
      %v3035 = vand.u32 %v2346, 4294901760
      %v3036 = vsub.f32 %v2346, %v3035
      %3037 = vmatpush1.msra.mxu0 %v3036
      %v3038 = vand.u32 %v2349, 4294901760
      %v3039 = vsub.f32 %v2349, %v3038
      %3040 = vmatprep.subr.mxu0 %v3039
      %v3041 = vand.u32 %v2348, 4294901760
      %v3042 = vsub.f32 %v2348, %v3041
      %3043 = vmatpush1.msra.mxu0 %v3042
      %v3044 = vand.u32 %v2351, 4294901760
      %v3045 = vsub.f32 %v2351, %v3044
      %3046 = vmatprep.subr.mxu0 %v3045
      %v3047 = vand.u32 %v2350, 4294901760
      %v3048 = vsub.f32 %v2350, %v3047
      %3049 = vmatpush1.msra.mxu0 %v3048
      %v3050 = vand.u32 %v2353, 4294901760
      %v3051 = vsub.f32 %v2353, %v3050
      %3052 = vmatprep.subr.mxu0 %v3051
      %v3053 = vand.u32 %v2352, 4294901760
      %v3054 = vsub.f32 %v2352, %v3053
      %3055 = vmatpush1.msra.mxu0 %v3054
      %v3056 = vand.u32 %v2355, 4294901760
      %v3057 = vsub.f32 %v2355, %v3056
      %3058 = vmatprep.subr.mxu0 %v3057
      %v3059 = vand.u32 %v2354, 4294901760
      %v3060 = vsub.f32 %v2354, %v3059
      %3061 = vmatpush1.msra.mxu0 %v3060
      %v3062 = vand.u32 %v2357, 4294901760
      %v3063 = vsub.f32 %v2357, %v3062
      %3064 = vmatprep.subr.mxu0 %v3063
      %v3065 = vand.u32 %v2356, 4294901760
      %v3066 = vsub.f32 %v2356, %v3065
      %3067 = vmatpush1.msra.mxu0 %v3066
      %v3068 = vand.u32 %v2359, 4294901760
      %v3069 = vsub.f32 %v2359, %v3068
      %3070 = vmatprep.subr.mxu0 %v3069
      %v3071 = vand.u32 %v2358, 4294901760
      %v3072 = vsub.f32 %v2358, %v3071
      %3073 = vmatpush1.msra.mxu0 %v3072
      %v3074 = vand.u32 %v2361, 4294901760
      %v3075 = vsub.f32 %v2361, %v3074
      %3076 = vmatprep.subr.mxu0 %v3075
      %v3077 = vand.u32 %v2360, 4294901760
      %v3078 = vsub.f32 %v2360, %v3077
      %3079 = vmatpush1.msra.mxu0 %v3078
      %v3080 = vand.u32 %v2363, 4294901760
      %v3081 = vsub.f32 %v2363, %v3080
      %3082 = vmatprep.subr.mxu0 %v3081
      %v3083 = vand.u32 %v2362, 4294901760
      %v3084 = vsub.f32 %v2362, %v3083
      %3085 = vmatpush1.msra.mxu0 %v3084
      %v3086 = vand.u32 %v2365, 4294901760
      %v3087 = vsub.f32 %v2365, %v3086
      %3088 = vmatprep.subr.mxu0 %v3087
      %v3089 = vand.u32 %v2364, 4294901760
      %v3090 = vsub.f32 %v2364, %v3089
      %3091 = vmatpush1.msra.mxu0 %v3090
      %v3092 = vand.u32 %v2367, 4294901760
      %v3093 = vsub.f32 %v2367, %v3092
      %3094 = vmatprep.subr.mxu0 %v3093
      %v3095 = vand.u32 %v2366, 4294901760
      %v3096 = vsub.f32 %v2366, %v3095
      %3097 = vmatpush1.msra.mxu0 %v3096
      %v3098 = vand.u32 %v2369, 4294901760
      %v3099 = vsub.f32 %v2369, %v3098
      %3100 = vmatprep.subr.mxu0 %v3099
      %v3101 = vand.u32 %v2368, 4294901760
      %v3102 = vsub.f32 %v2368, %v3101
      %3103 = vmatpush1.msra.mxu0 %v3102
      %v3104 = vand.u32 %v2371, 4294901760
      %v3105 = vsub.f32 %v2371, %v3104
      %3106 = vmatprep.subr.mxu0 %v3105
      %v3107 = vand.u32 %v2370, 4294901760
      %v3108 = vsub.f32 %v2370, %v3107
      %3109 = vmatpush1.msra.mxu0 %v3108
      %v3110 = vand.u32 %v2373, 4294901760
      %v3111 = vsub.f32 %v2373, %v3110
      %3112 = vmatprep.subr.mxu0 %v3111
      %v3113 = vand.u32 %v2372, 4294901760
      %v3114 = vsub.f32 %v2372, %v3113
      %3115 = vmatpush1.msra.mxu0 %v3114
      %v3116 = vand.u32 %v2375, 4294901760
      %v3117 = vsub.f32 %v2375, %v3116
      %3118 = vmatprep.subr.mxu0 %v3117
      %v3119 = vand.u32 %v2374, 4294901760
      %v3120 = vsub.f32 %v2374, %v3119
      %3121 = vmatpush1.msra.mxu0 %v3120
      %v3122 = vand.u32 %v2377, 4294901760
      %v3123 = vsub.f32 %v2377, %v3122
      %3124 = vmatprep.subr.mxu0 %v3123
      %v3125 = vand.u32 %v2376, 4294901760
      %v3126 = vsub.f32 %v2376, %v3125
      %3127 = vmatpush1.msra.mxu0 %v3126
      %v3128 = vand.u32 %v2379, 4294901760
      %v3129 = vsub.f32 %v2379, %v3128
      %3130 = vmatprep.subr.mxu0 %v3129
      %v3131 = vand.u32 %v2378, 4294901760
      %v3132 = vsub.f32 %v2378, %v3131
      %3133 = vmatpush1.msra.mxu0 %v3132
      %v3134 = vand.u32 %v2381, 4294901760
      %v3135 = vsub.f32 %v2381, %v3134
      %3136 = vmatprep.subr.mxu0 %v3135
      %v3137 = vand.u32 %v2380, 4294901760
      %v3138 = vsub.f32 %v2380, %v3137
      %3139 = vmatpush1.msra.mxu0 %v3138
      %v3140 = vand.u32 %v2383, 4294901760
      %v3141 = vsub.f32 %v2383, %v3140
      %3142 = vmatprep.subr.mxu0 %v3141
      %v3143 = vand.u32 %v2382, 4294901760
      %v3144 = vsub.f32 %v2382, %v3143
      %3145 = vmatpush1.msra.mxu0 %v3144
      %v3146 = vand.u32 %v2385, 4294901760
      %v3147 = vsub.f32 %v2385, %v3146
      %3148 = vmatprep.subr.mxu0 %v3147
      %v3149 = vand.u32 %v2384, 4294901760
      %v3150 = vsub.f32 %v2384, %v3149
      %3151 = vmatpush1.msra.mxu0 %v3150
      %v3152 = vand.u32 %v2387, 4294901760
      %v3153 = vsub.f32 %v2387, %v3152
      %3154 = vmatprep.subr.mxu0 %v3153
      %v3155 = vand.u32 %v2386, 4294901760
      %v3156 = vsub.f32 %v2386, %v3155
      %3157 = vmatpush1.msra.mxu0 %v3156
      %v3158 = vand.u32 %v2389, 4294901760
      %v3159 = vsub.f32 %v2389, %v3158
      %3160 = vmatprep.subr.mxu0 %v3159
      %v3161 = vand.u32 %v2388, 4294901760
      %v3162 = vsub.f32 %v2388, %v3161
      %3163 = vmatpush1.msra.mxu0 %v3162
      %v3164 = vand.u32 %v2391, 4294901760
      %v3165 = vsub.f32 %v2391, %v3164
      %3166 = vmatprep.subr.mxu0 %v3165
      %v3167 = vand.u32 %v2390, 4294901760
      %v3168 = vsub.f32 %v2390, %v3167
      %3169 = vmatpush1.msra.mxu0 %v3168
      %v3170 = vand.u32 %v2393, 4294901760
      %v3171 = vsub.f32 %v2393, %v3170
      %3172 = vmatprep.subr.mxu0 %v3171
      %v3173 = vand.u32 %v2392, 4294901760
      %v3174 = vsub.f32 %v2392, %v3173
      %3175 = vmatpush1.msra.mxu0 %v3174
      %v3176 = vand.u32 %v2395, 4294901760
      %v3177 = vsub.f32 %v2395, %v3176
      %3178 = vmatprep.subr.mxu0 %v3177
      %v3179 = vand.u32 %v2394, 4294901760
      %v3180 = vsub.f32 %v2394, %v3179
      %3181 = vmatpush1.msra.mxu0 %v3180
      %v3182 = vand.u32 %v2397, 4294901760
      %v3183 = vsub.f32 %v2397, %v3182
      %3184 = vmatprep.subr.mxu0 %v3183
      %v3185 = vand.u32 %v2396, 4294901760
      %v3186 = vsub.f32 %v2396, %v3185
      %3187 = vmatpush1.msra.mxu0 %v3186
      %v3188 = vand.u32 %v2399, 4294901760
      %v3189 = vsub.f32 %v2399, %v3188
      %3190 = vmatprep.subr.mxu0 %v3189
      %v3191 = vand.u32 %v2398, 4294901760
      %v3192 = vsub.f32 %v2398, %v3191
      %3193 = vmatpush1.msra.mxu0 %v3192
      %v3194 = vand.u32 %v2317, 4294901760
      %v3195 = vsub.f32 %v2317, %v3194
      %3196 = vmatprep.mubr.f32.mxu0 %v3195
      %v3197 = vand.u32 %v2316, 4294901760
      %v3198 = vsub.f32 %v2316, %v3197
      %3199 = vmatmul.mubr.f32.gmra.mrb[0].mxu0 %v3198
      %v3200 = vpop.f32.mrb[0].mxu0
      %v3201 = vadd.f32 %v2998, %v3200
      %v3202 = vpop.f32.mrb[0].mxu0
      %v3203 = vadd.f32 %v3000, %v3202
      %3204 = vdwg.mxu0
      %v3205 = vand.u32 %v2337, 4294901760
      %3206 = vmatprep.subr.mxu0 %v3205
      %v3207 = vand.u32 %v2336, 4294901760
      %3208 = vmatpush1.msra.mxu0 %v3207
      %v3209 = vand.u32 %v2339, 4294901760
      %3210 = vmatprep.subr.mxu0 %v3209
      %v3211 = vand.u32 %v2338, 4294901760
      %3212 = vmatpush1.msra.mxu0 %v3211
      %v3213 = vand.u32 %v2341, 4294901760
      %3214 = vmatprep.subr.mxu0 %v3213
      %v3215 = vand.u32 %v2340, 4294901760
      %3216 = vmatpush1.msra.mxu0 %v3215
      %v3217 = vand.u32 %v2343, 4294901760
      %3218 = vmatprep.subr.mxu0 %v3217
      %v3219 = vand.u32 %v2342, 4294901760
      %3220 = vmatpush1.msra.mxu0 %v3219
      %v3221 = vand.u32 %v2345, 4294901760
      %3222 = vmatprep.subr.mxu0 %v3221
      %v3223 = vand.u32 %v2344, 4294901760
      %3224 = vmatpush1.msra.mxu0 %v3223
      %v3225 = vand.u32 %v2347, 4294901760
      %3226 = vmatprep.subr.mxu0 %v3225
      %v3227 = vand.u32 %v2346, 4294901760
      %3228 = vmatpush1.msra.mxu0 %v3227
      %v3229 = vand.u32 %v2349, 4294901760
      %3230 = vmatprep.subr.mxu0 %v3229
      %v3231 = vand.u32 %v2348, 4294901760
      %3232 = vmatpush1.msra.mxu0 %v3231
      %v3233 = vand.u32 %v2351, 4294901760
      %3234 = vmatprep.subr.mxu0 %v3233
      %v3235 = vand.u32 %v2350, 4294901760
      %3236 = vmatpush1.msra.mxu0 %v3235
      %v3237 = vand.u32 %v2353, 4294901760
      %3238 = vmatprep.subr.mxu0 %v3237
      %v3239 = vand.u32 %v2352, 4294901760
      %3240 = vmatpush1.msra.mxu0 %v3239
      %v3241 = vand.u32 %v2355, 4294901760
      %3242 = vmatprep.subr.mxu0 %v3241
      %v3243 = vand.u32 %v2354, 4294901760
      %3244 = vmatpush1.msra.mxu0 %v3243
      %v3245 = vand.u32 %v2357, 4294901760
      %3246 = vmatprep.subr.mxu0 %v3245
      %v3247 = vand.u32 %v2356, 4294901760
      %3248 = vmatpush1.msra.mxu0 %v3247
      %v3249 = vand.u32 %v2359, 4294901760
      %3250 = vmatprep.subr.mxu0 %v3249
      %v3251 = vand.u32 %v2358, 4294901760
      %3252 = vmatpush1.msra.mxu0 %v3251
      %v3253 = vand.u32 %v2361, 4294901760
      %3254 = vmatprep.subr.mxu0 %v3253
      %v3255 = vand.u32 %v2360, 4294901760
      %3256 = vmatpush1.msra.mxu0 %v3255
      %v3257 = vand.u32 %v2363, 4294901760
      %3258 = vmatprep.subr.mxu0 %v3257
      %v3259 = vand.u32 %v2362, 4294901760
      %3260 = vmatpush1.msra.mxu0 %v3259
      %v3261 = vand.u32 %v2365, 4294901760
      %3262 = vmatprep.subr.mxu0 %v3261
      %v3263 = vand.u32 %v2364, 4294901760
      %3264 = vmatpush1.msra.mxu0 %v3263
      %v3265 = vand.u32 %v2367, 4294901760
      %3266 = vmatprep.subr.mxu0 %v3265
      %v3267 = vand.u32 %v2366, 4294901760
      %3268 = vmatpush1.msra.mxu0 %v3267
      %v3269 = vand.u32 %v2369, 4294901760
      %3270 = vmatprep.subr.mxu0 %v3269
      %v3271 = vand.u32 %v2368, 4294901760
      %3272 = vmatpush1.msra.mxu0 %v3271
      %v3273 = vand.u32 %v2371, 4294901760
      %3274 = vmatprep.subr.mxu0 %v3273
      %v3275 = vand.u32 %v2370, 4294901760
      %3276 = vmatpush1.msra.mxu0 %v3275
      %v3277 = vand.u32 %v2373, 4294901760
      %3278 = vmatprep.subr.mxu0 %v3277
      %v3279 = vand.u32 %v2372, 4294901760
      %3280 = vmatpush1.msra.mxu0 %v3279
      %v3281 = vand.u32 %v2375, 4294901760
      %3282 = vmatprep.subr.mxu0 %v3281
      %v3283 = vand.u32 %v2374, 4294901760
      %3284 = vmatpush1.msra.mxu0 %v3283
      %v3285 = vand.u32 %v2377, 4294901760
      %3286 = vmatprep.subr.mxu0 %v3285
      %v3287 = vand.u32 %v2376, 4294901760
      %3288 = vmatpush1.msra.mxu0 %v3287
      %v3289 = vand.u32 %v2379, 4294901760
      %3290 = vmatprep.subr.mxu0 %v3289
      %v3291 = vand.u32 %v2378, 4294901760
      %3292 = vmatpush1.msra.mxu0 %v3291
      %v3293 = vand.u32 %v2381, 4294901760
      %3294 = vmatprep.subr.mxu0 %v3293
      %v3295 = vand.u32 %v2380, 4294901760
      %3296 = vmatpush1.msra.mxu0 %v3295
      %v3297 = vand.u32 %v2383, 4294901760
      %3298 = vmatprep.subr.mxu0 %v3297
      %v3299 = vand.u32 %v2382, 4294901760
      %3300 = vmatpush1.msra.mxu0 %v3299
      %v3301 = vand.u32 %v2385, 4294901760
      %3302 = vmatprep.subr.mxu0 %v3301
      %v3303 = vand.u32 %v2384, 4294901760
      %3304 = vmatpush1.msra.mxu0 %v3303
      %v3305 = vand.u32 %v2387, 4294901760
      %3306 = vmatprep.subr.mxu0 %v3305
      %v3307 = vand.u32 %v2386, 4294901760
      %3308 = vmatpush1.msra.mxu0 %v3307
      %v3309 = vand.u32 %v2389, 4294901760
      %3310 = vmatprep.subr.mxu0 %v3309
      %v3311 = vand.u32 %v2388, 4294901760
      %3312 = vmatpush1.msra.mxu0 %v3311
      %v3313 = vand.u32 %v2391, 4294901760
      %3314 = vmatprep.subr.mxu0 %v3313
      %v3315 = vand.u32 %v2390, 4294901760
      %3316 = vmatpush1.msra.mxu0 %v3315
      %v3317 = vand.u32 %v2393, 4294901760
      %3318 = vmatprep.subr.mxu0 %v3317
      %v3319 = vand.u32 %v2392, 4294901760
      %3320 = vmatpush1.msra.mxu0 %v3319
      %v3321 = vand.u32 %v2395, 4294901760
      %3322 = vmatprep.subr.mxu0 %v3321
      %v3323 = vand.u32 %v2394, 4294901760
      %3324 = vmatpush1.msra.mxu0 %v3323
      %v3325 = vand.u32 %v2397, 4294901760
      %3326 = vmatprep.subr.mxu0 %v3325
      %v3327 = vand.u32 %v2396, 4294901760
      %3328 = vmatpush1.msra.mxu0 %v3327
      %v3329 = vand.u32 %v2399, 4294901760
      %3330 = vmatprep.subr.mxu0 %v3329
      %v3331 = vand.u32 %v2398, 4294901760
      %3332 = vmatpush1.msra.mxu0 %v3331
      %v3333 = vand.u32 %v2317, 4294901760
      %v3334 = vsub.f32 %v2317, %v3333
      %v3335 = vand.u32 %v3334, 4294901760
      %3336 = vmatprep.mubr.f32.mxu0 %v3335
      %v3337 = vand.u32 %v2316, 4294901760
      %v3338 = vsub.f32 %v2316, %v3337
      %v3339 = vand.u32 %v3338, 4294901760
      %3340 = vmatmul.mubr.f32.gmra.mrb[0].mxu0 %v3339
      %v3341 = vpop.f32.mrb[0].mxu0
      %v3342 = vadd.f32 %v3201, %v3341
      %v3343 = vpop.f32.mrb[0].mxu0
      %v3344 = vadd.f32 %v3203, %v3343
      %3345 = vdwg.mxu0
      %v3346 = vand.u32 %v2337, 4294901760
      %v3347 = vsub.f32 %v2337, %v3346
      %v3348 = vand.u32 %v3347, 4294901760
      %3349 = vmatprep.subr.mxu0 %v3348
      %v3350 = vand.u32 %v2336, 4294901760
      %v3351 = vsub.f32 %v2336, %v3350
      %v3352 = vand.u32 %v3351, 4294901760
      %3353 = vmatpush1.msra.mxu0 %v3352
      %v3354 = vand.u32 %v2339, 4294901760
      %v3355 = vsub.f32 %v2339, %v3354
      %v3356 = vand.u32 %v3355, 4294901760
      %3357 = vmatprep.subr.mxu0 %v3356
      %v3358 = vand.u32 %v2338, 4294901760
      %v3359 = vsub.f32 %v2338, %v3358
      %v3360 = vand.u32 %v3359, 4294901760
      %3361 = vmatpush1.msra.mxu0 %v3360
      %v3362 = vand.u32 %v2341, 4294901760
      %v3363 = vsub.f32 %v2341, %v3362
      %v3364 = vand.u32 %v3363, 4294901760
      %3365 = vmatprep.subr.mxu0 %v3364
      %v3366 = vand.u32 %v2340, 4294901760
      %v3367 = vsub.f32 %v2340, %v3366
      %v3368 = vand.u32 %v3367, 4294901760
      %3369 = vmatpush1.msra.mxu0 %v3368
      %v3370 = vand.u32 %v2343, 4294901760
      %v3371 = vsub.f32 %v2343, %v3370
      %v3372 = vand.u32 %v3371, 4294901760
      %3373 = vmatprep.subr.mxu0 %v3372
      %v3374 = vand.u32 %v2342, 4294901760
      %v3375 = vsub.f32 %v2342, %v3374
      %v3376 = vand.u32 %v3375, 4294901760
      %3377 = vmatpush1.msra.mxu0 %v3376
      %v3378 = vand.u32 %v2345, 4294901760
      %v3379 = vsub.f32 %v2345, %v3378
      %v3380 = vand.u32 %v3379, 4294901760
      %3381 = vmatprep.subr.mxu0 %v3380
      %v3382 = vand.u32 %v2344, 4294901760
      %v3383 = vsub.f32 %v2344, %v3382
      %v3384 = vand.u32 %v3383, 4294901760
      %3385 = vmatpush1.msra.mxu0 %v3384
      %v3386 = vand.u32 %v2347, 4294901760
      %v3387 = vsub.f32 %v2347, %v3386
      %v3388 = vand.u32 %v3387, 4294901760
      %3389 = vmatprep.subr.mxu0 %v3388
      %v3390 = vand.u32 %v2346, 4294901760
      %v3391 = vsub.f32 %v2346, %v3390
      %v3392 = vand.u32 %v3391, 4294901760
      %3393 = vmatpush1.msra.mxu0 %v3392
      %v3394 = vand.u32 %v2349, 4294901760
      %v3395 = vsub.f32 %v2349, %v3394
      %v3396 = vand.u32 %v3395, 4294901760
      %3397 = vmatprep.subr.mxu0 %v3396
      %v3398 = vand.u32 %v2348, 4294901760
      %v3399 = vsub.f32 %v2348, %v3398
      %v3400 = vand.u32 %v3399, 4294901760
      %3401 = vmatpush1.msra.mxu0 %v3400
      %v3402 = vand.u32 %v2351, 4294901760
      %v3403 = vsub.f32 %v2351, %v3402
      %v3404 = vand.u32 %v3403, 4294901760
      %3405 = vmatprep.subr.mxu0 %v3404
      %v3406 = vand.u32 %v2350, 4294901760
      %v3407 = vsub.f32 %v2350, %v3406
      %v3408 = vand.u32 %v3407, 4294901760
      %3409 = vmatpush1.msra.mxu0 %v3408
      %v3410 = vand.u32 %v2353, 4294901760
      %v3411 = vsub.f32 %v2353, %v3410
      %v3412 = vand.u32 %v3411, 4294901760
      %3413 = vmatprep.subr.mxu0 %v3412
      %v3414 = vand.u32 %v2352, 4294901760
      %v3415 = vsub.f32 %v2352, %v3414
      %v3416 = vand.u32 %v3415, 4294901760
      %3417 = vmatpush1.msra.mxu0 %v3416
      %v3418 = vand.u32 %v2355, 4294901760
      %v3419 = vsub.f32 %v2355, %v3418
      %v3420 = vand.u32 %v3419, 4294901760
      %3421 = vmatprep.subr.mxu0 %v3420
      %v3422 = vand.u32 %v2354, 4294901760
      %v3423 = vsub.f32 %v2354, %v3422
      %v3424 = vand.u32 %v3423, 4294901760
      %3425 = vmatpush1.msra.mxu0 %v3424
      %v3426 = vand.u32 %v2357, 4294901760
      %v3427 = vsub.f32 %v2357, %v3426
      %v3428 = vand.u32 %v3427, 4294901760
      %3429 = vmatprep.subr.mxu0 %v3428
      %v3430 = vand.u32 %v2356, 4294901760
      %v3431 = vsub.f32 %v2356, %v3430
      %v3432 = vand.u32 %v3431, 4294901760
      %3433 = vmatpush1.msra.mxu0 %v3432
      %v3434 = vand.u32 %v2359, 4294901760
      %v3435 = vsub.f32 %v2359, %v3434
      %v3436 = vand.u32 %v3435, 4294901760
      %3437 = vmatprep.subr.mxu0 %v3436
      %v3438 = vand.u32 %v2358, 4294901760
      %v3439 = vsub.f32 %v2358, %v3438
      %v3440 = vand.u32 %v3439, 4294901760
      %3441 = vmatpush1.msra.mxu0 %v3440
      %v3442 = vand.u32 %v2361, 4294901760
      %v3443 = vsub.f32 %v2361, %v3442
      %v3444 = vand.u32 %v3443, 4294901760
      %3445 = vmatprep.subr.mxu0 %v3444
      %v3446 = vand.u32 %v2360, 4294901760
      %v3447 = vsub.f32 %v2360, %v3446
      %v3448 = vand.u32 %v3447, 4294901760
      %3449 = vmatpush1.msra.mxu0 %v3448
      %v3450 = vand.u32 %v2363, 4294901760
      %v3451 = vsub.f32 %v2363, %v3450
      %v3452 = vand.u32 %v3451, 4294901760
      %3453 = vmatprep.subr.mxu0 %v3452
      %v3454 = vand.u32 %v2362, 4294901760
      %v3455 = vsub.f32 %v2362, %v3454
      %v3456 = vand.u32 %v3455, 4294901760
      %3457 = vmatpush1.msra.mxu0 %v3456
      %v3458 = vand.u32 %v2365, 4294901760
      %v3459 = vsub.f32 %v2365, %v3458
      %v3460 = vand.u32 %v3459, 4294901760
      %3461 = vmatprep.subr.mxu0 %v3460
      %v3462 = vand.u32 %v2364, 4294901760
      %v3463 = vsub.f32 %v2364, %v3462
      %v3464 = vand.u32 %v3463, 4294901760
      %3465 = vmatpush1.msra.mxu0 %v3464
      %v3466 = vand.u32 %v2367, 4294901760
      %v3467 = vsub.f32 %v2367, %v3466
      %v3468 = vand.u32 %v3467, 4294901760
      %3469 = vmatprep.subr.mxu0 %v3468
      %v3470 = vand.u32 %v2366, 4294901760
      %v3471 = vsub.f32 %v2366, %v3470
      %v3472 = vand.u32 %v3471, 4294901760
      %3473 = vmatpush1.msra.mxu0 %v3472
      %v3474 = vand.u32 %v2369, 4294901760
      %v3475 = vsub.f32 %v2369, %v3474
      %v3476 = vand.u32 %v3475, 4294901760
      %3477 = vmatprep.subr.mxu0 %v3476
      %v3478 = vand.u32 %v2368, 4294901760
      %v3479 = vsub.f32 %v2368, %v3478
      %v3480 = vand.u32 %v3479, 4294901760
      %3481 = vmatpush1.msra.mxu0 %v3480
      %v3482 = vand.u32 %v2371, 4294901760
      %v3483 = vsub.f32 %v2371, %v3482
      %v3484 = vand.u32 %v3483, 4294901760
      %3485 = vmatprep.subr.mxu0 %v3484
      %v3486 = vand.u32 %v2370, 4294901760
      %v3487 = vsub.f32 %v2370, %v3486
      %v3488 = vand.u32 %v3487, 4294901760
      %3489 = vmatpush1.msra.mxu0 %v3488
      %v3490 = vand.u32 %v2373, 4294901760
      %v3491 = vsub.f32 %v2373, %v3490
      %v3492 = vand.u32 %v3491, 4294901760
      %3493 = vmatprep.subr.mxu0 %v3492
      %v3494 = vand.u32 %v2372, 4294901760
      %v3495 = vsub.f32 %v2372, %v3494
      %v3496 = vand.u32 %v3495, 4294901760
      %3497 = vmatpush1.msra.mxu0 %v3496
      %v3498 = vand.u32 %v2375, 4294901760
      %v3499 = vsub.f32 %v2375, %v3498
      %v3500 = vand.u32 %v3499, 4294901760
      %3501 = vmatprep.subr.mxu0 %v3500
      %v3502 = vand.u32 %v2374, 4294901760
      %v3503 = vsub.f32 %v2374, %v3502
      %v3504 = vand.u32 %v3503, 4294901760
      %3505 = vmatpush1.msra.mxu0 %v3504
      %v3506 = vand.u32 %v2377, 4294901760
      %v3507 = vsub.f32 %v2377, %v3506
      %v3508 = vand.u32 %v3507, 4294901760
      %3509 = vmatprep.subr.mxu0 %v3508
      %v3510 = vand.u32 %v2376, 4294901760
      %v3511 = vsub.f32 %v2376, %v3510
      %v3512 = vand.u32 %v3511, 4294901760
      %3513 = vmatpush1.msra.mxu0 %v3512
      %v3514 = vand.u32 %v2379, 4294901760
      %v3515 = vsub.f32 %v2379, %v3514
      %v3516 = vand.u32 %v3515, 4294901760
      %3517 = vmatprep.subr.mxu0 %v3516
      %v3518 = vand.u32 %v2378, 4294901760
      %v3519 = vsub.f32 %v2378, %v3518
      %v3520 = vand.u32 %v3519, 4294901760
      %3521 = vmatpush1.msra.mxu0 %v3520
      %v3522 = vand.u32 %v2381, 4294901760
      %v3523 = vsub.f32 %v2381, %v3522
      %v3524 = vand.u32 %v3523, 4294901760
      %3525 = vmatprep.subr.mxu0 %v3524
      %v3526 = vand.u32 %v2380, 4294901760
      %v3527 = vsub.f32 %v2380, %v3526
      %v3528 = vand.u32 %v3527, 4294901760
      %3529 = vmatpush1.msra.mxu0 %v3528
      %v3530 = vand.u32 %v2383, 4294901760
      %v3531 = vsub.f32 %v2383, %v3530
      %v3532 = vand.u32 %v3531, 4294901760
      %3533 = vmatprep.subr.mxu0 %v3532
      %v3534 = vand.u32 %v2382, 4294901760
      %v3535 = vsub.f32 %v2382, %v3534
      %v3536 = vand.u32 %v3535, 4294901760
      %3537 = vmatpush1.msra.mxu0 %v3536
      %v3538 = vand.u32 %v2385, 4294901760
      %v3539 = vsub.f32 %v2385, %v3538
      %v3540 = vand.u32 %v3539, 4294901760
      %3541 = vmatprep.subr.mxu0 %v3540
      %v3542 = vand.u32 %v2384, 4294901760
      %v3543 = vsub.f32 %v2384, %v3542
      %v3544 = vand.u32 %v3543, 4294901760
      %3545 = vmatpush1.msra.mxu0 %v3544
      %v3546 = vand.u32 %v2387, 4294901760
      %v3547 = vsub.f32 %v2387, %v3546
      %v3548 = vand.u32 %v3547, 4294901760
      %3549 = vmatprep.subr.mxu0 %v3548
      %v3550 = vand.u32 %v2386, 4294901760
      %v3551 = vsub.f32 %v2386, %v3550
      %v3552 = vand.u32 %v3551, 4294901760
      %3553 = vmatpush1.msra.mxu0 %v3552
      %v3554 = vand.u32 %v2389, 4294901760
      %v3555 = vsub.f32 %v2389, %v3554
      %v3556 = vand.u32 %v3555, 4294901760
      %3557 = vmatprep.subr.mxu0 %v3556
      %v3558 = vand.u32 %v2388, 4294901760
      %v3559 = vsub.f32 %v2388, %v3558
      %v3560 = vand.u32 %v3559, 4294901760
      %3561 = vmatpush1.msra.mxu0 %v3560
      %v3562 = vand.u32 %v2391, 4294901760
      %v3563 = vsub.f32 %v2391, %v3562
      %v3564 = vand.u32 %v3563, 4294901760
      %3565 = vmatprep.subr.mxu0 %v3564
      %v3566 = vand.u32 %v2390, 4294901760
      %v3567 = vsub.f32 %v2390, %v3566
      %v3568 = vand.u32 %v3567, 4294901760
      %3569 = vmatpush1.msra.mxu0 %v3568
      %v3570 = vand.u32 %v2393, 4294901760
      %v3571 = vsub.f32 %v2393, %v3570
      %v3572 = vand.u32 %v3571, 4294901760
      %3573 = vmatprep.subr.mxu0 %v3572
      %v3574 = vand.u32 %v2392, 4294901760
      %v3575 = vsub.f32 %v2392, %v3574
      %v3576 = vand.u32 %v3575, 4294901760
      %3577 = vmatpush1.msra.mxu0 %v3576
      %v3578 = vand.u32 %v2395, 4294901760
      %v3579 = vsub.f32 %v2395, %v3578
      %v3580 = vand.u32 %v3579, 4294901760
      %3581 = vmatprep.subr.mxu0 %v3580
      %v3582 = vand.u32 %v2394, 4294901760
      %v3583 = vsub.f32 %v2394, %v3582
      %v3584 = vand.u32 %v3583, 4294901760
      %3585 = vmatpush1.msra.mxu0 %v3584
      %v3586 = vand.u32 %v2397, 4294901760
      %v3587 = vsub.f32 %v2397, %v3586
      %v3588 = vand.u32 %v3587, 4294901760
      %3589 = vmatprep.subr.mxu0 %v3588
      %v3590 = vand.u32 %v2396, 4294901760
      %v3591 = vsub.f32 %v2396, %v3590
      %v3592 = vand.u32 %v3591, 4294901760
      %3593 = vmatpush1.msra.mxu0 %v3592
      %v3594 = vand.u32 %v2399, 4294901760
      %v3595 = vsub.f32 %v2399, %v3594
      %v3596 = vand.u32 %v3595, 4294901760
      %3597 = vmatprep.subr.mxu0 %v3596
      %v3598 = vand.u32 %v2398, 4294901760
      %v3599 = vsub.f32 %v2398, %v3598
      %v3600 = vand.u32 %v3599, 4294901760
      %3601 = vmatpush1.msra.mxu0 %v3600
      %v3602 = vand.u32 %v2317, 4294901760
      %3603 = vmatprep.mubr.f32.mxu0 %v3602
      %v3604 = vand.u32 %v2316, 4294901760
      %3605 = vmatmul.mubr.f32.gmra.mrb[0].mxu0 %v3604
      %v3606 = vpop.f32.mrb[0].mxu0
      %v3607 = vadd.f32 %v3342, %v3606
      %v3608 = vpop.f32.mrb[0].mxu0
      %v3609 = vadd.f32 %v3344, %v3608
      %3610 = vdwg.mxu0
      %v3611 = vand.u32 %v2337, 4294901760
      %3612 = vmatprep.subr.mxu0 %v3611
      %v3613 = vand.u32 %v2336, 4294901760
      %3614 = vmatpush1.msra.mxu0 %v3613
      %v3615 = vand.u32 %v2339, 4294901760
      %3616 = vmatprep.subr.mxu0 %v3615
      %v3617 = vand.u32 %v2338, 4294901760
      %3618 = vmatpush1.msra.mxu0 %v3617
      %v3619 = vand.u32 %v2341, 4294901760
      %3620 = vmatprep.subr.mxu0 %v3619
      %v3621 = vand.u32 %v2340, 4294901760
      %3622 = vmatpush1.msra.mxu0 %v3621
      %v3623 = vand.u32 %v2343, 4294901760
      %3624 = vmatprep.subr.mxu0 %v3623
      %v3625 = vand.u32 %v2342, 4294901760
      %3626 = vmatpush1.msra.mxu0 %v3625
      %v3627 = vand.u32 %v2345, 4294901760
      %3628 = vmatprep.subr.mxu0 %v3627
      %v3629 = vand.u32 %v2344, 4294901760
      %3630 = vmatpush1.msra.mxu0 %v3629
      %v3631 = vand.u32 %v2347, 4294901760
      %3632 = vmatprep.subr.mxu0 %v3631
      %v3633 = vand.u32 %v2346, 4294901760
      %3634 = vmatpush1.msra.mxu0 %v3633
      %v3635 = vand.u32 %v2349, 4294901760
      %3636 = vmatprep.subr.mxu0 %v3635
      %v3637 = vand.u32 %v2348, 4294901760
      %3638 = vmatpush1.msra.mxu0 %v3637
      %v3639 = vand.u32 %v2351, 4294901760
      %3640 = vmatprep.subr.mxu0 %v3639
      %v3641 = vand.u32 %v2350, 4294901760
      %3642 = vmatpush1.msra.mxu0 %v3641
      %v3643 = vand.u32 %v2353, 4294901760
      %3644 = vmatprep.subr.mxu0 %v3643
      %v3645 = vand.u32 %v2352, 4294901760
      %3646 = vmatpush1.msra.mxu0 %v3645
      %v3647 = vand.u32 %v2355, 4294901760
      %3648 = vmatprep.subr.mxu0 %v3647
      %v3649 = vand.u32 %v2354, 4294901760
      %3650 = vmatpush1.msra.mxu0 %v3649
      %v3651 = vand.u32 %v2357, 4294901760
      %3652 = vmatprep.subr.mxu0 %v3651
      %v3653 = vand.u32 %v2356, 4294901760
      %3654 = vmatpush1.msra.mxu0 %v3653
      %v3655 = vand.u32 %v2359, 4294901760
      %3656 = vmatprep.subr.mxu0 %v3655
      %v3657 = vand.u32 %v2358, 4294901760
      %3658 = vmatpush1.msra.mxu0 %v3657
      %v3659 = vand.u32 %v2361, 4294901760
      %3660 = vmatprep.subr.mxu0 %v3659
      %v3661 = vand.u32 %v2360, 4294901760
      %3662 = vmatpush1.msra.mxu0 %v3661
      %v3663 = vand.u32 %v2363, 4294901760
      %3664 = vmatprep.subr.mxu0 %v3663
      %v3665 = vand.u32 %v2362, 4294901760
      %3666 = vmatpush1.msra.mxu0 %v3665
      %v3667 = vand.u32 %v2365, 4294901760
      %3668 = vmatprep.subr.mxu0 %v3667
      %v3669 = vand.u32 %v2364, 4294901760
      %3670 = vmatpush1.msra.mxu0 %v3669
      %v3671 = vand.u32 %v2367, 4294901760
      %3672 = vmatprep.subr.mxu0 %v3671
      %v3673 = vand.u32 %v2366, 4294901760
      %3674 = vmatpush1.msra.mxu0 %v3673
      %v3675 = vand.u32 %v2369, 4294901760
      %3676 = vmatprep.subr.mxu0 %v3675
      %v3677 = vand.u32 %v2368, 4294901760
      %3678 = vmatpush1.msra.mxu0 %v3677
      %v3679 = vand.u32 %v2371, 4294901760
      %3680 = vmatprep.subr.mxu0 %v3679
      %v3681 = vand.u32 %v2370, 4294901760
      %3682 = vmatpush1.msra.mxu0 %v3681
      %v3683 = vand.u32 %v2373, 4294901760
      %3684 = vmatprep.subr.mxu0 %v3683
      %v3685 = vand.u32 %v2372, 4294901760
      %3686 = vmatpush1.msra.mxu0 %v3685
      %v3687 = vand.u32 %v2375, 4294901760
      %3688 = vmatprep.subr.mxu0 %v3687
      %v3689 = vand.u32 %v2374, 4294901760
      %3690 = vmatpush1.msra.mxu0 %v3689
      %v3691 = vand.u32 %v2377, 4294901760
      %3692 = vmatprep.subr.mxu0 %v3691
      %v3693 = vand.u32 %v2376, 4294901760
      %3694 = vmatpush1.msra.mxu0 %v3693
      %v3695 = vand.u32 %v2379, 4294901760
      %3696 = vmatprep.subr.mxu0 %v3695
      %v3697 = vand.u32 %v2378, 4294901760
      %3698 = vmatpush1.msra.mxu0 %v3697
      %v3699 = vand.u32 %v2381, 4294901760
      %3700 = vmatprep.subr.mxu0 %v3699
      %v3701 = vand.u32 %v2380, 4294901760
      %3702 = vmatpush1.msra.mxu0 %v3701
      %v3703 = vand.u32 %v2383, 4294901760
      %3704 = vmatprep.subr.mxu0 %v3703
      %v3705 = vand.u32 %v2382, 4294901760
      %3706 = vmatpush1.msra.mxu0 %v3705
      %v3707 = vand.u32 %v2385, 4294901760
      %3708 = vmatprep.subr.mxu0 %v3707
      %v3709 = vand.u32 %v2384, 4294901760
      %3710 = vmatpush1.msra.mxu0 %v3709
      %v3711 = vand.u32 %v2387, 4294901760
      %3712 = vmatprep.subr.mxu0 %v3711
      %v3713 = vand.u32 %v2386, 4294901760
      %3714 = vmatpush1.msra.mxu0 %v3713
      %v3715 = vand.u32 %v2389, 4294901760
      %3716 = vmatprep.subr.mxu0 %v3715
      %v3717 = vand.u32 %v2388, 4294901760
      %3718 = vmatpush1.msra.mxu0 %v3717
      %v3719 = vand.u32 %v2391, 4294901760
      %3720 = vmatprep.subr.mxu0 %v3719
      %v3721 = vand.u32 %v2390, 4294901760
      %3722 = vmatpush1.msra.mxu0 %v3721
      %v3723 = vand.u32 %v2393, 4294901760
      %3724 = vmatprep.subr.mxu0 %v3723
      %v3725 = vand.u32 %v2392, 4294901760
      %3726 = vmatpush1.msra.mxu0 %v3725
      %v3727 = vand.u32 %v2395, 4294901760
      %3728 = vmatprep.subr.mxu0 %v3727
      %v3729 = vand.u32 %v2394, 4294901760
      %3730 = vmatpush1.msra.mxu0 %v3729
      %v3731 = vand.u32 %v2397, 4294901760
      %3732 = vmatprep.subr.mxu0 %v3731
      %v3733 = vand.u32 %v2396, 4294901760
      %3734 = vmatpush1.msra.mxu0 %v3733
      %v3735 = vand.u32 %v2399, 4294901760
      %3736 = vmatprep.subr.mxu0 %v3735
      %v3737 = vand.u32 %v2398, 4294901760
      %3738 = vmatpush1.msra.mxu0 %v3737
      %v3739 = vand.u32 %v2317, 4294901760
      %3740 = vmatprep.mubr.f32.mxu0 %v3739
      %v3741 = vand.u32 %v2316, 4294901760
      %3742 = vmatmul.mubr.f32.gmra.mrb[0].mxu0 %v3741
      %v3743 = vpop.f32.mrb[0].mxu0
      %v3744 = vadd.f32 %v3607, %v3743
      %v3745 = vpop.f32.mrb[0].mxu0
      %v3746 = vadd.f32 %v3609, %v3745
      %3747 = vdwg.mxu0
      %v3748 = vand.u32 %v2401, 4294901760
      %3749 = vmatprep.subr.mxu0 %v3748
      %v3750 = vand.u32 %v2400, 4294901760
      %3751 = vmatpush1.msra.mxu0 %v3750
      %v3752 = vand.u32 %v2403, 4294901760
      %3753 = vmatprep.subr.mxu0 %v3752
      %v3754 = vand.u32 %v2402, 4294901760
      %3755 = vmatpush1.msra.mxu0 %v3754
      %v3756 = vand.u32 %v2405, 4294901760
      %3757 = vmatprep.subr.mxu0 %v3756
      %v3758 = vand.u32 %v2404, 4294901760
      %3759 = vmatpush1.msra.mxu0 %v3758
      %v3760 = vand.u32 %v2407, 4294901760
      %3761 = vmatprep.subr.mxu0 %v3760
      %v3762 = vand.u32 %v2406, 4294901760
      %3763 = vmatpush1.msra.mxu0 %v3762
      %v3764 = vand.u32 %v2409, 4294901760
      %3765 = vmatprep.subr.mxu0 %v3764
      %v3766 = vand.u32 %v2408, 4294901760
      %3767 = vmatpush1.msra.mxu0 %v3766
      %v3768 = vand.u32 %v2411, 4294901760
      %3769 = vmatprep.subr.mxu0 %v3768
      %v3770 = vand.u32 %v2410, 4294901760
      %3771 = vmatpush1.msra.mxu0 %v3770
      %v3772 = vand.u32 %v2413, 4294901760
      %3773 = vmatprep.subr.mxu0 %v3772
      %v3774 = vand.u32 %v2412, 4294901760
      %3775 = vmatpush1.msra.mxu0 %v3774
      %v3776 = vand.u32 %v2415, 4294901760
      %3777 = vmatprep.subr.mxu0 %v3776
      %v3778 = vand.u32 %v2414, 4294901760
      %3779 = vmatpush1.msra.mxu0 %v3778
      %v3780 = vand.u32 %v2417, 4294901760
      %3781 = vmatprep.subr.mxu0 %v3780
      %v3782 = vand.u32 %v2416, 4294901760
      %3783 = vmatpush1.msra.mxu0 %v3782
      %v3784 = vand.u32 %v2419, 4294901760
      %3785 = vmatprep.subr.mxu0 %v3784
      %v3786 = vand.u32 %v2418, 4294901760
      %3787 = vmatpush1.msra.mxu0 %v3786
      %v3788 = vand.u32 %v2421, 4294901760
      %3789 = vmatprep.subr.mxu0 %v3788
      %v3790 = vand.u32 %v2420, 4294901760
      %3791 = vmatpush1.msra.mxu0 %v3790
      %v3792 = vand.u32 %v2423, 4294901760
      %3793 = vmatprep.subr.mxu0 %v3792
      %v3794 = vand.u32 %v2422, 4294901760
      %3795 = vmatpush1.msra.mxu0 %v3794
      %v3796 = vand.u32 %v2425, 4294901760
      %3797 = vmatprep.subr.mxu0 %v3796
      %v3798 = vand.u32 %v2424, 4294901760
      %3799 = vmatpush1.msra.mxu0 %v3798
      %v3800 = vand.u32 %v2427, 4294901760
      %3801 = vmatprep.subr.mxu0 %v3800
      %v3802 = vand.u32 %v2426, 4294901760
      %3803 = vmatpush1.msra.mxu0 %v3802
      %v3804 = vand.u32 %v2429, 4294901760
      %3805 = vmatprep.subr.mxu0 %v3804
      %v3806 = vand.u32 %v2428, 4294901760
      %3807 = vmatpush1.msra.mxu0 %v3806
      %v3808 = vand.u32 %v2431, 4294901760
      %3809 = vmatprep.subr.mxu0 %v3808
      %v3810 = vand.u32 %v2430, 4294901760
      %3811 = vmatpush1.msra.mxu0 %v3810
      %v3812 = vand.u32 %v2433, 4294901760
      %3813 = vmatprep.subr.mxu0 %v3812
      %v3814 = vand.u32 %v2432, 4294901760
      %3815 = vmatpush1.msra.mxu0 %v3814
      %v3816 = vand.u32 %v2435, 4294901760
      %3817 = vmatprep.subr.mxu0 %v3816
      %v3818 = vand.u32 %v2434, 4294901760
      %3819 = vmatpush1.msra.mxu0 %v3818
      %v3820 = vand.u32 %v2437, 4294901760
      %3821 = vmatprep.subr.mxu0 %v3820
      %v3822 = vand.u32 %v2436, 4294901760
      %3823 = vmatpush1.msra.mxu0 %v3822
      %v3824 = vand.u32 %v2439, 4294901760
      %3825 = vmatprep.subr.mxu0 %v3824
      %v3826 = vand.u32 %v2438, 4294901760
      %3827 = vmatpush1.msra.mxu0 %v3826
      %v3828 = vand.u32 %v2441, 4294901760
      %3829 = vmatprep.subr.mxu0 %v3828
      %v3830 = vand.u32 %v2440, 4294901760
      %3831 = vmatpush1.msra.mxu0 %v3830
      %v3832 = vand.u32 %v2443, 4294901760
      %3833 = vmatprep.subr.mxu0 %v3832
      %v3834 = vand.u32 %v2442, 4294901760
      %3835 = vmatpush1.msra.mxu0 %v3834
      %v3836 = vand.u32 %v2445, 4294901760
      %3837 = vmatprep.subr.mxu0 %v3836
      %v3838 = vand.u32 %v2444, 4294901760
      %3839 = vmatpush1.msra.mxu0 %v3838
      %v3840 = vand.u32 %v2447, 4294901760
      %3841 = vmatprep.subr.mxu0 %v3840
      %v3842 = vand.u32 %v2446, 4294901760
      %3843 = vmatpush1.msra.mxu0 %v3842
      %v3844 = vand.u32 %v2449, 4294901760
      %3845 = vmatprep.subr.mxu0 %v3844
      %v3846 = vand.u32 %v2448, 4294901760
      %3847 = vmatpush1.msra.mxu0 %v3846
      %v3848 = vand.u32 %v2451, 4294901760
      %3849 = vmatprep.subr.mxu0 %v3848
      %v3850 = vand.u32 %v2450, 4294901760
      %3851 = vmatpush1.msra.mxu0 %v3850
      %v3852 = vand.u32 %v2453, 4294901760
      %3853 = vmatprep.subr.mxu0 %v3852
      %v3854 = vand.u32 %v2452, 4294901760
      %3855 = vmatpush1.msra.mxu0 %v3854
      %v3856 = vand.u32 %v2455, 4294901760
      %3857 = vmatprep.subr.mxu0 %v3856
      %v3858 = vand.u32 %v2454, 4294901760
      %3859 = vmatpush1.msra.mxu0 %v3858
      %v3860 = vand.u32 %v2457, 4294901760
      %3861 = vmatprep.subr.mxu0 %v3860
      %v3862 = vand.u32 %v2456, 4294901760
      %3863 = vmatpush1.msra.mxu0 %v3862
      %v3864 = vand.u32 %v2459, 4294901760
      %3865 = vmatprep.subr.mxu0 %v3864
      %v3866 = vand.u32 %v2458, 4294901760
      %3867 = vmatpush1.msra.mxu0 %v3866
      %v3868 = vand.u32 %v2461, 4294901760
      %3869 = vmatprep.subr.mxu0 %v3868
      %v3870 = vand.u32 %v2460, 4294901760
      %3871 = vmatpush1.msra.mxu0 %v3870
      %v3872 = vand.u32 %v2463, 4294901760
      %3873 = vmatprep.subr.mxu0 %v3872
      %v3874 = vand.u32 %v2462, 4294901760
      %3875 = vmatpush1.msra.mxu0 %v3874
      %v3876 = vand.u32 %v2335, 4294901760
      %v3877 = vsub.f32 %v2335, %v3876
      %v3878 = vand.u32 %v3877, 4294901760
      %v3879 = vsub.f32 %v3877, %v3878
      %v3880 = vand.u32 %v3879, 4294901760
      %3881 = vmatprep.mubr.f32.mxu0 %v3880
      %v3882 = vand.u32 %v2326, 4294901760
      %v3883 = vsub.f32 %v2326, %v3882
      %v3884 = vand.u32 %v3883, 4294901760
      %v3885 = vsub.f32 %v3883, %v3884
      %v3886 = vand.u32 %v3885, 4294901760
      %3887 = vmatmul.mubr.f32.gmra.mrb[0].mxu0 %v3886
      %v3888 = vpop.f32.mrb[0].mxu0
      %v3889 = vadd.f32 %v3744, %v3888
      %v3890 = vpop.f32.mrb[0].mxu0
      %v3891 = vadd.f32 %v3746, %v3890
      %3892 = vdwg.mxu0
      %v3893 = vand.u32 %v2401, 4294901760
      %v3894 = vsub.f32 %v2401, %v3893
      %v3895 = vand.u32 %v3894, 4294901760
      %v3896 = vsub.f32 %v3894, %v3895
      %v3897 = vand.u32 %v3896, 4294901760
      %3898 = vmatprep.subr.mxu0 %v3897
      %v3899 = vand.u32 %v2400, 4294901760
      %v3900 = vsub.f32 %v2400, %v3899
      %v3901 = vand.u32 %v3900, 4294901760
      %v3902 = vsub.f32 %v3900, %v3901
      %v3903 = vand.u32 %v3902, 4294901760
      %3904 = vmatpush1.msra.mxu0 %v3903
      %v3905 = vand.u32 %v2403, 4294901760
      %v3906 = vsub.f32 %v2403, %v3905
      %v3907 = vand.u32 %v3906, 4294901760
      %v3908 = vsub.f32 %v3906, %v3907
      %v3909 = vand.u32 %v3908, 4294901760
      %3910 = vmatprep.subr.mxu0 %v3909
      %v3911 = vand.u32 %v2402, 4294901760
      %v3912 = vsub.f32 %v2402, %v3911
      %v3913 = vand.u32 %v3912, 4294901760
      %v3914 = vsub.f32 %v3912, %v3913
      %v3915 = vand.u32 %v3914, 4294901760
      %3916 = vmatpush1.msra.mxu0 %v3915
      %v3917 = vand.u32 %v2405, 4294901760
      %v3918 = vsub.f32 %v2405, %v3917
      %v3919 = vand.u32 %v3918, 4294901760
      %v3920 = vsub.f32 %v3918, %v3919
      %v3921 = vand.u32 %v3920, 4294901760
      %3922 = vmatprep.subr.mxu0 %v3921
      %v3923 = vand.u32 %v2404, 4294901760
      %v3924 = vsub.f32 %v2404, %v3923
      %v3925 = vand.u32 %v3924, 4294901760
      %v3926 = vsub.f32 %v3924, %v3925
      %v3927 = vand.u32 %v3926, 4294901760
      %3928 = vmatpush1.msra.mxu0 %v3927
      %v3929 = vand.u32 %v2407, 4294901760
      %v3930 = vsub.f32 %v2407, %v3929
      %v3931 = vand.u32 %v3930, 4294901760
      %v3932 = vsub.f32 %v3930, %v3931
      %v3933 = vand.u32 %v3932, 4294901760
      %3934 = vmatprep.subr.mxu0 %v3933
      %v3935 = vand.u32 %v2406, 4294901760
      %v3936 = vsub.f32 %v2406, %v3935
      %v3937 = vand.u32 %v3936, 4294901760
      %v3938 = vsub.f32 %v3936, %v3937
      %v3939 = vand.u32 %v3938, 4294901760
      %3940 = vmatpush1.msra.mxu0 %v3939
      %v3941 = vand.u32 %v2409, 4294901760
      %v3942 = vsub.f32 %v2409, %v3941
      %v3943 = vand.u32 %v3942, 4294901760
      %v3944 = vsub.f32 %v3942, %v3943
      %v3945 = vand.u32 %v3944, 4294901760
      %3946 = vmatprep.subr.mxu0 %v3945
      %v3947 = vand.u32 %v2408, 4294901760
      %v3948 = vsub.f32 %v2408, %v3947
      %v3949 = vand.u32 %v3948, 4294901760
      %v3950 = vsub.f32 %v3948, %v3949
      %v3951 = vand.u32 %v3950, 4294901760
      %3952 = vmatpush1.msra.mxu0 %v3951
      %v3953 = vand.u32 %v2411, 4294901760
      %v3954 = vsub.f32 %v2411, %v3953
      %v3955 = vand.u32 %v3954, 4294901760
      %v3956 = vsub.f32 %v3954, %v3955
      %v3957 = vand.u32 %v3956, 4294901760
      %3958 = vmatprep.subr.mxu0 %v3957
      %v3959 = vand.u32 %v2410, 4294901760
      %v3960 = vsub.f32 %v2410, %v3959
      %v3961 = vand.u32 %v3960, 4294901760
      %v3962 = vsub.f32 %v3960, %v3961
      %v3963 = vand.u32 %v3962, 4294901760
      %3964 = vmatpush1.msra.mxu0 %v3963
      %v3965 = vand.u32 %v2413, 4294901760
      %v3966 = vsub.f32 %v2413, %v3965
      %v3967 = vand.u32 %v3966, 4294901760
      %v3968 = vsub.f32 %v3966, %v3967
      %v3969 = vand.u32 %v3968, 4294901760
      %3970 = vmatprep.subr.mxu0 %v3969
      %v3971 = vand.u32 %v2412, 4294901760
      %v3972 = vsub.f32 %v2412, %v3971
      %v3973 = vand.u32 %v3972, 4294901760
      %v3974 = vsub.f32 %v3972, %v3973
      %v3975 = vand.u32 %v3974, 4294901760
      %3976 = vmatpush1.msra.mxu0 %v3975
      %v3977 = vand.u32 %v2415, 4294901760
      %v3978 = vsub.f32 %v2415, %v3977
      %v3979 = vand.u32 %v3978, 4294901760
      %v3980 = vsub.f32 %v3978, %v3979
      %v3981 = vand.u32 %v3980, 4294901760
      %3982 = vmatprep.subr.mxu0 %v3981
      %v3983 = vand.u32 %v2414, 4294901760
      %v3984 = vsub.f32 %v2414, %v3983
      %v3985 = vand.u32 %v3984, 4294901760
      %v3986 = vsub.f32 %v3984, %v3985
      %v3987 = vand.u32 %v3986, 4294901760
      %3988 = vmatpush1.msra.mxu0 %v3987
      %v3989 = vand.u32 %v2417, 4294901760
      %v3990 = vsub.f32 %v2417, %v3989
      %v3991 = vand.u32 %v3990, 4294901760
      %v3992 = vsub.f32 %v3990, %v3991
      %v3993 = vand.u32 %v3992, 4294901760
      %3994 = vmatprep.subr.mxu0 %v3993
      %v3995 = vand.u32 %v2416, 4294901760
      %v3996 = vsub.f32 %v2416, %v3995
      %v3997 = vand.u32 %v3996, 4294901760
      %v3998 = vsub.f32 %v3996, %v3997
      %v3999 = vand.u32 %v3998, 4294901760
      %4000 = vmatpush1.msra.mxu0 %v3999
      %v4001 = vand.u32 %v2419, 4294901760
      %v4002 = vsub.f32 %v2419, %v4001
      %v4003 = vand.u32 %v4002, 4294901760
      %v4004 = vsub.f32 %v4002, %v4003
      %v4005 = vand.u32 %v4004, 4294901760
      %4006 = vmatprep.subr.mxu0 %v4005
      %v4007 = vand.u32 %v2418, 4294901760
      %v4008 = vsub.f32 %v2418, %v4007
      %v4009 = vand.u32 %v4008, 4294901760
      %v4010 = vsub.f32 %v4008, %v4009
      %v4011 = vand.u32 %v4010, 4294901760
      %4012 = vmatpush1.msra.mxu0 %v4011
      %v4013 = vand.u32 %v2421, 4294901760
      %v4014 = vsub.f32 %v2421, %v4013
      %v4015 = vand.u32 %v4014, 4294901760
      %v4016 = vsub.f32 %v4014, %v4015
      %v4017 = vand.u32 %v4016, 4294901760
      %4018 = vmatprep.subr.mxu0 %v4017
      %v4019 = vand.u32 %v2420, 4294901760
      %v4020 = vsub.f32 %v2420, %v4019
      %v4021 = vand.u32 %v4020, 4294901760
      %v4022 = vsub.f32 %v4020, %v4021
      %v4023 = vand.u32 %v4022, 4294901760
      %4024 = vmatpush1.msra.mxu0 %v4023
      %v4025 = vand.u32 %v2423, 4294901760
      %v4026 = vsub.f32 %v2423, %v4025
      %v4027 = vand.u32 %v4026, 4294901760
      %v4028 = vsub.f32 %v4026, %v4027
      %v4029 = vand.u32 %v4028, 4294901760
      %4030 = vmatprep.subr.mxu0 %v4029
      %v4031 = vand.u32 %v2422, 4294901760
      %v4032 = vsub.f32 %v2422, %v4031
      %v4033 = vand.u32 %v4032, 4294901760
      %v4034 = vsub.f32 %v4032, %v4033
      %v4035 = vand.u32 %v4034, 4294901760
      %4036 = vmatpush1.msra.mxu0 %v4035
      %v4037 = vand.u32 %v2425, 4294901760
      %v4038 = vsub.f32 %v2425, %v4037
      %v4039 = vand.u32 %v4038, 4294901760
      %v4040 = vsub.f32 %v4038, %v4039
      %v4041 = vand.u32 %v4040, 4294901760
      %4042 = vmatprep.subr.mxu0 %v4041
      %v4043 = vand.u32 %v2424, 4294901760
      %v4044 = vsub.f32 %v2424, %v4043
      %v4045 = vand.u32 %v4044, 4294901760
      %v4046 = vsub.f32 %v4044, %v4045
      %v4047 = vand.u32 %v4046, 4294901760
      %4048 = vmatpush1.msra.mxu0 %v4047
      %v4049 = vand.u32 %v2427, 4294901760
      %v4050 = vsub.f32 %v2427, %v4049
      %v4051 = vand.u32 %v4050, 4294901760
      %v4052 = vsub.f32 %v4050, %v4051
      %v4053 = vand.u32 %v4052, 4294901760
      %4054 = vmatprep.subr.mxu0 %v4053
      %v4055 = vand.u32 %v2426, 4294901760
      %v4056 = vsub.f32 %v2426, %v4055
      %v4057 = vand.u32 %v4056, 4294901760
      %v4058 = vsub.f32 %v4056, %v4057
      %v4059 = vand.u32 %v4058, 4294901760
      %4060 = vmatpush1.msra.mxu0 %v4059
      %v4061 = vand.u32 %v2429, 4294901760
      %v4062 = vsub.f32 %v2429, %v4061
      %v4063 = vand.u32 %v4062, 4294901760
      %v4064 = vsub.f32 %v4062, %v4063
      %v4065 = vand.u32 %v4064, 4294901760
      %4066 = vmatprep.subr.mxu0 %v4065
      %v4067 = vand.u32 %v2428, 4294901760
      %v4068 = vsub.f32 %v2428, %v4067
      %v4069 = vand.u32 %v4068, 4294901760
      %v4070 = vsub.f32 %v4068, %v4069
      %v4071 = vand.u32 %v4070, 4294901760
      %4072 = vmatpush1.msra.mxu0 %v4071
      %v4073 = vand.u32 %v2431, 4294901760
      %v4074 = vsub.f32 %v2431, %v4073
      %v4075 = vand.u32 %v4074, 4294901760
      %v4076 = vsub.f32 %v4074, %v4075
      %v4077 = vand.u32 %v4076, 4294901760
      %4078 = vmatprep.subr.mxu0 %v4077
      %v4079 = vand.u32 %v2430, 4294901760
      %v4080 = vsub.f32 %v2430, %v4079
      %v4081 = vand.u32 %v4080, 4294901760
      %v4082 = vsub.f32 %v4080, %v4081
      %v4083 = vand.u32 %v4082, 4294901760
      %4084 = vmatpush1.msra.mxu0 %v4083
      %v4085 = vand.u32 %v2433, 4294901760
      %v4086 = vsub.f32 %v2433, %v4085
      %v4087 = vand.u32 %v4086, 4294901760
      %v4088 = vsub.f32 %v4086, %v4087
      %v4089 = vand.u32 %v4088, 4294901760
      %4090 = vmatprep.subr.mxu0 %v4089
      %v4091 = vand.u32 %v2432, 4294901760
      %v4092 = vsub.f32 %v2432, %v4091
      %v4093 = vand.u32 %v4092, 4294901760
      %v4094 = vsub.f32 %v4092, %v4093
      %v4095 = vand.u32 %v4094, 4294901760
      %4096 = vmatpush1.msra.mxu0 %v4095
      %v4097 = vand.u32 %v2435, 4294901760
      %v4098 = vsub.f32 %v2435, %v4097
      %v4099 = vand.u32 %v4098, 4294901760
      %v4100 = vsub.f32 %v4098, %v4099
      %v4101 = vand.u32 %v4100, 4294901760
      %4102 = vmatprep.subr.mxu0 %v4101
      %v4103 = vand.u32 %v2434, 4294901760
      %v4104 = vsub.f32 %v2434, %v4103
      %v4105 = vand.u32 %v4104, 4294901760
      %v4106 = vsub.f32 %v4104, %v4105
      %v4107 = vand.u32 %v4106, 4294901760
      %4108 = vmatpush1.msra.mxu0 %v4107
      %v4109 = vand.u32 %v2437, 4294901760
      %v4110 = vsub.f32 %v2437, %v4109
      %v4111 = vand.u32 %v4110, 4294901760
      %v4112 = vsub.f32 %v4110, %v4111
      %v4113 = vand.u32 %v4112, 4294901760
      %4114 = vmatprep.subr.mxu0 %v4113
      %v4115 = vand.u32 %v2436, 4294901760
      %v4116 = vsub.f32 %v2436, %v4115
      %v4117 = vand.u32 %v4116, 4294901760
      %v4118 = vsub.f32 %v4116, %v4117
      %v4119 = vand.u32 %v4118, 4294901760
      %4120 = vmatpush1.msra.mxu0 %v4119
      %v4121 = vand.u32 %v2439, 4294901760
      %v4122 = vsub.f32 %v2439, %v4121
      %v4123 = vand.u32 %v4122, 4294901760
      %v4124 = vsub.f32 %v4122, %v4123
      %v4125 = vand.u32 %v4124, 4294901760
      %4126 = vmatprep.subr.mxu0 %v4125
      %v4127 = vand.u32 %v2438, 4294901760
      %v4128 = vsub.f32 %v2438, %v4127
      %v4129 = vand.u32 %v4128, 4294901760
      %v4130 = vsub.f32 %v4128, %v4129
      %v4131 = vand.u32 %v4130, 4294901760
      %4132 = vmatpush1.msra.mxu0 %v4131
      %v4133 = vand.u32 %v2441, 4294901760
      %v4134 = vsub.f32 %v2441, %v4133
      %v4135 = vand.u32 %v4134, 4294901760
      %v4136 = vsub.f32 %v4134, %v4135
      %v4137 = vand.u32 %v4136, 4294901760
      %4138 = vmatprep.subr.mxu0 %v4137
      %v4139 = vand.u32 %v2440, 4294901760
      %v4140 = vsub.f32 %v2440, %v4139
      %v4141 = vand.u32 %v4140, 4294901760
      %v4142 = vsub.f32 %v4140, %v4141
      %v4143 = vand.u32 %v4142, 4294901760
      %4144 = vmatpush1.msra.mxu0 %v4143
      %v4145 = vand.u32 %v2443, 4294901760
      %v4146 = vsub.f32 %v2443, %v4145
      %v4147 = vand.u32 %v4146, 4294901760
      %v4148 = vsub.f32 %v4146, %v4147
      %v4149 = vand.u32 %v4148, 4294901760
      %4150 = vmatprep.subr.mxu0 %v4149
      %v4151 = vand.u32 %v2442, 4294901760
      %v4152 = vsub.f32 %v2442, %v4151
      %v4153 = vand.u32 %v4152, 4294901760
      %v4154 = vsub.f32 %v4152, %v4153
      %v4155 = vand.u32 %v4154, 4294901760
      %4156 = vmatpush1.msra.mxu0 %v4155
      %v4157 = vand.u32 %v2445, 4294901760
      %v4158 = vsub.f32 %v2445, %v4157
      %v4159 = vand.u32 %v4158, 4294901760
      %v4160 = vsub.f32 %v4158, %v4159
      %v4161 = vand.u32 %v4160, 4294901760
      %4162 = vmatprep.subr.mxu0 %v4161
      %v4163 = vand.u32 %v2444, 4294901760
      %v4164 = vsub.f32 %v2444, %v4163
      %v4165 = vand.u32 %v4164, 4294901760
      %v4166 = vsub.f32 %v4164, %v4165
      %v4167 = vand.u32 %v4166, 4294901760
      %4168 = vmatpush1.msra.mxu0 %v4167
      %v4169 = vand.u32 %v2447, 4294901760
      %v4170 = vsub.f32 %v2447, %v4169
      %v4171 = vand.u32 %v4170, 4294901760
      %v4172 = vsub.f32 %v4170, %v4171
      %v4173 = vand.u32 %v4172, 4294901760
      %4174 = vmatprep.subr.mxu0 %v4173
      %v4175 = vand.u32 %v2446, 4294901760
      %v4176 = vsub.f32 %v2446, %v4175
      %v4177 = vand.u32 %v4176, 4294901760
      %v4178 = vsub.f32 %v4176, %v4177
      %v4179 = vand.u32 %v4178, 4294901760
      %4180 = vmatpush1.msra.mxu0 %v4179
      %v4181 = vand.u32 %v2449, 4294901760
      %v4182 = vsub.f32 %v2449, %v4181
      %v4183 = vand.u32 %v4182, 4294901760
      %v4184 = vsub.f32 %v4182, %v4183
      %v4185 = vand.u32 %v4184, 4294901760
      %4186 = vmatprep.subr.mxu0 %v4185
      %v4187 = vand.u32 %v2448, 4294901760
      %v4188 = vsub.f32 %v2448, %v4187
      %v4189 = vand.u32 %v4188, 4294901760
      %v4190 = vsub.f32 %v4188, %v4189
      %v4191 = vand.u32 %v4190, 4294901760
      %4192 = vmatpush1.msra.mxu0 %v4191
      %v4193 = vand.u32 %v2451, 4294901760
      %v4194 = vsub.f32 %v2451, %v4193
      %v4195 = vand.u32 %v4194, 4294901760
      %v4196 = vsub.f32 %v4194, %v4195
      %v4197 = vand.u32 %v4196, 4294901760
      %4198 = vmatprep.subr.mxu0 %v4197
      %v4199 = vand.u32 %v2450, 4294901760
      %v4200 = vsub.f32 %v2450, %v4199
      %v4201 = vand.u32 %v4200, 4294901760
      %v4202 = vsub.f32 %v4200, %v4201
      %v4203 = vand.u32 %v4202, 4294901760
      %4204 = vmatpush1.msra.mxu0 %v4203
      %v4205 = vand.u32 %v2453, 4294901760
      %v4206 = vsub.f32 %v2453, %v4205
      %v4207 = vand.u32 %v4206, 4294901760
      %v4208 = vsub.f32 %v4206, %v4207
      %v4209 = vand.u32 %v4208, 4294901760
      %4210 = vmatprep.subr.mxu0 %v4209
      %v4211 = vand.u32 %v2452, 4294901760
      %v4212 = vsub.f32 %v2452, %v4211
      %v4213 = vand.u32 %v4212, 4294901760
      %v4214 = vsub.f32 %v4212, %v4213
      %v4215 = vand.u32 %v4214, 4294901760
      %4216 = vmatpush1.msra.mxu0 %v4215
      %v4217 = vand.u32 %v2455, 4294901760
      %v4218 = vsub.f32 %v2455, %v4217
      %v4219 = vand.u32 %v4218, 4294901760
      %v4220 = vsub.f32 %v4218, %v4219
      %v4221 = vand.u32 %v4220, 4294901760
      %4222 = vmatprep.subr.mxu0 %v4221
      %v4223 = vand.u32 %v2454, 4294901760
      %v4224 = vsub.f32 %v2454, %v4223
      %v4225 = vand.u32 %v4224, 4294901760
      %v4226 = vsub.f32 %v4224, %v4225
      %v4227 = vand.u32 %v4226, 4294901760
      %4228 = vmatpush1.msra.mxu0 %v4227
      %v4229 = vand.u32 %v2457, 4294901760
      %v4230 = vsub.f32 %v2457, %v4229
      %v4231 = vand.u32 %v4230, 4294901760
      %v4232 = vsub.f32 %v4230, %v4231
      %v4233 = vand.u32 %v4232, 4294901760
      %4234 = vmatprep.subr.mxu0 %v4233
      %v4235 = vand.u32 %v2456, 4294901760
      %v4236 = vsub.f32 %v2456, %v4235
      %v4237 = vand.u32 %v4236, 4294901760
      %v4238 = vsub.f32 %v4236, %v4237
      %v4239 = vand.u32 %v4238, 4294901760
      %4240 = vmatpush1.msra.mxu0 %v4239
      %v4241 = vand.u32 %v2459, 4294901760
      %v4242 = vsub.f32 %v2459, %v4241
      %v4243 = vand.u32 %v4242, 4294901760
      %v4244 = vsub.f32 %v4242, %v4243
      %v4245 = vand.u32 %v4244, 4294901760
      %4246 = vmatprep.subr.mxu0 %v4245
      %v4247 = vand.u32 %v2458, 4294901760
      %v4248 = vsub.f32 %v2458, %v4247
      %v4249 = vand.u32 %v4248, 4294901760
      %v4250 = vsub.f32 %v4248, %v4249
      %v4251 = vand.u32 %v4250, 4294901760
      %4252 = vmatpush1.msra.mxu0 %v4251
      %v4253 = vand.u32 %v2461, 4294901760
      %v4254 = vsub.f32 %v2461, %v4253
      %v4255 = vand.u32 %v4254, 4294901760
      %v4256 = vsub.f32 %v4254, %v4255
      %v4257 = vand.u32 %v4256, 4294901760
      %4258 = vmatprep.subr.mxu0 %v4257
      %v4259 = vand.u32 %v2460, 4294901760
      %v4260 = vsub.f32 %v2460, %v4259
      %v4261 = vand.u32 %v4260, 4294901760
      %v4262 = vsub.f32 %v4260, %v4261
      %v4263 = vand.u32 %v4262, 4294901760
      %4264 = vmatpush1.msra.mxu0 %v4263
      %v4265 = vand.u32 %v2463, 4294901760
      %v4266 = vsub.f32 %v2463, %v4265
      %v4267 = vand.u32 %v4266, 4294901760
      %v4268 = vsub.f32 %v4266, %v4267
      %v4269 = vand.u32 %v4268, 4294901760
      %4270 = vmatprep.subr.mxu0 %v4269
      %v4271 = vand.u32 %v2462, 4294901760
      %v4272 = vsub.f32 %v2462, %v4271
      %v4273 = vand.u32 %v4272, 4294901760
      %v4274 = vsub.f32 %v4272, %v4273
      %v4275 = vand.u32 %v4274, 4294901760
      %4276 = vmatpush1.msra.mxu0 %v4275
      %v4277 = vand.u32 %v2335, 4294901760
      %4278 = vmatprep.mubr.f32.mxu0 %v4277
      %v4279 = vand.u32 %v2326, 4294901760
      %4280 = vmatmul.mubr.f32.gmra.mrb[0].mxu0 %v4279
      %v4281 = vpop.f32.mrb[0].mxu0
      %v4282 = vadd.f32 %v3889, %v4281
      %v4283 = vpop.f32.mrb[0].mxu0
      %v4284 = vadd.f32 %v3891, %v4283
      %4285 = vdwg.mxu0
      %v4286 = vand.u32 %v2401, 4294901760
      %v4287 = vsub.f32 %v2401, %v4286
      %4288 = vmatprep.subr.mxu0 %v4287
      %v4289 = vand.u32 %v2400, 4294901760
      %v4290 = vsub.f32 %v2400, %v4289
      %4291 = vmatpush1.msra.mxu0 %v4290
      %v4292 = vand.u32 %v2403, 4294901760
      %v4293 = vsub.f32 %v2403, %v4292
      %4294 = vmatprep.subr.mxu0 %v4293
      %v4295 = vand.u32 %v2402, 4294901760
      %v4296 = vsub.f32 %v2402, %v4295
      %4297 = vmatpush1.msra.mxu0 %v4296
      %v4298 = vand.u32 %v2405, 4294901760
      %v4299 = vsub.f32 %v2405, %v4298
      %4300 = vmatprep.subr.mxu0 %v4299
      %v4301 = vand.u32 %v2404, 4294901760
      %v4302 = vsub.f32 %v2404, %v4301
      %4303 = vmatpush1.msra.mxu0 %v4302
      %v4304 = vand.u32 %v2407, 4294901760
      %v4305 = vsub.f32 %v2407, %v4304
      %4306 = vmatprep.subr.mxu0 %v4305
      %v4307 = vand.u32 %v2406, 4294901760
      %v4308 = vsub.f32 %v2406, %v4307
      %4309 = vmatpush1.msra.mxu0 %v4308
      %v4310 = vand.u32 %v2409, 4294901760
      %v4311 = vsub.f32 %v2409, %v4310
      %4312 = vmatprep.subr.mxu0 %v4311
      %v4313 = vand.u32 %v2408, 4294901760
      %v4314 = vsub.f32 %v2408, %v4313
      %4315 = vmatpush1.msra.mxu0 %v4314
      %v4316 = vand.u32 %v2411, 4294901760
      %v4317 = vsub.f32 %v2411, %v4316
      %4318 = vmatprep.subr.mxu0 %v4317
      %v4319 = vand.u32 %v2410, 4294901760
      %v4320 = vsub.f32 %v2410, %v4319
      %4321 = vmatpush1.msra.mxu0 %v4320
      %v4322 = vand.u32 %v2413, 4294901760
      %v4323 = vsub.f32 %v2413, %v4322
      %4324 = vmatprep.subr.mxu0 %v4323
      %v4325 = vand.u32 %v2412, 4294901760
      %v4326 = vsub.f32 %v2412, %v4325
      %4327 = vmatpush1.msra.mxu0 %v4326
      %v4328 = vand.u32 %v2415, 4294901760
      %v4329 = vsub.f32 %v2415, %v4328
      %4330 = vmatprep.subr.mxu0 %v4329
      %v4331 = vand.u32 %v2414, 4294901760
      %v4332 = vsub.f32 %v2414, %v4331
      %4333 = vmatpush1.msra.mxu0 %v4332
      %v4334 = vand.u32 %v2417, 4294901760
      %v4335 = vsub.f32 %v2417, %v4334
      %4336 = vmatprep.subr.mxu0 %v4335
      %v4337 = vand.u32 %v2416, 4294901760
      %v4338 = vsub.f32 %v2416, %v4337
      %4339 = vmatpush1.msra.mxu0 %v4338
      %v4340 = vand.u32 %v2419, 4294901760
      %v4341 = vsub.f32 %v2419, %v4340
      %4342 = vmatprep.subr.mxu0 %v4341
      %v4343 = vand.u32 %v2418, 4294901760
      %v4344 = vsub.f32 %v2418, %v4343
      %4345 = vmatpush1.msra.mxu0 %v4344
      %v4346 = vand.u32 %v2421, 4294901760
      %v4347 = vsub.f32 %v2421, %v4346
      %4348 = vmatprep.subr.mxu0 %v4347
      %v4349 = vand.u32 %v2420, 4294901760
      %v4350 = vsub.f32 %v2420, %v4349
      %4351 = vmatpush1.msra.mxu0 %v4350
      %v4352 = vand.u32 %v2423, 4294901760
      %v4353 = vsub.f32 %v2423, %v4352
      %4354 = vmatprep.subr.mxu0 %v4353
      %v4355 = vand.u32 %v2422, 4294901760
      %v4356 = vsub.f32 %v2422, %v4355
      %4357 = vmatpush1.msra.mxu0 %v4356
      %v4358 = vand.u32 %v2425, 4294901760
      %v4359 = vsub.f32 %v2425, %v4358
      %4360 = vmatprep.subr.mxu0 %v4359
      %v4361 = vand.u32 %v2424, 4294901760
      %v4362 = vsub.f32 %v2424, %v4361
      %4363 = vmatpush1.msra.mxu0 %v4362
      %v4364 = vand.u32 %v2427, 4294901760
      %v4365 = vsub.f32 %v2427, %v4364
      %4366 = vmatprep.subr.mxu0 %v4365
      %v4367 = vand.u32 %v2426, 4294901760
      %v4368 = vsub.f32 %v2426, %v4367
      %4369 = vmatpush1.msra.mxu0 %v4368
      %v4370 = vand.u32 %v2429, 4294901760
      %v4371 = vsub.f32 %v2429, %v4370
      %4372 = vmatprep.subr.mxu0 %v4371
      %v4373 = vand.u32 %v2428, 4294901760
      %v4374 = vsub.f32 %v2428, %v4373
      %4375 = vmatpush1.msra.mxu0 %v4374
      %v4376 = vand.u32 %v2431, 4294901760
      %v4377 = vsub.f32 %v2431, %v4376
      %4378 = vmatprep.subr.mxu0 %v4377
      %v4379 = vand.u32 %v2430, 4294901760
      %v4380 = vsub.f32 %v2430, %v4379
      %4381 = vmatpush1.msra.mxu0 %v4380
      %v4382 = vand.u32 %v2433, 4294901760
      %v4383 = vsub.f32 %v2433, %v4382
      %4384 = vmatprep.subr.mxu0 %v4383
      %v4385 = vand.u32 %v2432, 4294901760
      %v4386 = vsub.f32 %v2432, %v4385
      %4387 = vmatpush1.msra.mxu0 %v4386
      %v4388 = vand.u32 %v2435, 4294901760
      %v4389 = vsub.f32 %v2435, %v4388
      %4390 = vmatprep.subr.mxu0 %v4389
      %v4391 = vand.u32 %v2434, 4294901760
      %v4392 = vsub.f32 %v2434, %v4391
      %4393 = vmatpush1.msra.mxu0 %v4392
      %v4394 = vand.u32 %v2437, 4294901760
      %v4395 = vsub.f32 %v2437, %v4394
      %4396 = vmatprep.subr.mxu0 %v4395
      %v4397 = vand.u32 %v2436, 4294901760
      %v4398 = vsub.f32 %v2436, %v4397
      %4399 = vmatpush1.msra.mxu0 %v4398
      %v4400 = vand.u32 %v2439, 4294901760
      %v4401 = vsub.f32 %v2439, %v4400
      %4402 = vmatprep.subr.mxu0 %v4401
      %v4403 = vand.u32 %v2438, 4294901760
      %v4404 = vsub.f32 %v2438, %v4403
      %4405 = vmatpush1.msra.mxu0 %v4404
      %v4406 = vand.u32 %v2441, 4294901760
      %v4407 = vsub.f32 %v2441, %v4406
      %4408 = vmatprep.subr.mxu0 %v4407
      %v4409 = vand.u32 %v2440, 4294901760
      %v4410 = vsub.f32 %v2440, %v4409
      %4411 = vmatpush1.msra.mxu0 %v4410
      %v4412 = vand.u32 %v2443, 4294901760
      %v4413 = vsub.f32 %v2443, %v4412
      %4414 = vmatprep.subr.mxu0 %v4413
      %v4415 = vand.u32 %v2442, 4294901760
      %v4416 = vsub.f32 %v2442, %v4415
      %4417 = vmatpush1.msra.mxu0 %v4416
      %v4418 = vand.u32 %v2445, 4294901760
      %v4419 = vsub.f32 %v2445, %v4418
      %4420 = vmatprep.subr.mxu0 %v4419
      %v4421 = vand.u32 %v2444, 4294901760
      %v4422 = vsub.f32 %v2444, %v4421
      %4423 = vmatpush1.msra.mxu0 %v4422
      %v4424 = vand.u32 %v2447, 4294901760
      %v4425 = vsub.f32 %v2447, %v4424
      %4426 = vmatprep.subr.mxu0 %v4425
      %v4427 = vand.u32 %v2446, 4294901760
      %v4428 = vsub.f32 %v2446, %v4427
      %4429 = vmatpush1.msra.mxu0 %v4428
      %v4430 = vand.u32 %v2449, 4294901760
      %v4431 = vsub.f32 %v2449, %v4430
      %4432 = vmatprep.subr.mxu0 %v4431
      %v4433 = vand.u32 %v2448, 4294901760
      %v4434 = vsub.f32 %v2448, %v4433
      %4435 = vmatpush1.msra.mxu0 %v4434
      %v4436 = vand.u32 %v2451, 4294901760
      %v4437 = vsub.f32 %v2451, %v4436
      %4438 = vmatprep.subr.mxu0 %v4437
      %v4439 = vand.u32 %v2450, 4294901760
      %v4440 = vsub.f32 %v2450, %v4439
      %4441 = vmatpush1.msra.mxu0 %v4440
      %v4442 = vand.u32 %v2453, 4294901760
      %v4443 = vsub.f32 %v2453, %v4442
      %4444 = vmatprep.subr.mxu0 %v4443
      %v4445 = vand.u32 %v2452, 4294901760
      %v4446 = vsub.f32 %v2452, %v4445
      %4447 = vmatpush1.msra.mxu0 %v4446
      %v4448 = vand.u32 %v2455, 4294901760
      %v4449 = vsub.f32 %v2455, %v4448
      %4450 = vmatprep.subr.mxu0 %v4449
      %v4451 = vand.u32 %v2454, 4294901760
      %v4452 = vsub.f32 %v2454, %v4451
      %4453 = vmatpush1.msra.mxu0 %v4452
      %v4454 = vand.u32 %v2457, 4294901760
      %v4455 = vsub.f32 %v2457, %v4454
      %4456 = vmatprep.subr.mxu0 %v4455
      %v4457 = vand.u32 %v2456, 4294901760
      %v4458 = vsub.f32 %v2456, %v4457
      %4459 = vmatpush1.msra.mxu0 %v4458
      %v4460 = vand.u32 %v2459, 4294901760
      %v4461 = vsub.f32 %v2459, %v4460
      %4462 = vmatprep.subr.mxu0 %v4461
      %v4463 = vand.u32 %v2458, 4294901760
      %v4464 = vsub.f32 %v2458, %v4463
      %4465 = vmatpush1.msra.mxu0 %v4464
      %v4466 = vand.u32 %v2461, 4294901760
      %v4467 = vsub.f32 %v2461, %v4466
      %4468 = vmatprep.subr.mxu0 %v4467
      %v4469 = vand.u32 %v2460, 4294901760
      %v4470 = vsub.f32 %v2460, %v4469
      %4471 = vmatpush1.msra.mxu0 %v4470
      %v4472 = vand.u32 %v2463, 4294901760
      %v4473 = vsub.f32 %v2463, %v4472
      %4474 = vmatprep.subr.mxu0 %v4473
      %v4475 = vand.u32 %v2462, 4294901760
      %v4476 = vsub.f32 %v2462, %v4475
      %4477 = vmatpush1.msra.mxu0 %v4476
      %v4478 = vand.u32 %v2335, 4294901760
      %v4479 = vsub.f32 %v2335, %v4478
      %4480 = vmatprep.mubr.f32.mxu0 %v4479
      %v4481 = vand.u32 %v2326, 4294901760
      %v4482 = vsub.f32 %v2326, %v4481
      %4483 = vmatmul.mubr.f32.gmra.mrb[0].mxu0 %v4482
      %v4484 = vpop.f32.mrb[0].mxu0
      %v4485 = vadd.f32 %v4282, %v4484
      %v4486 = vpop.f32.mrb[0].mxu0
      %v4487 = vadd.f32 %v4284, %v4486
      %4488 = vdwg.mxu0
      %v4489 = vand.u32 %v2401, 4294901760
      %4490 = vmatprep.subr.mxu0 %v4489
      %v4491 = vand.u32 %v2400, 4294901760
      %4492 = vmatpush1.msra.mxu0 %v4491
      %v4493 = vand.u32 %v2403, 4294901760
      %4494 = vmatprep.subr.mxu0 %v4493
      %v4495 = vand.u32 %v2402, 4294901760
      %4496 = vmatpush1.msra.mxu0 %v4495
      %v4497 = vand.u32 %v2405, 4294901760
      %4498 = vmatprep.subr.mxu0 %v4497
      %v4499 = vand.u32 %v2404, 4294901760
      %4500 = vmatpush1.msra.mxu0 %v4499
      %v4501 = vand.u32 %v2407, 4294901760
      %4502 = vmatprep.subr.mxu0 %v4501
      %v4503 = vand.u32 %v2406, 4294901760
      %4504 = vmatpush1.msra.mxu0 %v4503
      %v4505 = vand.u32 %v2409, 4294901760
      %4506 = vmatprep.subr.mxu0 %v4505
      %v4507 = vand.u32 %v2408, 4294901760
      %4508 = vmatpush1.msra.mxu0 %v4507
      %v4509 = vand.u32 %v2411, 4294901760
      %4510 = vmatprep.subr.mxu0 %v4509
      %v4511 = vand.u32 %v2410, 4294901760
      %4512 = vmatpush1.msra.mxu0 %v4511
      %v4513 = vand.u32 %v2413, 4294901760
      %4514 = vmatprep.subr.mxu0 %v4513
      %v4515 = vand.u32 %v2412, 4294901760
      %4516 = vmatpush1.msra.mxu0 %v4515
      %v4517 = vand.u32 %v2415, 4294901760
      %4518 = vmatprep.subr.mxu0 %v4517
      %v4519 = vand.u32 %v2414, 4294901760
      %4520 = vmatpush1.msra.mxu0 %v4519
      %v4521 = vand.u32 %v2417, 4294901760
      %4522 = vmatprep.subr.mxu0 %v4521
      %v4523 = vand.u32 %v2416, 4294901760
      %4524 = vmatpush1.msra.mxu0 %v4523
      %v4525 = vand.u32 %v2419, 4294901760
      %4526 = vmatprep.subr.mxu0 %v4525
      %v4527 = vand.u32 %v2418, 4294901760
      %4528 = vmatpush1.msra.mxu0 %v4527
      %v4529 = vand.u32 %v2421, 4294901760
      %4530 = vmatprep.subr.mxu0 %v4529
      %v4531 = vand.u32 %v2420, 4294901760
      %4532 = vmatpush1.msra.mxu0 %v4531
      %v4533 = vand.u32 %v2423, 4294901760
      %4534 = vmatprep.subr.mxu0 %v4533
      %v4535 = vand.u32 %v2422, 4294901760
      %4536 = vmatpush1.msra.mxu0 %v4535
      %v4537 = vand.u32 %v2425, 4294901760
      %4538 = vmatprep.subr.mxu0 %v4537
      %v4539 = vand.u32 %v2424, 4294901760
      %4540 = vmatpush1.msra.mxu0 %v4539
      %v4541 = vand.u32 %v2427, 4294901760
      %4542 = vmatprep.subr.mxu0 %v4541
      %v4543 = vand.u32 %v2426, 4294901760
      %4544 = vmatpush1.msra.mxu0 %v4543
      %v4545 = vand.u32 %v2429, 4294901760
      %4546 = vmatprep.subr.mxu0 %v4545
      %v4547 = vand.u32 %v2428, 4294901760
      %4548 = vmatpush1.msra.mxu0 %v4547
      %v4549 = vand.u32 %v2431, 4294901760
      %4550 = vmatprep.subr.mxu0 %v4549
      %v4551 = vand.u32 %v2430, 4294901760
      %4552 = vmatpush1.msra.mxu0 %v4551
      %v4553 = vand.u32 %v2433, 4294901760
      %4554 = vmatprep.subr.mxu0 %v4553
      %v4555 = vand.u32 %v2432, 4294901760
      %4556 = vmatpush1.msra.mxu0 %v4555
      %v4557 = vand.u32 %v2435, 4294901760
      %4558 = vmatprep.subr.mxu0 %v4557
      %v4559 = vand.u32 %v2434, 4294901760
      %4560 = vmatpush1.msra.mxu0 %v4559
      %v4561 = vand.u32 %v2437, 4294901760
      %4562 = vmatprep.subr.mxu0 %v4561
      %v4563 = vand.u32 %v2436, 4294901760
      %4564 = vmatpush1.msra.mxu0 %v4563
      %v4565 = vand.u32 %v2439, 4294901760
      %4566 = vmatprep.subr.mxu0 %v4565
      %v4567 = vand.u32 %v2438, 4294901760
      %4568 = vmatpush1.msra.mxu0 %v4567
      %v4569 = vand.u32 %v2441, 4294901760
      %4570 = vmatprep.subr.mxu0 %v4569
      %v4571 = vand.u32 %v2440, 4294901760
      %4572 = vmatpush1.msra.mxu0 %v4571
      %v4573 = vand.u32 %v2443, 4294901760
      %4574 = vmatprep.subr.mxu0 %v4573
      %v4575 = vand.u32 %v2442, 4294901760
      %4576 = vmatpush1.msra.mxu0 %v4575
      %v4577 = vand.u32 %v2445, 4294901760
      %4578 = vmatprep.subr.mxu0 %v4577
      %v4579 = vand.u32 %v2444, 4294901760
      %4580 = vmatpush1.msra.mxu0 %v4579
      %v4581 = vand.u32 %v2447, 4294901760
      %4582 = vmatprep.subr.mxu0 %v4581
      %v4583 = vand.u32 %v2446, 4294901760
      %4584 = vmatpush1.msra.mxu0 %v4583
      %v4585 = vand.u32 %v2449, 4294901760
      %4586 = vmatprep.subr.mxu0 %v4585
      %v4587 = vand.u32 %v2448, 4294901760
      %4588 = vmatpush1.msra.mxu0 %v4587
      %v4589 = vand.u32 %v2451, 4294901760
      %4590 = vmatprep.subr.mxu0 %v4589
      %v4591 = vand.u32 %v2450, 4294901760
      %4592 = vmatpush1.msra.mxu0 %v4591
      %v4593 = vand.u32 %v2453, 4294901760
      %4594 = vmatprep.subr.mxu0 %v4593
      %v4595 = vand.u32 %v2452, 4294901760
      %4596 = vmatpush1.msra.mxu0 %v4595
      %v4597 = vand.u32 %v2455, 4294901760
      %4598 = vmatprep.subr.mxu0 %v4597
      %v4599 = vand.u32 %v2454, 4294901760
      %4600 = vmatpush1.msra.mxu0 %v4599
      %v4601 = vand.u32 %v2457, 4294901760
      %4602 = vmatprep.subr.mxu0 %v4601
      %v4603 = vand.u32 %v2456, 4294901760
      %4604 = vmatpush1.msra.mxu0 %v4603
      %v4605 = vand.u32 %v2459, 4294901760
      %4606 = vmatprep.subr.mxu0 %v4605
      %v4607 = vand.u32 %v2458, 4294901760
      %4608 = vmatpush1.msra.mxu0 %v4607
      %v4609 = vand.u32 %v2461, 4294901760
      %4610 = vmatprep.subr.mxu0 %v4609
      %v4611 = vand.u32 %v2460, 4294901760
      %4612 = vmatpush1.msra.mxu0 %v4611
      %v4613 = vand.u32 %v2463, 4294901760
      %4614 = vmatprep.subr.mxu0 %v4613
      %v4615 = vand.u32 %v2462, 4294901760
      %4616 = vmatpush1.msra.mxu0 %v4615
      %v4617 = vand.u32 %v2335, 4294901760
      %v4618 = vsub.f32 %v2335, %v4617
      %v4619 = vand.u32 %v4618, 4294901760
      %4620 = vmatprep.mubr.f32.mxu0 %v4619
      %v4621 = vand.u32 %v2326, 4294901760
      %v4622 = vsub.f32 %v2326, %v4621
      %v4623 = vand.u32 %v4622, 4294901760
      %4624 = vmatmul.mubr.f32.gmra.mrb[0].mxu0 %v4623
      %v4625 = vpop.f32.mrb[0].mxu0
      %v4626 = vadd.f32 %v4485, %v4625
      %v4627 = vpop.f32.mrb[0].mxu0
      %v4628 = vadd.f32 %v4487, %v4627
      %4629 = vdwg.mxu0
      %v4630 = vand.u32 %v2401, 4294901760
      %v4631 = vsub.f32 %v2401, %v4630
      %v4632 = vand.u32 %v4631, 4294901760
      %4633 = vmatprep.subr.mxu0 %v4632
      %v4634 = vand.u32 %v2400, 4294901760
      %v4635 = vsub.f32 %v2400, %v4634
      %v4636 = vand.u32 %v4635, 4294901760
      %4637 = vmatpush1.msra.mxu0 %v4636
      %v4638 = vand.u32 %v2403, 4294901760
      %v4639 = vsub.f32 %v2403, %v4638
      %v4640 = vand.u32 %v4639, 4294901760
      %4641 = vmatprep.subr.mxu0 %v4640
      %v4642 = vand.u32 %v2402, 4294901760
      %v4643 = vsub.f32 %v2402, %v4642
      %v4644 = vand.u32 %v4643, 4294901760
      %4645 = vmatpush1.msra.mxu0 %v4644
      %v4646 = vand.u32 %v2405, 4294901760
      %v4647 = vsub.f32 %v2405, %v4646
      %v4648 = vand.u32 %v4647, 4294901760
      %4649 = vmatprep.subr.mxu0 %v4648
      %v4650 = vand.u32 %v2404, 4294901760
      %v4651 = vsub.f32 %v2404, %v4650
      %v4652 = vand.u32 %v4651, 4294901760
      %4653 = vmatpush1.msra.mxu0 %v4652
      %v4654 = vand.u32 %v2407, 4294901760
      %v4655 = vsub.f32 %v2407, %v4654
      %v4656 = vand.u32 %v4655, 4294901760
      %4657 = vmatprep.subr.mxu0 %v4656
      %v4658 = vand.u32 %v2406, 4294901760
      %v4659 = vsub.f32 %v2406, %v4658
      %v4660 = vand.u32 %v4659, 4294901760
      %4661 = vmatpush1.msra.mxu0 %v4660
      %v4662 = vand.u32 %v2409, 4294901760
      %v4663 = vsub.f32 %v2409, %v4662
      %v4664 = vand.u32 %v4663, 4294901760
      %4665 = vmatprep.subr.mxu0 %v4664
      %v4666 = vand.u32 %v2408, 4294901760
      %v4667 = vsub.f32 %v2408, %v4666
      %v4668 = vand.u32 %v4667, 4294901760
      %4669 = vmatpush1.msra.mxu0 %v4668
      %v4670 = vand.u32 %v2411, 4294901760
      %v4671 = vsub.f32 %v2411, %v4670
      %v4672 = vand.u32 %v4671, 4294901760
      %4673 = vmatprep.subr.mxu0 %v4672
      %v4674 = vand.u32 %v2410, 4294901760
      %v4675 = vsub.f32 %v2410, %v4674
      %v4676 = vand.u32 %v4675, 4294901760
      %4677 = vmatpush1.msra.mxu0 %v4676
      %v4678 = vand.u32 %v2413, 4294901760
      %v4679 = vsub.f32 %v2413, %v4678
      %v4680 = vand.u32 %v4679, 4294901760
      %4681 = vmatprep.subr.mxu0 %v4680
      %v4682 = vand.u32 %v2412, 4294901760
      %v4683 = vsub.f32 %v2412, %v4682
      %v4684 = vand.u32 %v4683, 4294901760
      %4685 = vmatpush1.msra.mxu0 %v4684
      %v4686 = vand.u32 %v2415, 4294901760
      %v4687 = vsub.f32 %v2415, %v4686
      %v4688 = vand.u32 %v4687, 4294901760
      %4689 = vmatprep.subr.mxu0 %v4688
      %v4690 = vand.u32 %v2414, 4294901760
      %v4691 = vsub.f32 %v2414, %v4690
      %v4692 = vand.u32 %v4691, 4294901760
      %4693 = vmatpush1.msra.mxu0 %v4692
      %v4694 = vand.u32 %v2417, 4294901760
      %v4695 = vsub.f32 %v2417, %v4694
      %v4696 = vand.u32 %v4695, 4294901760
      %4697 = vmatprep.subr.mxu0 %v4696
      %v4698 = vand.u32 %v2416, 4294901760
      %v4699 = vsub.f32 %v2416, %v4698
      %v4700 = vand.u32 %v4699, 4294901760
      %4701 = vmatpush1.msra.mxu0 %v4700
      %v4702 = vand.u32 %v2419, 4294901760
      %v4703 = vsub.f32 %v2419, %v4702
      %v4704 = vand.u32 %v4703, 4294901760
      %4705 = vmatprep.subr.mxu0 %v4704
      %v4706 = vand.u32 %v2418, 4294901760
      %v4707 = vsub.f32 %v2418, %v4706
      %v4708 = vand.u32 %v4707, 4294901760
      %4709 = vmatpush1.msra.mxu0 %v4708
      %v4710 = vand.u32 %v2421, 4294901760
      %v4711 = vsub.f32 %v2421, %v4710
      %v4712 = vand.u32 %v4711, 4294901760
      %4713 = vmatprep.subr.mxu0 %v4712
      %v4714 = vand.u32 %v2420, 4294901760
      %v4715 = vsub.f32 %v2420, %v4714
      %v4716 = vand.u32 %v4715, 4294901760
      %4717 = vmatpush1.msra.mxu0 %v4716
      %v4718 = vand.u32 %v2423, 4294901760
      %v4719 = vsub.f32 %v2423, %v4718
      %v4720 = vand.u32 %v4719, 4294901760
      %4721 = vmatprep.subr.mxu0 %v4720
      %v4722 = vand.u32 %v2422, 4294901760
      %v4723 = vsub.f32 %v2422, %v4722
      %v4724 = vand.u32 %v4723, 4294901760
      %4725 = vmatpush1.msra.mxu0 %v4724
      %v4726 = vand.u32 %v2425, 4294901760
      %v4727 = vsub.f32 %v2425, %v4726
      %v4728 = vand.u32 %v4727, 4294901760
      %4729 = vmatprep.subr.mxu0 %v4728
      %v4730 = vand.u32 %v2424, 4294901760
      %v4731 = vsub.f32 %v2424, %v4730
      %v4732 = vand.u32 %v4731, 4294901760
      %4733 = vmatpush1.msra.mxu0 %v4732
      %v4734 = vand.u32 %v2427, 4294901760
      %v4735 = vsub.f32 %v2427, %v4734
      %v4736 = vand.u32 %v4735, 4294901760
      %4737 = vmatprep.subr.mxu0 %v4736
      %v4738 = vand.u32 %v2426, 4294901760
      %v4739 = vsub.f32 %v2426, %v4738
      %v4740 = vand.u32 %v4739, 4294901760
      %4741 = vmatpush1.msra.mxu0 %v4740
      %v4742 = vand.u32 %v2429, 4294901760
      %v4743 = vsub.f32 %v2429, %v4742
      %v4744 = vand.u32 %v4743, 4294901760
      %4745 = vmatprep.subr.mxu0 %v4744
      %v4746 = vand.u32 %v2428, 4294901760
      %v4747 = vsub.f32 %v2428, %v4746
      %v4748 = vand.u32 %v4747, 4294901760
      %4749 = vmatpush1.msra.mxu0 %v4748
      %v4750 = vand.u32 %v2431, 4294901760
      %v4751 = vsub.f32 %v2431, %v4750
      %v4752 = vand.u32 %v4751, 4294901760
      %4753 = vmatprep.subr.mxu0 %v4752
      %v4754 = vand.u32 %v2430, 4294901760
      %v4755 = vsub.f32 %v2430, %v4754
      %v4756 = vand.u32 %v4755, 4294901760
      %4757 = vmatpush1.msra.mxu0 %v4756
      %v4758 = vand.u32 %v2433, 4294901760
      %v4759 = vsub.f32 %v2433, %v4758
      %v4760 = vand.u32 %v4759, 4294901760
      %4761 = vmatprep.subr.mxu0 %v4760
      %v4762 = vand.u32 %v2432, 4294901760
      %v4763 = vsub.f32 %v2432, %v4762
      %v4764 = vand.u32 %v4763, 4294901760
      %4765 = vmatpush1.msra.mxu0 %v4764
      %v4766 = vand.u32 %v2435, 4294901760
      %v4767 = vsub.f32 %v2435, %v4766
      %v4768 = vand.u32 %v4767, 4294901760
      %4769 = vmatprep.subr.mxu0 %v4768
      %v4770 = vand.u32 %v2434, 4294901760
      %v4771 = vsub.f32 %v2434, %v4770
      %v4772 = vand.u32 %v4771, 4294901760
      %4773 = vmatpush1.msra.mxu0 %v4772
      %v4774 = vand.u32 %v2437, 4294901760
      %v4775 = vsub.f32 %v2437, %v4774
      %v4776 = vand.u32 %v4775, 4294901760
      %4777 = vmatprep.subr.mxu0 %v4776
      %v4778 = vand.u32 %v2436, 4294901760
      %v4779 = vsub.f32 %v2436, %v4778
      %v4780 = vand.u32 %v4779, 4294901760
      %4781 = vmatpush1.msra.mxu0 %v4780
      %v4782 = vand.u32 %v2439, 4294901760
      %v4783 = vsub.f32 %v2439, %v4782
      %v4784 = vand.u32 %v4783, 4294901760
      %4785 = vmatprep.subr.mxu0 %v4784
      %v4786 = vand.u32 %v2438, 4294901760
      %v4787 = vsub.f32 %v2438, %v4786
      %v4788 = vand.u32 %v4787, 4294901760
      %4789 = vmatpush1.msra.mxu0 %v4788
      %v4790 = vand.u32 %v2441, 4294901760
      %v4791 = vsub.f32 %v2441, %v4790
      %v4792 = vand.u32 %v4791, 4294901760
      %4793 = vmatprep.subr.mxu0 %v4792
      %v4794 = vand.u32 %v2440, 4294901760
      %v4795 = vsub.f32 %v2440, %v4794
      %v4796 = vand.u32 %v4795, 4294901760
      %4797 = vmatpush1.msra.mxu0 %v4796
      %v4798 = vand.u32 %v2443, 4294901760
      %v4799 = vsub.f32 %v2443, %v4798
      %v4800 = vand.u32 %v4799, 4294901760
      %4801 = vmatprep.subr.mxu0 %v4800
      %v4802 = vand.u32 %v2442, 4294901760
      %v4803 = vsub.f32 %v2442, %v4802
      %v4804 = vand.u32 %v4803, 4294901760
      %4805 = vmatpush1.msra.mxu0 %v4804
      %v4806 = vand.u32 %v2445, 4294901760
      %v4807 = vsub.f32 %v2445, %v4806
      %v4808 = vand.u32 %v4807, 4294901760
      %4809 = vmatprep.subr.mxu0 %v4808
      %v4810 = vand.u32 %v2444, 4294901760
      %v4811 = vsub.f32 %v2444, %v4810
      %v4812 = vand.u32 %v4811, 4294901760
      %4813 = vmatpush1.msra.mxu0 %v4812
      %v4814 = vand.u32 %v2447, 4294901760
      %v4815 = vsub.f32 %v2447, %v4814
      %v4816 = vand.u32 %v4815, 4294901760
      %4817 = vmatprep.subr.mxu0 %v4816
      %v4818 = vand.u32 %v2446, 4294901760
      %v4819 = vsub.f32 %v2446, %v4818
      %v4820 = vand.u32 %v4819, 4294901760
      %4821 = vmatpush1.msra.mxu0 %v4820
      %v4822 = vand.u32 %v2449, 4294901760
      %v4823 = vsub.f32 %v2449, %v4822
      %v4824 = vand.u32 %v4823, 4294901760
      %4825 = vmatprep.subr.mxu0 %v4824
      %v4826 = vand.u32 %v2448, 4294901760
      %v4827 = vsub.f32 %v2448, %v4826
      %v4828 = vand.u32 %v4827, 4294901760
      %4829 = vmatpush1.msra.mxu0 %v4828
      %v4830 = vand.u32 %v2451, 4294901760
      %v4831 = vsub.f32 %v2451, %v4830
      %v4832 = vand.u32 %v4831, 4294901760
      %4833 = vmatprep.subr.mxu0 %v4832
      %v4834 = vand.u32 %v2450, 4294901760
      %v4835 = vsub.f32 %v2450, %v4834
      %v4836 = vand.u32 %v4835, 4294901760
      %4837 = vmatpush1.msra.mxu0 %v4836
      %v4838 = vand.u32 %v2453, 4294901760
      %v4839 = vsub.f32 %v2453, %v4838
      %v4840 = vand.u32 %v4839, 4294901760
      %4841 = vmatprep.subr.mxu0 %v4840
      %v4842 = vand.u32 %v2452, 4294901760
      %v4843 = vsub.f32 %v2452, %v4842
      %v4844 = vand.u32 %v4843, 4294901760
      %4845 = vmatpush1.msra.mxu0 %v4844
      %v4846 = vand.u32 %v2455, 4294901760
      %v4847 = vsub.f32 %v2455, %v4846
      %v4848 = vand.u32 %v4847, 4294901760
      %4849 = vmatprep.subr.mxu0 %v4848
      %v4850 = vand.u32 %v2454, 4294901760
      %v4851 = vsub.f32 %v2454, %v4850
      %v4852 = vand.u32 %v4851, 4294901760
      %4853 = vmatpush1.msra.mxu0 %v4852
      %v4854 = vand.u32 %v2457, 4294901760
      %v4855 = vsub.f32 %v2457, %v4854
      %v4856 = vand.u32 %v4855, 4294901760
      %4857 = vmatprep.subr.mxu0 %v4856
      %v4858 = vand.u32 %v2456, 4294901760
      %v4859 = vsub.f32 %v2456, %v4858
      %v4860 = vand.u32 %v4859, 4294901760
      %4861 = vmatpush1.msra.mxu0 %v4860
      %v4862 = vand.u32 %v2459, 4294901760
      %v4863 = vsub.f32 %v2459, %v4862
      %v4864 = vand.u32 %v4863, 4294901760
      %4865 = vmatprep.subr.mxu0 %v4864
      %v4866 = vand.u32 %v2458, 4294901760
      %v4867 = vsub.f32 %v2458, %v4866
      %v4868 = vand.u32 %v4867, 4294901760
      %4869 = vmatpush1.msra.mxu0 %v4868
      %v4870 = vand.u32 %v2461, 4294901760
      %v4871 = vsub.f32 %v2461, %v4870
      %v4872 = vand.u32 %v4871, 4294901760
      %4873 = vmatprep.subr.mxu0 %v4872
      %v4874 = vand.u32 %v2460, 4294901760
      %v4875 = vsub.f32 %v2460, %v4874
      %v4876 = vand.u32 %v4875, 4294901760
      %4877 = vmatpush1.msra.mxu0 %v4876
      %v4878 = vand.u32 %v2463, 4294901760
      %v4879 = vsub.f32 %v2463, %v4878
      %v4880 = vand.u32 %v4879, 4294901760
      %4881 = vmatprep.subr.mxu0 %v4880
      %v4882 = vand.u32 %v2462, 4294901760
      %v4883 = vsub.f32 %v2462, %v4882
      %v4884 = vand.u32 %v4883, 4294901760
      %4885 = vmatpush1.msra.mxu0 %v4884
      %v4886 = vand.u32 %v2335, 4294901760
      %4887 = vmatprep.mubr.f32.mxu0 %v4886
      %v4888 = vand.u32 %v2326, 4294901760
      %4889 = vmatmul.mubr.f32.gmra.mrb[0].mxu0 %v4888
      %v4890 = vpop.f32.mrb[0].mxu0
      %v4891 = vadd.f32 %v4626, %v4890
      %v4892 = vpop.f32.mrb[0].mxu0
      %v4893 = vadd.f32 %v4628, %v4892
      %4894 = vdwg.mxu0
      %v4895 = vand.u32 %v2401, 4294901760
      %4896 = vmatprep.subr.mxu0 %v4895
      %v4897 = vand.u32 %v2400, 4294901760
      %4898 = vmatpush1.msra.mxu0 %v4897
      %v4899 = vand.u32 %v2403, 4294901760
      %4900 = vmatprep.subr.mxu0 %v4899
      %v4901 = vand.u32 %v2402, 4294901760
      %4902 = vmatpush1.msra.mxu0 %v4901
      %v4903 = vand.u32 %v2405, 4294901760
      %4904 = vmatprep.subr.mxu0 %v4903
      %v4905 = vand.u32 %v2404, 4294901760
      %4906 = vmatpush1.msra.mxu0 %v4905
      %v4907 = vand.u32 %v2407, 4294901760
      %4908 = vmatprep.subr.mxu0 %v4907
      %v4909 = vand.u32 %v2406, 4294901760
      %4910 = vmatpush1.msra.mxu0 %v4909
      %v4911 = vand.u32 %v2409, 4294901760
      %4912 = vmatprep.subr.mxu0 %v4911
      %v4913 = vand.u32 %v2408, 4294901760
      %4914 = vmatpush1.msra.mxu0 %v4913
      %v4915 = vand.u32 %v2411, 4294901760
      %4916 = vmatprep.subr.mxu0 %v4915
      %v4917 = vand.u32 %v2410, 4294901760
      %4918 = vmatpush1.msra.mxu0 %v4917
      %v4919 = vand.u32 %v2413, 4294901760
      %4920 = vmatprep.subr.mxu0 %v4919
      %v4921 = vand.u32 %v2412, 4294901760
      %4922 = vmatpush1.msra.mxu0 %v4921
      %v4923 = vand.u32 %v2415, 4294901760
      %4924 = vmatprep.subr.mxu0 %v4923
      %v4925 = vand.u32 %v2414, 4294901760
      %4926 = vmatpush1.msra.mxu0 %v4925
      %v4927 = vand.u32 %v2417, 4294901760
      %4928 = vmatprep.subr.mxu0 %v4927
      %v4929 = vand.u32 %v2416, 4294901760
      %4930 = vmatpush1.msra.mxu0 %v4929
      %v4931 = vand.u32 %v2419, 4294901760
      %4932 = vmatprep.subr.mxu0 %v4931
      %v4933 = vand.u32 %v2418, 4294901760
      %4934 = vmatpush1.msra.mxu0 %v4933
      %v4935 = vand.u32 %v2421, 4294901760
      %4936 = vmatprep.subr.mxu0 %v4935
      %v4937 = vand.u32 %v2420, 4294901760
      %4938 = vmatpush1.msra.mxu0 %v4937
      %v4939 = vand.u32 %v2423, 4294901760
      %4940 = vmatprep.subr.mxu0 %v4939
      %v4941 = vand.u32 %v2422, 4294901760
      %4942 = vmatpush1.msra.mxu0 %v4941
      %v4943 = vand.u32 %v2425, 4294901760
      %4944 = vmatprep.subr.mxu0 %v4943
      %v4945 = vand.u32 %v2424, 4294901760
      %4946 = vmatpush1.msra.mxu0 %v4945
      %v4947 = vand.u32 %v2427, 4294901760
      %4948 = vmatprep.subr.mxu0 %v4947
      %v4949 = vand.u32 %v2426, 4294901760
      %4950 = vmatpush1.msra.mxu0 %v4949
      %v4951 = vand.u32 %v2429, 4294901760
      %4952 = vmatprep.subr.mxu0 %v4951
      %v4953 = vand.u32 %v2428, 4294901760
      %4954 = vmatpush1.msra.mxu0 %v4953
      %v4955 = vand.u32 %v2431, 4294901760
      %4956 = vmatprep.subr.mxu0 %v4955
      %v4957 = vand.u32 %v2430, 4294901760
      %4958 = vmatpush1.msra.mxu0 %v4957
      %v4959 = vand.u32 %v2433, 4294901760
      %4960 = vmatprep.subr.mxu0 %v4959
      %v4961 = vand.u32 %v2432, 4294901760
      %4962 = vmatpush1.msra.mxu0 %v4961
      %v4963 = vand.u32 %v2435, 4294901760
      %4964 = vmatprep.subr.mxu0 %v4963
      %v4965 = vand.u32 %v2434, 4294901760
      %4966 = vmatpush1.msra.mxu0 %v4965
      %v4967 = vand.u32 %v2437, 4294901760
      %4968 = vmatprep.subr.mxu0 %v4967
      %v4969 = vand.u32 %v2436, 4294901760
      %4970 = vmatpush1.msra.mxu0 %v4969
      %v4971 = vand.u32 %v2439, 4294901760
      %4972 = vmatprep.subr.mxu0 %v4971
      %v4973 = vand.u32 %v2438, 4294901760
      %4974 = vmatpush1.msra.mxu0 %v4973
      %v4975 = vand.u32 %v2441, 4294901760
      %4976 = vmatprep.subr.mxu0 %v4975
      %v4977 = vand.u32 %v2440, 4294901760
      %4978 = vmatpush1.msra.mxu0 %v4977
      %v4979 = vand.u32 %v2443, 4294901760
      %4980 = vmatprep.subr.mxu0 %v4979
      %v4981 = vand.u32 %v2442, 4294901760
      %4982 = vmatpush1.msra.mxu0 %v4981
      %v4983 = vand.u32 %v2445, 4294901760
      %4984 = vmatprep.subr.mxu0 %v4983
      %v4985 = vand.u32 %v2444, 4294901760
      %4986 = vmatpush1.msra.mxu0 %v4985
      %v4987 = vand.u32 %v2447, 4294901760
      %4988 = vmatprep.subr.mxu0 %v4987
      %v4989 = vand.u32 %v2446, 4294901760
      %4990 = vmatpush1.msra.mxu0 %v4989
      %v4991 = vand.u32 %v2449, 4294901760
      %4992 = vmatprep.subr.mxu0 %v4991
      %v4993 = vand.u32 %v2448, 4294901760
      %4994 = vmatpush1.msra.mxu0 %v4993
      %v4995 = vand.u32 %v2451, 4294901760
      %4996 = vmatprep.subr.mxu0 %v4995
      %v4997 = vand.u32 %v2450, 4294901760
      %4998 = vmatpush1.msra.mxu0 %v4997
      %v4999 = vand.u32 %v2453, 4294901760
      %5000 = vmatprep.subr.mxu0 %v4999
      %v5001 = vand.u32 %v2452, 4294901760
      %5002 = vmatpush1.msra.mxu0 %v5001
      %v5003 = vand.u32 %v2455, 4294901760
      %5004 = vmatprep.subr.mxu0 %v5003
      %v5005 = vand.u32 %v2454, 4294901760
      %5006 = vmatpush1.msra.mxu0 %v5005
      %v5007 = vand.u32 %v2457, 4294901760
      %5008 = vmatprep.subr.mxu0 %v5007
      %v5009 = vand.u32 %v2456, 4294901760
      %5010 = vmatpush1.msra.mxu0 %v5009
      %v5011 = vand.u32 %v2459, 4294901760
      %5012 = vmatprep.subr.mxu0 %v5011
      %v5013 = vand.u32 %v2458, 4294901760
      %5014 = vmatpush1.msra.mxu0 %v5013
      %v5015 = vand.u32 %v2461, 4294901760
      %5016 = vmatprep.subr.mxu0 %v5015
      %v5017 = vand.u32 %v2460, 4294901760
      %5018 = vmatpush1.msra.mxu0 %v5017
      %v5019 = vand.u32 %v2463, 4294901760
      %5020 = vmatprep.subr.mxu0 %v5019
      %v5021 = vand.u32 %v2462, 4294901760
      %5022 = vmatpush1.msra.mxu0 %v5021
      %v5023 = vand.u32 %v2335, 4294901760
      %5024 = vmatprep.mubr.f32.mxu0 %v5023
      %v5025 = vand.u32 %v2326, 4294901760
      %5026 = vmatmul.mubr.f32.gmra.mrb[0].mxu0 %v5025
      %v5027 = vpop.f32.mrb[0].mxu0
      %v5028 = vadd.f32 %v4891, %v5027
      %v5029 = vpop.f32.mrb[0].mxu0
      %v5030 = vadd.f32 %v4893, %v5029
      %5031 = vdwg.mxu0
      %v5032 = vxor.u32 %v5028, 2147483648
      %v5033 = vxor.u32 %v5030, 2147483648
      %v5034 = vmul.f32 %v5032, 1.442695
      %v5035 = vpow.pop %v5034
      %v5036 = vmul.f32 %v5033, 1.442695
      %v5037 = vpow.pop %v5036
      %v5038 = vadd.f32 %v5035, 1.0
      %v5039 = vadd.f32 %v5037, 1.0
      %v5040 = vrcp.pop %v5038
      %v5041 = vmul.f32 1.0, %v5040
      %v5042 = vrcp.pop %v5039
      %v5043 = vmul.f32 1.0, %v5042
      %v5044 = vlaneseq
      %v5045 = vshrl.u32 %v5044, 7
      %v5046 = vsub.s32 0, %v5045
      %v5047 = vrot.slane %v5041, %v5046
      %v5048 = vlaneseq
      %v5049 = vshrl.u32 %v5048, 7
      %v5050 = vsub.s32 0, %v5049
      %v5051 = vrot.slane %v5043, %v5050
      %v5052 = vmul.f32 %v2289, %v5047
      %v5053 = vmul.f32 %v2290, %v5051
      %v5054 = vmul.f32 %v2291, %v5047
      %v5055 = vmul.f32 %v2292, %v5051
      %v5056 = vmul.f32 %v2293, %v5047
      %v5057 = vmul.f32 %v2294, %v5051
      %v5058 = vmul.f32 %v2295, %v5047
      %v5059 = vmul.f32 %v2296, %v5051
      %5060 = vst [vmem:[%s197] sm:$0xff] %v5052
      %5061 = vst [vmem:[%s197 + $0x8] sm:$0xff] %v5053
      %5062 = vst [vmem:[%s197 + $0x10] sm:$0xff] %v5054
      %5063 = vst [vmem:[%s197 + $0x18] sm:$0xff] %v5055
      %5064 = vst [vmem:[%s197 + $0x20] sm:$0xff] %v5056
      %5065 = vst [vmem:[%s197 + $0x28] sm:$0xff] %v5057
      %5066 = vst [vmem:[%s197 + $0x30] sm:$0xff] %v5058
      %5067 = vst [vmem:[%s197 + $0x38] sm:$0xff] %v5059
      %p5068 = scmp.lt.s32.totalorder %s15, 1
      %s5069 = scalar_select %p5068, %s15, 1
      %s5070 = smul.addr %s5069, 8
      %s5071 = smul.addr %s5070, 8
      %s5072 = scalar_lea.vmem %s4, %s5071
      // Predicated region
      $region37: #{cbam.1} parent=35 // pred_check
        %p5073 = pneg %p122
      $region38: #{cbam.1} parent=35 // pred_check_branch
        %5075 = sbr.rel (%p5073) target = $region40
      $region39: #{cbam.1} parent=35 // pred_region
        _
      $region40: #{cbam.1} parent=35 // pred_fallthru
        _
    $region36: #{cbam.1} parent=5 // pred_fallthru
      _
    %p5076 = scmp.le.s32.totalorder 2, %s10
    // Predicated region
    $region41: #{cbam.1} parent=5 // pred_check
      %p5077 = pneg %p5076
    $region42: #{cbam.1} parent=5 // pred_check_branch
      %5079 = sbr.rel (%p5077) target = $region44
    $region43: #{cbam.1} parent=5 // pred_region
      %s5080 = ssub.s32 %s10, 2
      // Predicated region
      $region45: #{cbam.1} parent=43 // pred_check
        %p5081 = pneg %p128
      $region46: #{cbam.1} parent=43 // pred_check_branch
        %5083 = sbr.rel (%p5081) target = $region48
      $region47: #{cbam.1} parent=43 // pred_region
        %p5084 = scmp.lt.s32.totalorder %s16, 1
        %s5085 = scalar_select %p5084, %s16, 1
        %s5086 = smul.addr %s5085, 8
        %s5087 = smul.addr %s5086, 8
        %s5088 = scalar_lea.vmem %s4, %s5087
      $region48: #{cbam.1} parent=43 // pred_fallthru
        _
    $region44: #{cbam.1} parent=5 // pred_fallthru
      _
  $region6: #{cbam.1} parent=0 // loop_footer
    %s14 = sadd.s32 1, %s10
  $region7: #{cbam.1} parent=0 // loop_footer_branch
    %9 = sbr.rel target = $region3
  $region8: #{cbam.1} parent=0 // loop_exit
    _

</llo_original>
